<compile_context>
chip_gen: v6e
topology: v6e:2x2x1
jax: 0.10.0
libtpu: 0.0.40
codegen_flags: <defaults>
</compile_context>

<pallas_src>
import functools

import jax
import jax.numpy as jnp
from jax.experimental import pallas as pl
from jax.experimental.pallas import tpu as pltpu

N_FEATURES = 256   # Critic.n_features
CONV_CH = 16       # hidden channels of the (assumed) FeatureEncoder conv


def _round_up(x, m):
    return ((x + m - 1) // m) * m


def _critic_kernel(mask_ref, x0_ref, x1_ref, x2_ref, wconv_ref, bconv_ref,
                   wfc_ref, bfc_ref, whead_ref, bhead_ref, out_ref,
                   acc_ref, patch_ref, *, n_chunks, rc, wp, c_in, inv_dhw):
    """Grid: (group_tiles, D).  Axis 0 ("parallel") tiles the B*A groups,
    axis 1 ("arbitrary") walks output depth planes, reducing into acc_ref."""
    d = pl.program_id(1)

    @pl.when(d == 0)
    def _init():
        acc_ref[...] = jnp.zeros_like(acc_ref)

    g_tile = acc_ref.shape[0]
    planes = (x0_ref, x1_ref, x2_ref)
    kk = 27 * c_in

    for chunk in range(n_chunks):
        base = chunk * rc
        # In-VMEM im2col: 27 shifted sublane slices of the three padded input
        # planes, written to static C-lane strips of the patch scratch.  All
        # slice offsets are static Python ints.
        for kz in range(3):
            src = planes[kz]
            for ky in range(3):
                for kx in range(3):
                    o = base + ky * wp + kx
                    k = (kz * 3 + ky) * 3 + kx
                    patch_ref[:, :, k * c_in:(k + 1) * c_in] = src[:, 0, o:o + rc, :]
        p = patch_ref[...].reshape(g_tile * rc, kk)                 # bf16 [M, 27*C]
        h = jnp.dot(p, wconv_ref[...], preferred_element_type=jnp.float32)
        h = jnp.maximum(h + bconv_ref[...], 0.0)                    # conv bias + ReLU (f32)
        # Mask halo rows, then global mean pool as an accumulated row sum.
        h = h.reshape(g_tile, rc, CONV_CH) * mask_ref[base:base + rc, :]
        acc_ref[...] += h.sum(axis=1)

    @pl.when(d == pl.num_programs(1) - 1)
    def _finalize():
        pooled = acc_ref[...] * inv_dhw                             # [g_tile, 16] f32
        feat = jnp.dot(pooled, wfc_ref[...],
                       preferred_element_type=jnp.float32)          # encoder FC (f32)
        feat = jnp.maximum(feat + bfc_ref[...], 0.0)                # [g_tile, 256]
        # Per-group critic head (Linear(256, 1)): VPU multiply + lane reduce.
        v = jnp.sum(feat * whead_ref[...], axis=-1, keepdims=True) + bhead_ref[...]
        out_ref[...] = v                                            # [g_tile, 1]


def init_params(key, agents, n_sample_points):
    ks = jax.random.split(key, 6)
    s = 0.1
    wconv = s * jax.random.normal(ks[0], (3, 3, 3, n_sample_points, CONV_CH), jnp.float32)
    bconv = s * jax.random.normal(ks[1], (CONV_CH,), jnp.float32)
    wfc = s * jax.random.normal(ks[2], (CONV_CH, N_FEATURES), jnp.float32)
    bfc = s * jax.random.normal(ks[3], (N_FEATURES,), jnp.float32)
    whead = s * jax.random.normal(ks[4], (agents, N_FEATURES), jnp.float32)
    bhead = s * jax.random.normal(ks[5], (agents,), jnp.float32)
    return wconv, bconv, wfc, bfc, whead, bhead


def _physical_vmem_bytes():
    try:
        return int(pltpu.get_tpu_info().vmem_capacity_bytes)
    except Exception:
        return 64 << 20   # conservative fallback (v7x-sized VMEM)


def _pick_g_tile(G, per_group_bytes, budget_bytes):
    """Group tile must divide G and be a multiple of 8 (or equal G) so the
    (g_tile, ...) output / head blocks satisfy the (8, 128) rule.  Prefer a
    tile that fits the VMEM budget and leaves >=2 grid tiles so v7x's second
    TensorCore gets a share of the groups."""
    legal = [t for t in range(8, G, 8) if G % t == 0] + [G]
    fits = [t for t in legal if t * per_group_bytes <= budget_bytes]
    if fits:
        split = [t for t in fits if t < G]
        return max(split) if split else max(fits)
    return min(legal)


def critic_forward(state, params):
    """Pallas forward: state [B, A, C, D, H, W] (or [A, C, D, H, W]) -> [B, A, 1]."""
    wconv, bconv, wfc, bfc, whead, bhead = params
    if state.ndim != 6:
        state = state[None]            # torch: state[i].unsqueeze(0) -> batch of 1
    B, A, C, D, H, W = state.shape
    G = B * A                          # group = (batch, agent), batch-major
    DHW = D * H * W
    Hp, Wp = H + 2, W + 2
    R = Hp * Wp

    # Rows of one padded plane addressed with the padded row stride
    # (p = h*Wp + w); halo rows are masked out before pooling.
    rows_needed = (H - 1) * Wp + W
    n_chunks = -(-rows_needed // 512)
    rc = _round_up(-(-rows_needed // n_chunks), 16)    # rows per in-kernel matmul chunk
    rt = n_chunks * rc
    rs = rt + 2 * Wp + 2                               # source rows incl. shift slack

    # --- XLA glue: bf16 only, ~1x the raw input; no 27x im2col in HBM ---
    x = state.reshape(G, C, D, H, W).astype(jnp.bfloat16)
    xp = jnp.pad(x, ((0, 0), (0, 0), (1, 1), (1, 1), (1, 1)))
    xp = jnp.transpose(xp, (0, 2, 3, 4, 1)).reshape(G, D + 2, R, C)
    xp = jnp.pad(xp, ((0, 0), (0, 0), (0, rs - R), (0, 0)))       # [G, Dp, rs, C]

    # 0/1 mask of rows that are real (non-halo) output voxels.
    pidx = jnp.arange(rt)
    mask = (((pidx % Wp) < W) & ((pidx // Wp) < H)).astype(jnp.float32)[:, None]

    wconv_m = wconv.reshape(27 * C, CONV_CH).astype(jnp.bfloat16)
    bconv_m = bconv.reshape(1, CONV_CH).astype(jnp.float32)
    wfc_m = wfc.astype(jnp.float32)
    bfc_m = bfc.reshape(1, N_FEATURES).astype(jnp.float32)
    whead_g = jnp.tile(whead, (B, 1)).astype(jnp.float32)          # [G, 256]  (row g -> agent g % A)
    bhead_g = jnp.tile(bhead.reshape(A, 1), (B, 1)).astype(jnp.float32)   # [G, 1]

    # --- tiling / VMEM budget (generation-aware) ---
    phys_vmem = _physical_vmem_bytes()
    rs_pad = _round_up(rs, 16)
    per_group = 3 * 2 * rs_pad * 128 * 2    # 3 plane streams, double-buffered, lane-padded bf16
    g_tile = _pick_g_tile(G, per_group, min(phys_vmem // 3, 24 << 20))
    n_gt = G // g_tile

    needed = g_tile * per_group + g_tile * rc * 128 * 2 + (2 << 20)
    vmem_limit = int(min(phys_vmem // 2, max(32 << 20, needed + (8 << 20))))
    vmem_limit = max(vmem_limit, needed + (4 << 20))

    kernel = functools.partial(_critic_kernel, n_chunks=n_chunks, rc=rc, wp=Wp,
                               c_in=C, inv_dhw=1.0 / float(DHW))

    def plane_spec(kz):
        return pl.BlockSpec((g_tile, 1, rs, C),
                            lambda g, d, kz=kz: (g, d + kz, 0, 0))

    vals = pl.pallas_call(
        kernel,
        out_shape=jax.ShapeDtypeStruct((G, 1), jnp.float32),
        grid_spec=pltpu.PrefetchScalarGridSpec(
            num_scalar_prefetch=0,
            grid=(n_gt, D),
            in_specs=[
                pl.BlockSpec((rt, 1), lambda g, d: (0, 0)),                  # halo-row mask
                plane_spec(0), plane_spec(1), plane_spec(2),                 # padded planes d, d+1, d+2
                pl.BlockSpec((27 * C, CONV_CH), lambda g, d: (0, 0)),        # conv W (bf16)
                pl.BlockSpec((1, CONV_CH), lambda g, d: (0, 0)),             # conv b (f32)
                pl.BlockSpec((CONV_CH, N_FEATURES), lambda g, d: (0, 0)),    # FC W (f32)
                pl.BlockSpec((1, N_FEATURES), lambda g, d: (0, 0)),          # FC b (f32)
                pl.BlockSpec((g_tile, N_FEATURES), lambda g, d: (g, 0)),     # per-group head W
                pl.BlockSpec((g_tile, 1), lambda g, d: (g, 0)),              # per-group head b
            ],
            out_specs=pl.BlockSpec((g_tile, 1), lambda g, d: (g, 0)),
            scratch_shapes=[
                pltpu.VMEM((g_tile, CONV_CH), jnp.float32),                  # pooled-sum accumulator
                pltpu.VMEM((g_tile, rc, 27 * C), jnp.bfloat16),              # in-VMEM patch slab
            ],
        ),
        compiler_params=pltpu.CompilerParams(
            dimension_semantics=("parallel", "arbitrary"),
            vmem_limit_bytes=vmem_limit,
        ),
    )(mask, xp, xp, xp, wconv_m, bconv_m, wfc_m, bfc_m, whead_g, bhead_g)

    # groups are batch-major, so this is torch.stack(values, dim=1): [B, A, 1]
    return vals.reshape(B, A, 1)


def critic_forward_ref(state, params):
    """Pure-JAX reference (XLA conv) with the same dtype policy, for validation."""
    wconv, bconv, wfc, bfc, whead, bhead = params
    if state.ndim != 6:
        state = state[None]
    B, A, C, D, H, W = state.shape
    x = state.reshape(B * A, C, D, H, W).astype(jnp.bfloat16)
    dn = jax.lax.conv_dimension_numbers(x.shape, wconv.shape,
                                        ('NCDHW', 'DHWIO', 'NCDHW'))
    h = jax.lax.conv_general_dilated(
        x, wconv.astype(jnp.bfloat16), window_strides=(1, 1, 1),
        padding=((1, 1), (1, 1), (1, 1)), dimension_numbers=dn,
        preferred_element_type=jnp.float32)                        # [G, 16, D, H, W]
    h = jnp.maximum(h + bconv.reshape(1, CONV_CH, 1, 1, 1), 0.0)
    pooled = jnp.mean(h, axis=(2, 3, 4))                           # [G, 16]
    feat = jnp.maximum(pooled @ wfc + bfc.reshape(1, N_FEATURES), 0.0)
    featr = feat.reshape(B, A, N_FEATURES)
    v = jnp.einsum('baf,af->ba', featr, whead) + bhead[None, :]
    return v[..., None]                                            # [B, A, 1]


if __name__ == "__main__":
    key = jax.random.PRNGKey(0)
    agents, n_sample_points = 2, 4
    B, D, H, W = 2, 4, 4, 4

    k_state, k_params = jax.random.split(key)
    state = jax.random.normal(
        k_state, (B, agents, n_sample_points, D, H, W), jnp.float32)
    params = init_params(k_params, agents, n_sample_points)

    out = jax.jit(critic_forward)(state, params)
    out = jax.block_until_ready(out)
    assert out.shape == (B, agents, 1), out.shape

    ref = critic_forward_ref(state, params)
    assert jnp.allclose(out, ref, atol=2e-3, rtol=2e-3), (out, ref)

    print("KERNEL_OK")
</pallas_src>

<mosaic_0001>
module attributes {stable_mosaic.version = 11 : i64} {
  func.func @_critic_kernel(%arg0: i32, %arg1: i32, %arg2: memref<32x1xf32, #tpu.memory_space<vmem>>, %arg3: memref<4x1x46x4xbf16, #tpu.memory_space<vmem>>, %arg4: memref<4x1x46x4xbf16, #tpu.memory_space<vmem>>, %arg5: memref<4x1x46x4xbf16, #tpu.memory_space<vmem>>, %arg6: memref<108x16xbf16, #tpu.memory_space<vmem>>, %arg7: memref<1x16xf32, #tpu.memory_space<vmem>>, %arg8: memref<16x256xf32, #tpu.memory_space<vmem>>, %arg9: memref<1x256xf32, #tpu.memory_space<vmem>>, %arg10: memref<4x256xf32, #tpu.memory_space<vmem>>, %arg11: memref<4x1xf32, #tpu.memory_space<vmem>>, %arg12: memref<4x1xf32, #tpu.memory_space<vmem>>, %arg13: memref<4x16xf32, #tpu.memory_space<vmem>>, %arg14: memref<4x32x108xbf16, #tpu.memory_space<vmem>>) attributes {dimension_semantics = [#tpu.dimension_semantics<parallel>, #tpu.dimension_semantics<arbitrary>], iteration_bounds = array<i64: 1, 4>, scalar_prefetch = 0 : i64, scratch_operands = 2 : i64, tpu.core_type = #tpu.core_type<tc>, window_params = [{pipeline_mode = #tpu.pipeline_mode<synchronous>, transform_indices = @transform_0, window_bounds = array<i64: 32, 1>}, {transform_indices = @transform_1, window_bounds = array<i64: 4, 1, 46, 4>}, {transform_indices = @transform_2, window_bounds = array<i64: 4, 1, 46, 4>}, {transform_indices = @transform_3, window_bounds = array<i64: 4, 1, 46, 4>}, {pipeline_mode = #tpu.pipeline_mode<synchronous>, transform_indices = @transform_4, window_bounds = array<i64: 108, 16>}, {pipeline_mode = #tpu.pipeline_mode<synchronous>, transform_indices = @transform_5, window_bounds = array<i64: 1, 16>}, {pipeline_mode = #tpu.pipeline_mode<synchronous>, transform_indices = @transform_6, window_bounds = array<i64: 16, 256>}, {pipeline_mode = #tpu.pipeline_mode<synchronous>, transform_indices = @transform_7, window_bounds = array<i64: 1, 256>}, {transform_indices = @transform_8, window_bounds = array<i64: 4, 256>}, {transform_indices = @transform_9, window_bounds = array<i64: 4, 1>}, {transform_indices = @transform_10, window_bounds = array<i64: 4, 1>}]} {
    %c0_i32 = arith.constant 0 : i32
    %0 = arith.cmpi eq, %arg1, %c0_i32 : i32
    %1 = arith.extui %0 : i1 to i32
    %c0_i32_0 = arith.constant 0 : i32
    %2 = arith.cmpi ne, %1, %c0_i32_0 : i32
    scf.if %2 {
      %cst_173 = arith.constant 0.000000e+00 : f32
      %105 = vector.broadcast %cst_173 : f32 to vector<4x16xf32>
      %c0_174 = arith.constant 0 : index
      %c0_175 = arith.constant 0 : index
      %106 = vector.load %arg13[%c0_174, %c0_175] : memref<4x16xf32, #tpu.memory_space<vmem>>, vector<4x16xf32>
      tpu.vector_store %arg13[%c0_174, %c0_175], %105 {strides = array<i32>} : memref<4x16xf32, #tpu.memory_space<vmem>>, vector<4x16xf32>,
    } else {
    }
    %c0 = arith.constant 0 : index
    %c0_1 = arith.constant 0 : index
    %c0_2 = arith.constant 0 : index
    %c0_3 = arith.constant 0 : index
    %3 = vector.load %arg3[%c0, %c0_1, %c0_2, %c0_3] : memref<4x1x46x4xbf16, #tpu.memory_space<vmem>>, vector<4x1x32x4xbf16>
    %4 = vector.shape_cast %3 : vector<4x1x32x4xbf16> to vector<4x32x4xbf16>
    %c0_4 = arith.constant 0 : index
    %c0_5 = arith.constant 0 : index
    %c0_6 = arith.constant 0 : index
    %5 = vector.load %arg14[%c0_4, %c0_5, %c0_6] : memref<4x32x108xbf16, #tpu.memory_space<vmem>>, vector<4x32x4xbf16>
    tpu.vector_store %arg14[%c0_4, %c0_5, %c0_6], %4 {strides = array<i32>} : memref<4x32x108xbf16, #tpu.memory_space<vmem>>, vector<4x32x4xbf16>,
    %c0_7 = arith.constant 0 : index
    %c0_8 = arith.constant 0 : index
    %c1 = arith.constant 1 : index
    %c0_9 = arith.constant 0 : index
    %6 = vector.load %arg3[%c0_7, %c0_8, %c1, %c0_9] : memref<4x1x46x4xbf16, #tpu.memory_space<vmem>>, vector<4x1x32x4xbf16>
    %7 = vector.shape_cast %6 : vector<4x1x32x4xbf16> to vector<4x32x4xbf16>
    %c0_10 = arith.constant 0 : index
    %c0_11 = arith.constant 0 : index
    %c4 = arith.constant 4 : index
    %8 = vector.load %arg14[%c0_10, %c0_11, %c4] : memref<4x32x108xbf16, #tpu.memory_space<vmem>>, vector<4x32x4xbf16>
    tpu.vector_store %arg14[%c0_10, %c0_11, %c4], %7 {strides = array<i32>} : memref<4x32x108xbf16, #tpu.memory_space<vmem>>, vector<4x32x4xbf16>,
    %c0_12 = arith.constant 0 : index
    %c0_13 = arith.constant 0 : index
    %c2 = arith.constant 2 : index
    %c0_14 = arith.constant 0 : index
    %9 = vector.load %arg3[%c0_12, %c0_13, %c2, %c0_14] : memref<4x1x46x4xbf16, #tpu.memory_space<vmem>>, vector<4x1x32x4xbf16>
    %10 = vector.shape_cast %9 : vector<4x1x32x4xbf16> to vector<4x32x4xbf16>
    %c0_15 = arith.constant 0 : index
    %c0_16 = arith.constant 0 : index
    %c8 = arith.constant 8 : index
    %11 = vector.load %arg14[%c0_15, %c0_16, %c8] : memref<4x32x108xbf16, #tpu.memory_space<vmem>>, vector<4x32x4xbf16>
    tpu.vector_store %arg14[%c0_15, %c0_16, %c8], %10 {strides = array<i32>} : memref<4x32x108xbf16, #tpu.memory_space<vmem>>, vector<4x32x4xbf16>,
    %c0_17 = arith.constant 0 : index
    %c0_18 = arith.constant 0 : index
    %c6 = arith.constant 6 : index
    %c0_19 = arith.constant 0 : index
    %12 = vector.load %arg3[%c0_17, %c0_18, %c6, %c0_19] : memref<4x1x46x4xbf16, #tpu.memory_space<vmem>>, vector<4x1x32x4xbf16>
    %13 = vector.shape_cast %12 : vector<4x1x32x4xbf16> to vector<4x32x4xbf16>
    %c0_20 = arith.constant 0 : index
    %c0_21 = arith.constant 0 : index
    %c12 = arith.constant 12 : index
    %14 = vector.load %arg14[%c0_20, %c0_21, %c12] : memref<4x32x108xbf16, #tpu.memory_space<vmem>>, vector<4x32x4xbf16>
    tpu.vector_store %arg14[%c0_20, %c0_21, %c12], %13 {strides = array<i32>} : memref<4x32x108xbf16, #tpu.memory_space<vmem>>, vector<4x32x4xbf16>,
    %c0_22 = arith.constant 0 : index
    %c0_23 = arith.constant 0 : index
    %c7 = arith.constant 7 : index
    %c0_24 = arith.constant 0 : index
    %15 = vector.load %arg3[%c0_22, %c0_23, %c7, %c0_24] : memref<4x1x46x4xbf16, #tpu.memory_space<vmem>>, vector<4x1x32x4xbf16>
    %16 = vector.shape_cast %15 : vector<4x1x32x4xbf16> to vector<4x32x4xbf16>
    %c0_25 = arith.constant 0 : index
    %c0_26 = arith.constant 0 : index
    %c16 = arith.constant 16 : index
    %17 = vector.load %arg14[%c0_25, %c0_26, %c16] : memref<4x32x108xbf16, #tpu.memory_space<vmem>>, vector<4x32x4xbf16>
    tpu.vector_store %arg14[%c0_25, %c0_26, %c16], %16 {strides = array<i32>} : memref<4x32x108xbf16, #tpu.memory_space<vmem>>, vector<4x32x4xbf16>,
    %c0_27 = arith.constant 0 : index
    %c0_28 = arith.constant 0 : index
    %c8_29 = arith.constant 8 : index
    %c0_30 = arith.constant 0 : index
    %18 = vector.load %arg3[%c0_27, %c0_28, %c8_29, %c0_30] : memref<4x1x46x4xbf16, #tpu.memory_space<vmem>>, vector<4x1x32x4xbf16>
    %19 = vector.shape_cast %18 : vector<4x1x32x4xbf16> to vector<4x32x4xbf16>
    %c0_31 = arith.constant 0 : index
    %c0_32 = arith.constant 0 : index
    %c20 = arith.constant 20 : index
    %20 = vector.load %arg14[%c0_31, %c0_32, %c20] : memref<4x32x108xbf16, #tpu.memory_space<vmem>>, vector<4x32x4xbf16>
    tpu.vector_store %arg14[%c0_31, %c0_32, %c20], %19 {strides = array<i32>} : memref<4x32x108xbf16, #tpu.memory_space<vmem>>, vector<4x32x4xbf16>,
    %c0_33 = arith.constant 0 : index
    %c0_34 = arith.constant 0 : index
    %c12_35 = arith.constant 12 : index
    %c0_36 = arith.constant 0 : index
    %21 = vector.load %arg3[%c0_33, %c0_34, %c12_35, %c0_36] : memref<4x1x46x4xbf16, #tpu.memory_space<vmem>>, vector<4x1x32x4xbf16>
    %22 = vector.shape_cast %21 : vector<4x1x32x4xbf16> to vector<4x32x4xbf16>
    %c0_37 = arith.constant 0 : index
    %c0_38 = arith.constant 0 : index
    %c24 = arith.constant 24 : index
    %23 = vector.load %arg14[%c0_37, %c0_38, %c24] : memref<4x32x108xbf16, #tpu.memory_space<vmem>>, vector<4x32x4xbf16>
    tpu.vector_store %arg14[%c0_37, %c0_38, %c24], %22 {strides = array<i32>} : memref<4x32x108xbf16, #tpu.memory_space<vmem>>, vector<4x32x4xbf16>,
    %c0_39 = arith.constant 0 : index
    %c0_40 = arith.constant 0 : index
    %c13 = arith.constant 13 : index
    %c0_41 = arith.constant 0 : index
    %24 = vector.load %arg3[%c0_39, %c0_40, %c13, %c0_41] : memref<4x1x46x4xbf16, #tpu.memory_space<vmem>>, vector<4x1x32x4xbf16>
    %25 = vector.shape_cast %24 : vector<4x1x32x4xbf16> to vector<4x32x4xbf16>
    %c0_42 = arith.constant 0 : index
    %c0_43 = arith.constant 0 : index
    %c28 = arith.constant 28 : index
    %26 = vector.load %arg14[%c0_42, %c0_43, %c28] : memref<4x32x108xbf16, #tpu.memory_space<vmem>>, vector<4x32x4xbf16>
    tpu.vector_store %arg14[%c0_42, %c0_43, %c28], %25 {strides = array<i32>} : memref<4x32x108xbf16, #tpu.memory_space<vmem>>, vector<4x32x4xbf16>,
    %c0_44 = arith.constant 0 : index
    %c0_45 = arith.constant 0 : index
    %c14 = arith.constant 14 : index
    %c0_46 = arith.constant 0 : index
    %27 = vector.load %arg3[%c0_44, %c0_45, %c14, %c0_46] : memref<4x1x46x4xbf16, #tpu.memory_space<vmem>>, vector<4x1x32x4xbf16>
    %28 = vector.shape_cast %27 : vector<4x1x32x4xbf16> to vector<4x32x4xbf16>
    %c0_47 = arith.constant 0 : index
    %c0_48 = arith.constant 0 : index
    %c32 = arith.constant 32 : index
    %29 = vector.load %arg14[%c0_47, %c0_48, %c32] : memref<4x32x108xbf16, #tpu.memory_space<vmem>>, vector<4x32x4xbf16>
    tpu.vector_store %arg14[%c0_47, %c0_48, %c32], %28 {strides = array<i32>} : memref<4x32x108xbf16, #tpu.memory_space<vmem>>, vector<4x32x4xbf16>,
    %c0_49 = arith.constant 0 : index
    %c0_50 = arith.constant 0 : index
    %c0_51 = arith.constant 0 : index
    %c0_52 = arith.constant 0 : index
    %30 = vector.load %arg4[%c0_49, %c0_50, %c0_51, %c0_52] : memref<4x1x46x4xbf16, #tpu.memory_space<vmem>>, vector<4x1x32x4xbf16>
    %31 = vector.shape_cast %30 : vector<4x1x32x4xbf16> to vector<4x32x4xbf16>
    %c0_53 = arith.constant 0 : index
    %c0_54 = arith.constant 0 : index
    %c36 = arith.constant 36 : index
    %32 = vector.load %arg14[%c0_53, %c0_54, %c36] : memref<4x32x108xbf16, #tpu.memory_space<vmem>>, vector<4x32x4xbf16>
    tpu.vector_store %arg14[%c0_53, %c0_54, %c36], %31 {strides = array<i32>} : memref<4x32x108xbf16, #tpu.memory_space<vmem>>, vector<4x32x4xbf16>,
    %c0_55 = arith.constant 0 : index
    %c0_56 = arith.constant 0 : index
    %c1_57 = arith.constant 1 : index
    %c0_58 = arith.constant 0 : index
    %33 = vector.load %arg4[%c0_55, %c0_56, %c1_57, %c0_58] : memref<4x1x46x4xbf16, #tpu.memory_space<vmem>>, vector<4x1x32x4xbf16>
    %34 = vector.shape_cast %33 : vector<4x1x32x4xbf16> to vector<4x32x4xbf16>
    %c0_59 = arith.constant 0 : index
    %c0_60 = arith.constant 0 : index
    %c40 = arith.constant 40 : index
    %35 = vector.load %arg14[%c0_59, %c0_60, %c40] : memref<4x32x108xbf16, #tpu.memory_space<vmem>>, vector<4x32x4xbf16>
    tpu.vector_store %arg14[%c0_59, %c0_60, %c40], %34 {strides = array<i32>} : memref<4x32x108xbf16, #tpu.memory_space<vmem>>, vector<4x32x4xbf16>,
    %c0_61 = arith.constant 0 : index
    %c0_62 = arith.constant 0 : index
    %c2_63 = arith.constant 2 : index
    %c0_64 = arith.constant 0 : index
    %36 = vector.load %arg4[%c0_61, %c0_62, %c2_63, %c0_64] : memref<4x1x46x4xbf16, #tpu.memory_space<vmem>>, vector<4x1x32x4xbf16>
    %37 = vector.shape_cast %36 : vector<4x1x32x4xbf16> to vector<4x32x4xbf16>
    %c0_65 = arith.constant 0 : index
    %c0_66 = arith.constant 0 : index
    %c44 = arith.constant 44 : index
    %38 = vector.load %arg14[%c0_65, %c0_66, %c44] : memref<4x32x108xbf16, #tpu.memory_space<vmem>>, vector<4x32x4xbf16>
    tpu.vector_store %arg14[%c0_65, %c0_66, %c44], %37 {strides = array<i32>} : memref<4x32x108xbf16, #tpu.memory_space<vmem>>, vector<4x32x4xbf16>,
    %c0_67 = arith.constant 0 : index
    %c0_68 = arith.constant 0 : index
    %c6_69 = arith.constant 6 : index
    %c0_70 = arith.constant 0 : index
    %39 = vector.load %arg4[%c0_67, %c0_68, %c6_69, %c0_70] : memref<4x1x46x4xbf16, #tpu.memory_space<vmem>>, vector<4x1x32x4xbf16>
    %40 = vector.shape_cast %39 : vector<4x1x32x4xbf16> to vector<4x32x4xbf16>
    %c0_71 = arith.constant 0 : index
    %c0_72 = arith.constant 0 : index
    %c48 = arith.constant 48 : index
    %41 = vector.load %arg14[%c0_71, %c0_72, %c48] : memref<4x32x108xbf16, #tpu.memory_space<vmem>>, vector<4x32x4xbf16>
    tpu.vector_store %arg14[%c0_71, %c0_72, %c48], %40 {strides = array<i32>} : memref<4x32x108xbf16, #tpu.memory_space<vmem>>, vector<4x32x4xbf16>,
    %c0_73 = arith.constant 0 : index
    %c0_74 = arith.constant 0 : index
    %c7_75 = arith.constant 7 : index
    %c0_76 = arith.constant 0 : index
    %42 = vector.load %arg4[%c0_73, %c0_74, %c7_75, %c0_76] : memref<4x1x46x4xbf16, #tpu.memory_space<vmem>>, vector<4x1x32x4xbf16>
    %43 = vector.shape_cast %42 : vector<4x1x32x4xbf16> to vector<4x32x4xbf16>
    %c0_77 = arith.constant 0 : index
    %c0_78 = arith.constant 0 : index
    %c52 = arith.constant 52 : index
    %44 = vector.load %arg14[%c0_77, %c0_78, %c52] : memref<4x32x108xbf16, #tpu.memory_space<vmem>>, vector<4x32x4xbf16>
    tpu.vector_store %arg14[%c0_77, %c0_78, %c52], %43 {strides = array<i32>} : memref<4x32x108xbf16, #tpu.memory_space<vmem>>, vector<4x32x4xbf16>,
    %c0_79 = arith.constant 0 : index
    %c0_80 = arith.constant 0 : index
    %c8_81 = arith.constant 8 : index
    %c0_82 = arith.constant 0 : index
    %45 = vector.load %arg4[%c0_79, %c0_80, %c8_81, %c0_82] : memref<4x1x46x4xbf16, #tpu.memory_space<vmem>>, vector<4x1x32x4xbf16>
    %46 = vector.shape_cast %45 : vector<4x1x32x4xbf16> to vector<4x32x4xbf16>
    %c0_83 = arith.constant 0 : index
    %c0_84 = arith.constant 0 : index
    %c56 = arith.constant 56 : index
    %47 = vector.load %arg14[%c0_83, %c0_84, %c56] : memref<4x32x108xbf16, #tpu.memory_space<vmem>>, vector<4x32x4xbf16>
    tpu.vector_store %arg14[%c0_83, %c0_84, %c56], %46 {strides = array<i32>} : memref<4x32x108xbf16, #tpu.memory_space<vmem>>, vector<4x32x4xbf16>,
    %c0_85 = arith.constant 0 : index
    %c0_86 = arith.constant 0 : index
    %c12_87 = arith.constant 12 : index
    %c0_88 = arith.constant 0 : index
    %48 = vector.load %arg4[%c0_85, %c0_86, %c12_87, %c0_88] : memref<4x1x46x4xbf16, #tpu.memory_space<vmem>>, vector<4x1x32x4xbf16>
    %49 = vector.shape_cast %48 : vector<4x1x32x4xbf16> to vector<4x32x4xbf16>
    %c0_89 = arith.constant 0 : index
    %c0_90 = arith.constant 0 : index
    %c60 = arith.constant 60 : index
    %50 = vector.load %arg14[%c0_89, %c0_90, %c60] : memref<4x32x108xbf16, #tpu.memory_space<vmem>>, vector<4x32x4xbf16>
    tpu.vector_store %arg14[%c0_89, %c0_90, %c60], %49 {strides = array<i32>} : memref<4x32x108xbf16, #tpu.memory_space<vmem>>, vector<4x32x4xbf16>,
    %c0_91 = arith.constant 0 : index
    %c0_92 = arith.constant 0 : index
    %c13_93 = arith.constant 13 : index
    %c0_94 = arith.constant 0 : index
    %51 = vector.load %arg4[%c0_91, %c0_92, %c13_93, %c0_94] : memref<4x1x46x4xbf16, #tpu.memory_space<vmem>>, vector<4x1x32x4xbf16>
    %52 = vector.shape_cast %51 : vector<4x1x32x4xbf16> to vector<4x32x4xbf16>
    %c0_95 = arith.constant 0 : index
    %c0_96 = arith.constant 0 : index
    %c64 = arith.constant 64 : index
    %53 = vector.load %arg14[%c0_95, %c0_96, %c64] : memref<4x32x108xbf16, #tpu.memory_space<vmem>>, vector<4x32x4xbf16>
    tpu.vector_store %arg14[%c0_95, %c0_96, %c64], %52 {strides = array<i32>} : memref<4x32x108xbf16, #tpu.memory_space<vmem>>, vector<4x32x4xbf16>,
    %c0_97 = arith.constant 0 : index
    %c0_98 = arith.constant 0 : index
    %c14_99 = arith.constant 14 : index
    %c0_100 = arith.constant 0 : index
    %54 = vector.load %arg4[%c0_97, %c0_98, %c14_99, %c0_100] : memref<4x1x46x4xbf16, #tpu.memory_space<vmem>>, vector<4x1x32x4xbf16>
    %55 = vector.shape_cast %54 : vector<4x1x32x4xbf16> to vector<4x32x4xbf16>
    %c0_101 = arith.constant 0 : index
    %c0_102 = arith.constant 0 : index
    %c68 = arith.constant 68 : index
    %56 = vector.load %arg14[%c0_101, %c0_102, %c68] : memref<4x32x108xbf16, #tpu.memory_space<vmem>>, vector<4x32x4xbf16>
    tpu.vector_store %arg14[%c0_101, %c0_102, %c68], %55 {strides = array<i32>} : memref<4x32x108xbf16, #tpu.memory_space<vmem>>, vector<4x32x4xbf16>,
    %c0_103 = arith.constant 0 : index
    %c0_104 = arith.constant 0 : index
    %c0_105 = arith.constant 0 : index
    %c0_106 = arith.constant 0 : index
    %57 = vector.load %arg5[%c0_103, %c0_104, %c0_105, %c0_106] : memref<4x1x46x4xbf16, #tpu.memory_space<vmem>>, vector<4x1x32x4xbf16>
    %58 = vector.shape_cast %57 : vector<4x1x32x4xbf16> to vector<4x32x4xbf16>
    %c0_107 = arith.constant 0 : index
    %c0_108 = arith.constant 0 : index
    %c72 = arith.constant 72 : index
    %59 = vector.load %arg14[%c0_107, %c0_108, %c72] : memref<4x32x108xbf16, #tpu.memory_space<vmem>>, vector<4x32x4xbf16>
    tpu.vector_store %arg14[%c0_107, %c0_108, %c72], %58 {strides = array<i32>} : memref<4x32x108xbf16, #tpu.memory_space<vmem>>, vector<4x32x4xbf16>,
    %c0_109 = arith.constant 0 : index
    %c0_110 = arith.constant 0 : index
    %c1_111 = arith.constant 1 : index
    %c0_112 = arith.constant 0 : index
    %60 = vector.load %arg5[%c0_109, %c0_110, %c1_111, %c0_112] : memref<4x1x46x4xbf16, #tpu.memory_space<vmem>>, vector<4x1x32x4xbf16>
    %61 = vector.shape_cast %60 : vector<4x1x32x4xbf16> to vector<4x32x4xbf16>
    %c0_113 = arith.constant 0 : index
    %c0_114 = arith.constant 0 : index
    %c76 = arith.constant 76 : index
    %62 = vector.load %arg14[%c0_113, %c0_114, %c76] : memref<4x32x108xbf16, #tpu.memory_space<vmem>>, vector<4x32x4xbf16>
    tpu.vector_store %arg14[%c0_113, %c0_114, %c76], %61 {strides = array<i32>} : memref<4x32x108xbf16, #tpu.memory_space<vmem>>, vector<4x32x4xbf16>,
    %c0_115 = arith.constant 0 : index
    %c0_116 = arith.constant 0 : index
    %c2_117 = arith.constant 2 : index
    %c0_118 = arith.constant 0 : index
    %63 = vector.load %arg5[%c0_115, %c0_116, %c2_117, %c0_118] : memref<4x1x46x4xbf16, #tpu.memory_space<vmem>>, vector<4x1x32x4xbf16>
    %64 = vector.shape_cast %63 : vector<4x1x32x4xbf16> to vector<4x32x4xbf16>
    %c0_119 = arith.constant 0 : index
    %c0_120 = arith.constant 0 : index
    %c80 = arith.constant 80 : index
    %65 = vector.load %arg14[%c0_119, %c0_120, %c80] : memref<4x32x108xbf16, #tpu.memory_space<vmem>>, vector<4x32x4xbf16>
    tpu.vector_store %arg14[%c0_119, %c0_120, %c80], %64 {strides = array<i32>} : memref<4x32x108xbf16, #tpu.memory_space<vmem>>, vector<4x32x4xbf16>,
    %c0_121 = arith.constant 0 : index
    %c0_122 = arith.constant 0 : index
    %c6_123 = arith.constant 6 : index
    %c0_124 = arith.constant 0 : index
    %66 = vector.load %arg5[%c0_121, %c0_122, %c6_123, %c0_124] : memref<4x1x46x4xbf16, #tpu.memory_space<vmem>>, vector<4x1x32x4xbf16>
    %67 = vector.shape_cast %66 : vector<4x1x32x4xbf16> to vector<4x32x4xbf16>
    %c0_125 = arith.constant 0 : index
    %c0_126 = arith.constant 0 : index
    %c84 = arith.constant 84 : index
    %68 = vector.load %arg14[%c0_125, %c0_126, %c84] : memref<4x32x108xbf16, #tpu.memory_space<vmem>>, vector<4x32x4xbf16>
    tpu.vector_store %arg14[%c0_125, %c0_126, %c84], %67 {strides = array<i32>} : memref<4x32x108xbf16, #tpu.memory_space<vmem>>, vector<4x32x4xbf16>,
    %c0_127 = arith.constant 0 : index
    %c0_128 = arith.constant 0 : index
    %c7_129 = arith.constant 7 : index
    %c0_130 = arith.constant 0 : index
    %69 = vector.load %arg5[%c0_127, %c0_128, %c7_129, %c0_130] : memref<4x1x46x4xbf16, #tpu.memory_space<vmem>>, vector<4x1x32x4xbf16>
    %70 = vector.shape_cast %69 : vector<4x1x32x4xbf16> to vector<4x32x4xbf16>
    %c0_131 = arith.constant 0 : index
    %c0_132 = arith.constant 0 : index
    %c88 = arith.constant 88 : index
    %71 = vector.load %arg14[%c0_131, %c0_132, %c88] : memref<4x32x108xbf16, #tpu.memory_space<vmem>>, vector<4x32x4xbf16>
    tpu.vector_store %arg14[%c0_131, %c0_132, %c88], %70 {strides = array<i32>} : memref<4x32x108xbf16, #tpu.memory_space<vmem>>, vector<4x32x4xbf16>,
    %c0_133 = arith.constant 0 : index
    %c0_134 = arith.constant 0 : index
    %c8_135 = arith.constant 8 : index
    %c0_136 = arith.constant 0 : index
    %72 = vector.load %arg5[%c0_133, %c0_134, %c8_135, %c0_136] : memref<4x1x46x4xbf16, #tpu.memory_space<vmem>>, vector<4x1x32x4xbf16>
    %73 = vector.shape_cast %72 : vector<4x1x32x4xbf16> to vector<4x32x4xbf16>
    %c0_137 = arith.constant 0 : index
    %c0_138 = arith.constant 0 : index
    %c92 = arith.constant 92 : index
    %74 = vector.load %arg14[%c0_137, %c0_138, %c92] : memref<4x32x108xbf16, #tpu.memory_space<vmem>>, vector<4x32x4xbf16>
    tpu.vector_store %arg14[%c0_137, %c0_138, %c92], %73 {strides = array<i32>} : memref<4x32x108xbf16, #tpu.memory_space<vmem>>, vector<4x32x4xbf16>,
    %c0_139 = arith.constant 0 : index
    %c0_140 = arith.constant 0 : index
    %c12_141 = arith.constant 12 : index
    %c0_142 = arith.constant 0 : index
    %75 = vector.load %arg5[%c0_139, %c0_140, %c12_141, %c0_142] : memref<4x1x46x4xbf16, #tpu.memory_space<vmem>>, vector<4x1x32x4xbf16>
    %76 = vector.shape_cast %75 : vector<4x1x32x4xbf16> to vector<4x32x4xbf16>
    %c0_143 = arith.constant 0 : index
    %c0_144 = arith.constant 0 : index
    %c96 = arith.constant 96 : index
    %77 = vector.load %arg14[%c0_143, %c0_144, %c96] : memref<4x32x108xbf16, #tpu.memory_space<vmem>>, vector<4x32x4xbf16>
    tpu.vector_store %arg14[%c0_143, %c0_144, %c96], %76 {strides = array<i32>} : memref<4x32x108xbf16, #tpu.memory_space<vmem>>, vector<4x32x4xbf16>,
    %c0_145 = arith.constant 0 : index
    %c0_146 = arith.constant 0 : index
    %c13_147 = arith.constant 13 : index
    %c0_148 = arith.constant 0 : index
    %78 = vector.load %arg5[%c0_145, %c0_146, %c13_147, %c0_148] : memref<4x1x46x4xbf16, #tpu.memory_space<vmem>>, vector<4x1x32x4xbf16>
    %79 = vector.shape_cast %78 : vector<4x1x32x4xbf16> to vector<4x32x4xbf16>
    %c0_149 = arith.constant 0 : index
    %c0_150 = arith.constant 0 : index
    %c100 = arith.constant 100 : index
    %80 = vector.load %arg14[%c0_149, %c0_150, %c100] : memref<4x32x108xbf16, #tpu.memory_space<vmem>>, vector<4x32x4xbf16>
    tpu.vector_store %arg14[%c0_149, %c0_150, %c100], %79 {strides = array<i32>} : memref<4x32x108xbf16, #tpu.memory_space<vmem>>, vector<4x32x4xbf16>,
    %c0_151 = arith.constant 0 : index
    %c0_152 = arith.constant 0 : index
    %c14_153 = arith.constant 14 : index
    %c0_154 = arith.constant 0 : index
    %81 = vector.load %arg5[%c0_151, %c0_152, %c14_153, %c0_154] : memref<4x1x46x4xbf16, #tpu.memory_space<vmem>>, vector<4x1x32x4xbf16>
    %82 = vector.shape_cast %81 : vector<4x1x32x4xbf16> to vector<4x32x4xbf16>
    %c0_155 = arith.constant 0 : index
    %c0_156 = arith.constant 0 : index
    %c104 = arith.constant 104 : index
    %83 = vector.load %arg14[%c0_155, %c0_156, %c104] : memref<4x32x108xbf16, #tpu.memory_space<vmem>>, vector<4x32x4xbf16>
    tpu.vector_store %arg14[%c0_155, %c0_156, %c104], %82 {strides = array<i32>} : memref<4x32x108xbf16, #tpu.memory_space<vmem>>, vector<4x32x4xbf16>,
    %c0_157 = arith.constant 0 : index
    %c0_158 = arith.constant 0 : index
    %c0_159 = arith.constant 0 : index
    %84 = vector.load %arg14[%c0_157, %c0_158, %c0_159] : memref<4x32x108xbf16, #tpu.memory_space<vmem>>, vector<4x32x108xbf16>
    %85 = vector.shape_cast %84 : vector<4x32x108xbf16> to vector<128x108xbf16>
    %c0_160 = arith.constant 0 : index
    %c0_161 = arith.constant 0 : index
    %86 = vector.load %arg6[%c0_160, %c0_161] : memref<108x16xbf16, #tpu.memory_space<vmem>>, vector<108x16xbf16>
    %cst = arith.constant dense<0.000000e+00> : vector<128x16xf32>
    %87 = tpu.matmul %85, %86, %cst {dimension_numbers = #tpu.dot_dimension_numbers<[1], [0], [0], [1], [0, 0, 1, 1], [], []>} : vector<128x108xbf16>, vector<108x16xbf16>, vector<128x16xf32> -> vector<128x16xf32>
    %c0_162 = arith.constant 0 : index
    %c0_163 = arith.constant 0 : index
    %88 = vector.load %arg7[%c0_162, %c0_163] : memref<1x16xf32, #tpu.memory_space<vmem>>, vector<1x16xf32>
    %89 = vector.broadcast %88 : vector<1x16xf32> to vector<128x16xf32>
    %90 = arith.addf %87, %89 : vector<128x16xf32>
    %cst_164 = arith.constant 0.000000e+00 : f32
    %91 = vector.broadcast %cst_164 : f32 to vector<128x16xf32>
    %92 = arith.maximumf %90, %91 : vector<128x16xf32>
    %93 = vector.shape_cast %92 : vector<128x16xf32> to vector<4x32x16xf32>
    %c0_165 = arith.constant 0 : index
    %c0_166 = arith.constant 0 : index
    %94 = vector.load %arg2[%c0_165, %c0_166] : memref<32x1xf32, #tpu.memory_space<vmem>>, vector<32x1xf32>
    %95 = vector.shape_cast %94 : vector<32x1xf32> to vector<1x32x1xf32>
    %96 = vector.broadcast %95 : vector<1x32x1xf32> to vector<4x32x16xf32>
    %97 = arith.mulf %93, %96 : vector<4x32x16xf32>
    %c0_167 = arith.constant 0 : index
    %c0_168 = arith.constant 0 : index
    %98 = vector.load %arg13[%c0_167, %c0_168] : memref<4x16xf32, #tpu.memory_space<vmem>>, vector<4x16xf32>
    %cst_169 = arith.constant dense<0.000000e+00> : vector<4x16xf32>
    %99 = vector.multi_reduction <add>, %97, %cst_169 [1] : vector<4x32x16xf32> to vector<4x16xf32>
    %100 = arith.addf %98, %99 : vector<4x16xf32>
    %c0_170 = arith.constant 0 : index
    %c0_171 = arith.constant 0 : index
    %101 = vector.load %arg13[%c0_170, %c0_171] : memref<4x16xf32, #tpu.memory_space<vmem>>, vector<4x16xf32>
    tpu.vector_store %arg13[%c0_170, %c0_171], %100 {strides = array<i32>} : memref<4x16xf32, #tpu.memory_space<vmem>>, vector<4x16xf32>,
    %c3_i32 = arith.constant 3 : i32
    %102 = arith.cmpi eq, %arg1, %c3_i32 : i32
    %103 = arith.extui %102 : i1 to i32
    %c0_i32_172 = arith.constant 0 : i32
    %104 = arith.cmpi ne, %103, %c0_i32_172 : i32
    scf.if %104 {
      %c0_173 = arith.constant 0 : index
      %c0_174 = arith.constant 0 : index
      %105 = vector.load %arg13[%c0_173, %c0_174] : memref<4x16xf32, #tpu.memory_space<vmem>>, vector<4x16xf32>
      %cst_175 = arith.constant 1.562500e-02 : f32
      %106 = vector.broadcast %cst_175 : f32 to vector<4x16xf32>
      %107 = arith.mulf %105, %106 : vector<4x16xf32>
      %c0_176 = arith.constant 0 : index
      %c0_177 = arith.constant 0 : index
      %108 = vector.load %arg8[%c0_176, %c0_177] : memref<16x256xf32, #tpu.memory_space<vmem>>, vector<16x256xf32>
      %cst_178 = arith.constant dense<0.000000e+00> : vector<4x256xf32>
      %109 = tpu.matmul %107, %108, %cst_178 {dimension_numbers = #tpu.dot_dimension_numbers<[1], [0], [0], [1], [0, 0, 1, 1], [], []>} : vector<4x16xf32>, vector<16x256xf32>, vector<4x256xf32> -> vector<4x256xf32>
      %c0_179 = arith.constant 0 : index
      %c0_180 = arith.constant 0 : index
      %110 = vector.load %arg9[%c0_179, %c0_180] : memref<1x256xf32, #tpu.memory_space<vmem>>, vector<1x256xf32>
      %111 = vector.broadcast %110 : vector<1x256xf32> to vector<4x256xf32>
      %112 = arith.addf %109, %111 : vector<4x256xf32>
      %cst_181 = arith.constant 0.000000e+00 : f32
      %113 = vector.broadcast %cst_181 : f32 to vector<4x256xf32>
      %114 = arith.maximumf %112, %113 : vector<4x256xf32>
      %c0_182 = arith.constant 0 : index
      %c0_183 = arith.constant 0 : index
      %115 = vector.load %arg10[%c0_182, %c0_183] : memref<4x256xf32, #tpu.memory_space<vmem>>, vector<4x256xf32>
      %116 = arith.mulf %114, %115 : vector<4x256xf32>
      %cst_184 = arith.constant dense<0.000000e+00> : vector<4xf32>
      %117 = vector.multi_reduction <add>, %116, %cst_184 [1] : vector<4x256xf32> to vector<4xf32>
      %118 = vector.shape_cast %117 : vector<4xf32> to vector<4x1xf32>
      %c0_185 = arith.constant 0 : index
      %c0_186 = arith.constant 0 : index
      %119 = vector.load %arg11[%c0_185, %c0_186] : memref<4x1xf32, #tpu.memory_space<vmem>>, vector<4x1xf32>
      %120 = arith.addf %118, %119 : vector<4x1xf32>
      %c0_187 = arith.constant 0 : index
      %c0_188 = arith.constant 0 : index
      %121 = vector.load %arg12[%c0_187, %c0_188] : memref<4x1xf32, #tpu.memory_space<vmem>>, vector<4x1xf32>
      tpu.vector_store %arg12[%c0_187, %c0_188], %120 {strides = array<i32>} : memref<4x1xf32, #tpu.memory_space<vmem>>, vector<4x1xf32>,
    } else {
    }
    return
  }
  func.func @transform_0(%arg0: i32, %arg1: i32) -> (i32, i32) {
    %c0_i32 = arith.constant 0 : i32
    %c0_i32_0 = arith.constant 0 : i32
    %c0_i32_1 = arith.constant 0 : i32
    return %c0_i32, %c0_i32_0 : i32, i32
  }
  func.func @transform_1(%arg0: i32, %arg1: i32) -> (i32, i32, i32, i32) {
    %c0_i32 = arith.constant 0 : i32
    %0 = arith.addi %arg1, %c0_i32 : i32
    %c0_i32_0 = arith.constant 0 : i32
    %c0_i32_1 = arith.constant 0 : i32
    %c0_i32_2 = arith.constant 0 : i32
    return %arg0, %0, %c0_i32_0, %c0_i32_1 : i32, i32, i32, i32
  }
  func.func @transform_2(%arg0: i32, %arg1: i32) -> (i32, i32, i32, i32) {
    %c1_i32 = arith.constant 1 : i32
    %0 = arith.addi %arg1, %c1_i32 : i32
    %c0_i32 = arith.constant 0 : i32
    %c0_i32_0 = arith.constant 0 : i32
    %c0_i32_1 = arith.constant 0 : i32
    return %arg0, %0, %c0_i32, %c0_i32_0 : i32, i32, i32, i32
  }
  func.func @transform_3(%arg0: i32, %arg1: i32) -> (i32, i32, i32, i32) {
    %c2_i32 = arith.constant 2 : i32
    %0 = arith.addi %arg1, %c2_i32 : i32
    %c0_i32 = arith.constant 0 : i32
    %c0_i32_0 = arith.constant 0 : i32
    %c0_i32_1 = arith.constant 0 : i32
    return %arg0, %0, %c0_i32, %c0_i32_0 : i32, i32, i32, i32
  }
  func.func @transform_4(%arg0: i32, %arg1: i32) -> (i32, i32) {
    %c0_i32 = arith.constant 0 : i32
    %c0_i32_0 = arith.constant 0 : i32
    %c0_i32_1 = arith.constant 0 : i32
    return %c0_i32, %c0_i32_0 : i32, i32
  }
  func.func @transform_5(%arg0: i32, %arg1: i32) -> (i32, i32) {
    %c0_i32 = arith.constant 0 : i32
    %c0_i32_0 = arith.constant 0 : i32
    %c0_i32_1 = arith.constant 0 : i32
    return %c0_i32, %c0_i32_0 : i32, i32
  }
  func.func @transform_6(%arg0: i32, %arg1: i32) -> (i32, i32) {
    %c0_i32 = arith.constant 0 : i32
    %c0_i32_0 = arith.constant 0 : i32
    %c0_i32_1 = arith.constant 0 : i32
    return %c0_i32, %c0_i32_0 : i32, i32
  }
  func.func @transform_7(%arg0: i32, %arg1: i32) -> (i32, i32) {
    %c0_i32 = arith.constant 0 : i32
    %c0_i32_0 = arith.constant 0 : i32
    %c0_i32_1 = arith.constant 0 : i32
    return %c0_i32, %c0_i32_0 : i32, i32
  }
  func.func @transform_8(%arg0: i32, %arg1: i32) -> (i32, i32) {
    %c0_i32 = arith.constant 0 : i32
    %c0_i32_0 = arith.constant 0 : i32
    return %arg0, %c0_i32 : i32, i32
  }
  func.func @transform_9(%arg0: i32, %arg1: i32) -> (i32, i32) {
    %c0_i32 = arith.constant 0 : i32
    %c0_i32_0 = arith.constant 0 : i32
    return %arg0, %c0_i32 : i32, i32
  }
  func.func @transform_10(%arg0: i32, %arg1: i32) -> (i32, i32) {
    %c0_i32 = arith.constant 0 : i32
    %c0_i32_0 = arith.constant 0 : i32
    return %arg0, %c0_i32 : i32, i32
  }
}

</mosaic_0001>

<llo_original>
// kernel: tile.13
$region0: #{tile.13}
  %s0 = inlined_call_operand.vmem [shape: f32[2,2,256], index: 0, kind: input, shape index: {}]
  %s1 = inlined_call_operand.vmem [shape: f32[4,256], index: 1, kind: output, shape index: {}]
  $region1: #{tile.13} parent=0
    #allocation0 [shape = 'u8[8192]{0}', space=vmem, size = 0x2000, scoped, tag = 'scoped mem for output reshape']
    #allocation1 [shape = 'u8[16384]{0}', space=vmem, size = 0x4000, scoped, tag = 'scoped mem for input reshape']
    %s3 = sshll.u32 1, 2
    %s4 = ssub.s32 %s3, 1
    %s5 = smul.addr 2, 3
    %s6 = scalar_lea.vmem %s0, %s5
    %v7 = vld [vmem:[%s6] sm:%s4]
    %s8 = scalar_lea.vmem [#allocation1], 24
    %9 = vst [vmem:[%s8] sm:%s4] %v7
    %s10 = smul.addr 2, 2
    %s11 = scalar_lea.vmem %s0, %s10
    %v12 = vld [vmem:[%s11] sm:%s4]
    %s13 = scalar_lea.vmem [#allocation1], 16
    %14 = vst [vmem:[%s13] sm:%s4] %v12
    %s15 = scalar_lea.vmem %s0, 2
    %v16 = vld [vmem:[%s15] sm:%s4]
    %s17 = scalar_lea.vmem [#allocation1], 8
    %18 = vst [vmem:[%s17] sm:%s4] %v16
    %v19 = vld [vmem:[%s0] sm:%s4]
    %20 = vst [vmem:[#allocation1] sm:%s4] %v19
    %v21 = vld [vmem:[#allocation1] sm:$0x3]
    %22 = vst [vmem:[#allocation0] sm:$0x3] %v21
    %s23 = scalar_lea.vmem [#allocation1], 8
    %v24 = vld [vmem:[%s23] sm:$0x3]
    %s25 = scalar_lea.vmem [#allocation0], 8
    %26 = vst [vmem:[%s25] sm:$0x3] %v24
    %s27 = scalar_lea.vmem [#allocation1], 16
    %v28 = vld [vmem:[%s27] sm:$0x3]
    %s29 = scalar_lea.vmem [#allocation0], 2
    %30 = vst [vmem:[%s29] sm:$0x3] %v28
    %s31 = scalar_lea.vmem [#allocation1], 24
    %v32 = vld [vmem:[%s31] sm:$0x3]
    %s33 = scalar_lea.vmem [#allocation0], 10
    %34 = vst [vmem:[%s33] sm:$0x3] %v32
    %s36 = sshll.u32 1, 4
    %s37 = ssub.s32 %s36, 1
    %v39 = vld [vmem:[#allocation0] sm:%s37]
    %s40 = sshll.u32 1, 4
    %s41 = ssub.s32 %s40, 1
    %42 = vst [vmem:[%s1] sm:%s41] %v39
    %s43 = scalar_lea.vmem [#allocation0], 8
    %v44 = vld [vmem:[%s43] sm:%s37]
    %s45 = sshll.u32 1, 4
    %s46 = ssub.s32 %s45, 1
    %s47 = scalar_lea.vmem %s1, 4
    %48 = vst [vmem:[%s47] sm:%s46] %v44

// kernel: critic_forward.1
$region0: #{critic_forward.1}
  #allocation0 [shape = 'u32[]', space=smem, size = 0x4, offset = 0x4, fixed_abs, tag = 'smem constant byte address 0x4 - core index']
  #allocation1 [shape = 'u32[144,128]{1,0:T(1,128)}', space=vmem, size = 0x12000, scoped, tag = 'internal scratch']
  #allocation2 [shape = 'f32[4,16]{1,0:T(4,128)}', space=vmem, size = 0x800, scoped, tag = 'scratch operand']
  #allocation3 [shape = 'bf16[4,32,108]{2,1,0:T(8,128)(2,1)}', space=vmem, size = 0x8000, scoped, tag = 'scratch operand']
  %s0 = inlined_call_operand.vmem [shape: f32[32,1], index: 0, kind: input, shape index: {}]
  %s1 = inlined_call_operand.vmem [shape: bf16[4,6,46,4], index: 1, kind: input, shape index: {}, may-alias: {1,2,3}]
  %s2 = inlined_call_operand.vmem [shape: bf16[4,6,46,4], index: 2, kind: input, shape index: {}, may-alias: {1,2,3}]
  %s3 = inlined_call_operand.vmem [shape: bf16[4,6,46,4], index: 3, kind: input, shape index: {}, may-alias: {1,2,3}]
  %s4 = inlined_call_operand.vmem [shape: bf16[108,16], index: 4, kind: input, shape index: {}]
  %s5 = inlined_call_operand.vmem [shape: f32[1,16], index: 5, kind: input, shape index: {}]
  %s6 = inlined_call_operand.vmem [shape: f32[16,256], index: 6, kind: input, shape index: {}]
  %s7 = inlined_call_operand.vmem [shape: f32[1,256], index: 7, kind: input, shape index: {}]
  %s8 = inlined_call_operand.vmem [shape: f32[4,256], index: 8, kind: input, shape index: {}]
  %s9 = inlined_call_operand.vmem [shape: f32[4,1], index: 9, kind: input, shape index: {}]
  %s10 = inlined_call_operand.vmem [shape: f32[4,1], index: 10, kind: output, shape index: {}]
  %s11 = sld [smem:[#allocation0]]
  $region204: #{critic_forward.1} parent=0
    _
  %s13 = ssub.s32 1, %s11
  %s14 = scalar_select 0, %s13, %s11
  $region1: #{critic_forward.1} parent=0
    #allocation4 [shape = 'u8[98304]{0}', space=vmem, size = 0x18000, scoped, tag = 'input window, operand 1']
    #allocation5 [shape = 'u8[98304]{0}', space=vmem, size = 0x18000, scoped, tag = 'input window, operand 2']
    #allocation6 [shape = 'u8[98304]{0}', space=vmem, size = 0x18000, scoped, tag = 'input window, operand 3']
    loop: start=0, step=1, limit=6
    $region2: #{critic_forward.1} parent=1 // loop_pre_header
      _
    $region3: #{critic_forward.1} parent=1 // loop_header
      %s16 = sphi 0, %s20
      %p17 = scmp.ge.s32.totalorder %s16, 6
      %s23 = sphi 0, %s35
      %s24 = sphi 0, %s31
      %s25 = sphi 0, %s23
      %s26 = sphi 0, %s24
      %s27 = sphi 0, %s25
      %s28 = sphi 0, %s26
      %s36 = sphi 0, %s36
      %s38 = sphi 0, %s36
      %s39 = sphi 0, %s38
      %s53 = sphi 0, %s39
      %s61 = sphi 0, %s63
      %s64 = sphi 0, %s61
      %s65 = sphi 0, %s64
      %s81 = sphi 0, %s65
      %s91 = sphi 0, %s93
      %s94 = sphi 0, %s91
      %s95 = sphi 0, %s94
      %s111 = sphi 0, %s95
      %s121 = sphi 0, %s123
      %s124 = sphi 0, %s121
      %s125 = sphi 0, %s124
      %s141 = sphi 0, %s125
      %s145 = sphi 0, %s145
      %s147 = sphi 0, %s145
      %s148 = sphi 0, %s147
      %s162 = sphi 0, %s148
      %s166 = sphi 0, %s166
      %s168 = sphi 0, %s166
      %s169 = sphi 0, %s168
      %s183 = sphi 0, %s169
      %s187 = sphi 0, %s187
      %s189 = sphi 0, %s187
      %s190 = sphi 0, %s189
      %s204 = sphi 0, %s190
      %s208 = sphi 0, %s208
      %s210 = sphi 0, %s208
      %s211 = sphi 0, %s210
      %s225 = sphi 0, %s211
      %s231 = sphi 0, %s233
      %s234 = sphi 0, %s231
      %s235 = sphi 0, %s234
      %s251 = sphi 0, %s235
      %s257 = sphi 0, %s259
      %s260 = sphi 0, %s257
      %s261 = sphi 0, %s260
      %s277 = sphi 0, %s261
      %s283 = sphi 0, %s285
      %s286 = sphi 0, %s283
      %s287 = sphi 0, %s286
      %s303 = sphi 0, %s287
    $region4: #{critic_forward.1} parent=1 // loop_header_branch
      %19 = sbr.rel (%p17) target = $region8
    $region5: #{critic_forward.1} parent=1 // loop_body
      %s21 = ssub.s32 %s16, 1
      %s22 = ssub.s32 %s16, 2
      %s29 = sadd.s32 1, %s24
      %p30 = scmp.ge.s32.totalorder %s29, 4
      %s31 = scalar_select %p30, 0, %s29
      %s32 = sadd.s32 1, %s23
      %s33 = scalar_select %p30, %s32, %s23
      %p34 = scmp.ge.s32.totalorder %s33, 1
      %s35 = scalar_select %p34, 0, %s33
      %s37 = sadd.s32 %s36, 1
      %p40 = scmp.eq.s32.totalorder %s16, 3
      %p41 = scmp.ne.s32.totalorder %s36, %s38
      %p42 = scmp.eq.s32.totalorder %s16, 0
      %p43 = por %p41, %p42
      %p44 = scmp.ne.s32.totalorder %s36, %s38
      %p45 = scmp.eq.s32.totalorder %s21, 3
      %p46 = por %p44, %p45
      %p47 = scmp.ne.s32.totalorder %s38, %s39
      %p48 = scmp.eq.s32.totalorder %s21, 0
      %p49 = por %p47, %p48
      %p50 = scmp.ne.s32.totalorder %s38, %s39
      %p51 = scmp.eq.s32.totalorder %s22, 3
      %p52 = por %p50, %p51
      %p54 = scmp.ne.s32.totalorder %s39, %s53
      %p55 = scmp.eq.s32.totalorder %s22, 0
      %p56 = por %p54, %p55
      %s57 = ssub.s32 %s23, %s35
      %s58 = ssub.s32 %s24, %s31
      %s59 = sor.u32 %s57, %s58
      %p60 = scmp.eq.s32.totalorder %s59, 0
      %s62 = sadd.s32 %s61, 1
      %s63 = scalar_select %p60, %s61, %s62
      %p66 = pneg %p60
      %p67 = scmp.eq.s32.totalorder %s16, 3
      %p68 = por %p66, %p67
      %p69 = scmp.ne.s32.totalorder %s61, %s64
      %p70 = scmp.eq.s32.totalorder %s16, 0
      %p71 = por %p69, %p70
      %p72 = scmp.ne.s32.totalorder %s61, %s64
      %p73 = scmp.eq.s32.totalorder %s21, 3
      %p74 = por %p72, %p73
      %p75 = scmp.ne.s32.totalorder %s64, %s65
      %p76 = scmp.eq.s32.totalorder %s21, 0
      %p77 = por %p75, %p76
      %p78 = scmp.ne.s32.totalorder %s64, %s65
      %p79 = scmp.eq.s32.totalorder %s22, 3
      %p80 = por %p78, %p79
      %p82 = scmp.ne.s32.totalorder %s65, %s81
      %p83 = scmp.eq.s32.totalorder %s22, 0
      %p84 = por %p82, %p83
      %s85 = sadd.s32 %s24, 1
      %s86 = sadd.s32 %s31, 1
      %s87 = ssub.s32 %s23, %s35
      %s88 = ssub.s32 %s85, %s86
      %s89 = sor.u32 %s87, %s88
      %p90 = scmp.eq.s32.totalorder %s89, 0
      %s92 = sadd.s32 %s91, 1
      %s93 = scalar_select %p90, %s91, %s92
      %p96 = pneg %p90
      %p97 = scmp.eq.s32.totalorder %s16, 3
      %p98 = por %p96, %p97
      %p99 = scmp.ne.s32.totalorder %s91, %s94
      %p100 = scmp.eq.s32.totalorder %s16, 0
      %p101 = por %p99, %p100
      %p102 = scmp.ne.s32.totalorder %s91, %s94
      %p103 = scmp.eq.s32.totalorder %s21, 3
      %p104 = por %p102, %p103
      %p105 = scmp.ne.s32.totalorder %s94, %s95
      %p106 = scmp.eq.s32.totalorder %s21, 0
      %p107 = por %p105, %p106
      %p108 = scmp.ne.s32.totalorder %s94, %s95
      %p109 = scmp.eq.s32.totalorder %s22, 3
      %p110 = por %p108, %p109
      %p112 = scmp.ne.s32.totalorder %s95, %s111
      %p113 = scmp.eq.s32.totalorder %s22, 0
      %p114 = por %p112, %p113
      %s115 = sadd.s32 %s24, 2
      %s116 = sadd.s32 %s31, 2
      %s117 = ssub.s32 %s23, %s35
      %s118 = ssub.s32 %s115, %s116
      %s119 = sor.u32 %s117, %s118
      %p120 = scmp.eq.s32.totalorder %s119, 0
      %s122 = sadd.s32 %s121, 1
      %s123 = scalar_select %p120, %s121, %s122
      %p126 = pneg %p120
      %p127 = scmp.eq.s32.totalorder %s16, 3
      %p128 = por %p126, %p127
      %p129 = scmp.ne.s32.totalorder %s121, %s124
      %p130 = scmp.eq.s32.totalorder %s16, 0
      %p131 = por %p129, %p130
      %p132 = scmp.ne.s32.totalorder %s121, %s124
      %p133 = scmp.eq.s32.totalorder %s21, 3
      %p134 = por %p132, %p133
      %p135 = scmp.ne.s32.totalorder %s124, %s125
      %p136 = scmp.eq.s32.totalorder %s21, 0
      %p137 = por %p135, %p136
      %p138 = scmp.ne.s32.totalorder %s124, %s125
      %p139 = scmp.eq.s32.totalorder %s22, 3
      %p140 = por %p138, %p139
      %p142 = scmp.ne.s32.totalorder %s125, %s141
      %p143 = scmp.eq.s32.totalorder %s22, 0
      %p144 = por %p142, %p143
      %s146 = sadd.s32 %s145, 1
      %p149 = scmp.eq.s32.totalorder %s16, 3
      %p150 = scmp.ne.s32.totalorder %s145, %s147
      %p151 = scmp.eq.s32.totalorder %s16, 0
      %p152 = por %p150, %p151
      %p153 = scmp.ne.s32.totalorder %s145, %s147
      %p154 = scmp.eq.s32.totalorder %s21, 3
      %p155 = por %p153, %p154
      %p156 = scmp.ne.s32.totalorder %s147, %s148
      %p157 = scmp.eq.s32.totalorder %s21, 0
      %p158 = por %p156, %p157
      %p159 = scmp.ne.s32.totalorder %s147, %s148
      %p160 = scmp.eq.s32.totalorder %s22, 3
      %p161 = por %p159, %p160
      %p163 = scmp.ne.s32.totalorder %s148, %s162
      %p164 = scmp.eq.s32.totalorder %s22, 0
      %p165 = por %p163, %p164
      %s167 = sadd.s32 %s166, 1
      %p170 = scmp.eq.s32.totalorder %s16, 3
      %p171 = scmp.ne.s32.totalorder %s166, %s168
      %p172 = scmp.eq.s32.totalorder %s16, 0
      %p173 = por %p171, %p172
      %p174 = scmp.ne.s32.totalorder %s166, %s168
      %p175 = scmp.eq.s32.totalorder %s21, 3
      %p176 = por %p174, %p175
      %p177 = scmp.ne.s32.totalorder %s168, %s169
      %p178 = scmp.eq.s32.totalorder %s21, 0
      %p179 = por %p177, %p178
      %p180 = scmp.ne.s32.totalorder %s168, %s169
      %p181 = scmp.eq.s32.totalorder %s22, 3
      %p182 = por %p180, %p181
      %p184 = scmp.ne.s32.totalorder %s169, %s183
      %p185 = scmp.eq.s32.totalorder %s22, 0
      %p186 = por %p184, %p185
      %s188 = sadd.s32 %s187, 1
      %p191 = scmp.eq.s32.totalorder %s16, 3
      %p192 = scmp.ne.s32.totalorder %s187, %s189
      %p193 = scmp.eq.s32.totalorder %s16, 0
      %p194 = por %p192, %p193
      %p195 = scmp.ne.s32.totalorder %s187, %s189
      %p196 = scmp.eq.s32.totalorder %s21, 3
      %p197 = por %p195, %p196
      %p198 = scmp.ne.s32.totalorder %s189, %s190
      %p199 = scmp.eq.s32.totalorder %s21, 0
      %p200 = por %p198, %p199
      %p201 = scmp.ne.s32.totalorder %s189, %s190
      %p202 = scmp.eq.s32.totalorder %s22, 3
      %p203 = por %p201, %p202
      %p205 = scmp.ne.s32.totalorder %s190, %s204
      %p206 = scmp.eq.s32.totalorder %s22, 0
      %p207 = por %p205, %p206
      %s209 = sadd.s32 %s208, 1
      %p212 = scmp.eq.s32.totalorder %s16, 3
      %p213 = scmp.ne.s32.totalorder %s208, %s210
      %p214 = scmp.eq.s32.totalorder %s16, 0
      %p215 = por %p213, %p214
      %p216 = scmp.ne.s32.totalorder %s208, %s210
      %p217 = scmp.eq.s32.totalorder %s21, 3
      %p218 = por %p216, %p217
      %p219 = scmp.ne.s32.totalorder %s210, %s211
      %p220 = scmp.eq.s32.totalorder %s21, 0
      %p221 = por %p219, %p220
      %p222 = scmp.ne.s32.totalorder %s210, %s211
      %p223 = scmp.eq.s32.totalorder %s22, 3
      %p224 = por %p222, %p223
      %p226 = scmp.ne.s32.totalorder %s211, %s225
      %p227 = scmp.eq.s32.totalorder %s22, 0
      %p228 = por %p226, %p227
      %s229 = ssub.s32 %s23, %s35
      %p230 = scmp.eq.s32.totalorder %s229, 0
      %s232 = sadd.s32 %s231, 1
      %s233 = scalar_select %p230, %s231, %s232
      %p236 = pneg %p230
      %p237 = scmp.eq.s32.totalorder %s16, 3
      %p238 = por %p236, %p237
      %p239 = scmp.ne.s32.totalorder %s231, %s234
      %p240 = scmp.eq.s32.totalorder %s16, 0
      %p241 = por %p239, %p240
      %p242 = scmp.ne.s32.totalorder %s231, %s234
      %p243 = scmp.eq.s32.totalorder %s21, 3
      %p244 = por %p242, %p243
      %p245 = scmp.ne.s32.totalorder %s234, %s235
      %p246 = scmp.eq.s32.totalorder %s21, 0
      %p247 = por %p245, %p246
      %p248 = scmp.ne.s32.totalorder %s234, %s235
      %p249 = scmp.eq.s32.totalorder %s22, 3
      %p250 = por %p248, %p249
      %p252 = scmp.ne.s32.totalorder %s235, %s251
      %p253 = scmp.eq.s32.totalorder %s22, 0
      %p254 = por %p252, %p253
      %s255 = ssub.s32 %s23, %s35
      %p256 = scmp.eq.s32.totalorder %s255, 0
      %s258 = sadd.s32 %s257, 1
      %s259 = scalar_select %p256, %s257, %s258
      %p262 = pneg %p256
      %p263 = scmp.eq.s32.totalorder %s16, 3
      %p264 = por %p262, %p263
      %p265 = scmp.ne.s32.totalorder %s257, %s260
      %p266 = scmp.eq.s32.totalorder %s16, 0
      %p267 = por %p265, %p266
      %p268 = scmp.ne.s32.totalorder %s257, %s260
      %p269 = scmp.eq.s32.totalorder %s21, 3
      %p270 = por %p268, %p269
      %p271 = scmp.ne.s32.totalorder %s260, %s261
      %p272 = scmp.eq.s32.totalorder %s21, 0
      %p273 = por %p271, %p272
      %p274 = scmp.ne.s32.totalorder %s260, %s261
      %p275 = scmp.eq.s32.totalorder %s22, 3
      %p276 = por %p274, %p275
      %p278 = scmp.ne.s32.totalorder %s261, %s277
      %p279 = scmp.eq.s32.totalorder %s22, 0
      %p280 = por %p278, %p279
      %s281 = ssub.s32 %s23, %s35
      %p282 = scmp.eq.s32.totalorder %s281, 0
      %s284 = sadd.s32 %s283, 1
      %s285 = scalar_select %p282, %s283, %s284
      %p288 = pneg %p282
      %p289 = scmp.eq.s32.totalorder %s16, 3
      %p290 = por %p288, %p289
      %p291 = scmp.ne.s32.totalorder %s283, %s286
      %p292 = scmp.eq.s32.totalorder %s16, 0
      %p293 = por %p291, %p292
      %p294 = scmp.ne.s32.totalorder %s283, %s286
      %p295 = scmp.eq.s32.totalorder %s21, 3
      %p296 = por %p294, %p295
      %p297 = scmp.ne.s32.totalorder %s286, %s287
      %p298 = scmp.eq.s32.totalorder %s21, 0
      %p299 = por %p297, %p298
      %p300 = scmp.ne.s32.totalorder %s286, %s287
      %p301 = scmp.eq.s32.totalorder %s22, 3
      %p302 = por %p300, %p301
      %p304 = scmp.ne.s32.totalorder %s287, %s303
      %p305 = scmp.eq.s32.totalorder %s22, 0
      %p306 = por %p304, %p305
      %p307 = scmp.le.s32.totalorder 1, %s16
      %p308 = scmp.lt.s32.totalorder %s16, 5
      %p309 = pnand %p307, %p308
      %p310 = pneg %p309
      // Predicated region
      $region9: #{critic_forward.1} parent=5 // pred_check
        _
      $region10: #{critic_forward.1} parent=5 // pred_check_branch
        %312 = sbr.rel (%p309) target = $region12
      $region11: #{critic_forward.1} parent=5 // pred_region
        %s313 = ssub.s32 %s16, 1
        // Predicated region
        $region13: #{critic_forward.1} parent=11 // pred_check
          %p314 = pneg %p49
        $region14: #{critic_forward.1} parent=11 // pred_check_branch
          %316 = sbr.rel (%p314) target = $region16
        $region15: #{critic_forward.1} parent=11 // pred_region
          _
        $region16: #{critic_forward.1} parent=11 // pred_fallthru
          _
        // Predicated region
        $region17: #{critic_forward.1} parent=11 // pred_check
          %p317 = pneg %p158
        $region18: #{critic_forward.1} parent=11 // pred_check_branch
          %319 = sbr.rel (%p317) target = $region20
        $region19: #{critic_forward.1} parent=11 // pred_region
          _
        $region20: #{critic_forward.1} parent=11 // pred_fallthru
          _
        // Predicated region
        $region21: #{critic_forward.1} parent=11 // pred_check
          %p320 = pneg %p179
        $region22: #{critic_forward.1} parent=11 // pred_check_branch
          %322 = sbr.rel (%p320) target = $region24
        $region23: #{critic_forward.1} parent=11 // pred_region
          _
        $region24: #{critic_forward.1} parent=11 // pred_fallthru
          _
        // Predicated region
        $region25: #{critic_forward.1} parent=11 // pred_check
          %p323 = pneg %p200
        $region26: #{critic_forward.1} parent=11 // pred_check_branch
          %325 = sbr.rel (%p323) target = $region28
        $region27: #{critic_forward.1} parent=11 // pred_region
          _
        $region28: #{critic_forward.1} parent=11 // pred_fallthru
          _
        // Predicated region
        $region29: #{critic_forward.1} parent=11 // pred_check
          %p326 = pneg %p221
        $region30: #{critic_forward.1} parent=11 // pred_check_branch
          %328 = sbr.rel (%p326) target = $region32
        $region31: #{critic_forward.1} parent=11 // pred_region
          _
        $region32: #{critic_forward.1} parent=11 // pred_fallthru
          _
        // Predicated region
        $region33: #{critic_forward.1} parent=11 // pred_check
          %p329 = pneg %p247
        $region34: #{critic_forward.1} parent=11 // pred_check_branch
          %331 = sbr.rel (%p329) target = $region36
        $region35: #{critic_forward.1} parent=11 // pred_region
          %p332 = scmp.lt.s32.totalorder %s25, 0
          %s333 = scalar_select %p332, %s25, 0
          %s334 = smul.addr %s333, 2
          %s335 = smul.addr %s334, 4
          %s336 = scalar_lea.vmem %s8, %s335
        $region36: #{critic_forward.1} parent=11 // pred_fallthru
          _
        // Predicated region
        $region37: #{critic_forward.1} parent=11 // pred_check
          %p337 = pneg %p273
        $region38: #{critic_forward.1} parent=11 // pred_check_branch
          %339 = sbr.rel (%p337) target = $region40
        $region39: #{critic_forward.1} parent=11 // pred_region
          %p340 = scmp.lt.s32.totalorder %s25, 0
          %s341 = scalar_select %p340, %s25, 0
          %s342 = smul.addr %s341, 4
          %s343 = scalar_lea.vmem %s9, %s342
        $region40: #{critic_forward.1} parent=11 // pred_fallthru
          _
      $region12: #{critic_forward.1} parent=5 // pred_fallthru
        _
      %p344 = scmp.lt.s32.totalorder %s16, 4
      // Predicated region
      $region41: #{critic_forward.1} parent=5 // pred_check
        %p345 = pneg %p344
      $region42: #{critic_forward.1} parent=5 // pred_check_branch
        %347 = sbr.rel (%p345) target = $region44
      $region43: #{critic_forward.1} parent=5 // pred_region
        // Predicated region
        $region45: #{critic_forward.1} parent=43 // pred_check
          %p348 = pneg %p71
        $region46: #{critic_forward.1} parent=43 // pred_check_branch
          %350 = sbr.rel (%p348) target = $region48
        $region47: #{critic_forward.1} parent=43 // pred_region
          %s351 = sand.u32 %s61, 1
          %s352 = sand.u32 %s61, 1
          %s353 = smul.addr %s352, 96
          %s354 = scalar_lea.vmem [#allocation4], %s353
          %s355 = smul.u32 4, %s23
          %s356 = smul.addr %s24, 6
          %s357 = smul.addr %s355, 36
          %s358 = sadd.s32 %s356, %s357
          %s359 = smul.addr %s358, 4
          %s360 = scalar_lea.vmem %s1, %s359
          // Predicated region
          $region49: #{critic_forward.1} parent=47 // pred_check
            _
          $region50: #{critic_forward.1} parent=47 // pred_check_branch
            %362 = sbr.rel (0) target = $region52
          $region51: #{critic_forward.1} parent=47 // pred_region
            // Predicated region
            $region53: #{critic_forward.1} parent=51 // pred_check
              _
            $region54: #{critic_forward.1} parent=51 // pred_check_branch
              %364 = sbr.rel target = $region56
            $region55: #{critic_forward.1} parent=51 // pred_region
              // Predicated region
              $region68: #{critic_forward.1} parent=55 // pred_check
                _
              $region69: #{critic_forward.1} parent=55 // pred_check_branch
                %426 = sbr.rel (0) target = $region71
              $region70: #{critic_forward.1} parent=55 // pred_region
                loop: start=0, step=1, limit=1
                $region72: #{critic_forward.1} parent=70 // loop_pre_header
                  _
                $region73: #{critic_forward.1} parent=70 // loop_header
                  %s428 = sphi 0, %s432
                  %p429 = scmp.ge.s32.totalorder %s428, 1
                  %s433 = sphi %s360, %s360
                  %s434 = sphi %s354, %s354
                $region74: #{critic_forward.1} parent=70 // loop_header_branch
                  %431 = sbr.rel (%p429) target = $region78
                $region75: #{critic_forward.1} parent=70 // loop_body
                  _
                $region76: #{critic_forward.1} parent=70 // loop_footer
                  %s432 = sadd.s32 1, %s428
                $region77: #{critic_forward.1} parent=70 // loop_footer_branch
                  %427 = sbr.rel target = $region73
                $region78: #{critic_forward.1} parent=70 // loop_exit
                  _
                %s436 = ssub.s32 16, 1
                loop: start=0, step=1, limit=1
                $region79: #{critic_forward.1} parent=70 // loop_pre_header
                  _
                $region80: #{critic_forward.1} parent=70 // loop_header
                  %s438 = sphi 0, %s442
                  %p439 = scmp.ge.s32.totalorder %s438, 1
                  %s443 = sphi %s360, %s360
                  %s444 = sphi %s354, %s354
                $region81: #{critic_forward.1} parent=70 // loop_header_branch
                  %441 = sbr.rel (%p439) target = $region85
                $region82: #{critic_forward.1} parent=70 // loop_body
                  %v445 = vld [vmem:[%s443] sm:%s436]
                  %446 = vst [vmem:[%s444] sm:%s436] %v445
                  %v447 = vld [vmem:[%s443 + $0x4] sm:%s436]
                  %448 = vst [vmem:[%s444 + $0x4] sm:%s436] %v447
                  %v449 = vld [vmem:[%s443 + $0x8] sm:%s436]
                  %450 = vst [vmem:[%s444 + $0x8] sm:%s436] %v449
                  %v451 = vld [vmem:[%s443 + $0xc] sm:%s436]
                  %452 = vst [vmem:[%s444 + $0xc] sm:%s436] %v451
                  %v453 = vld [vmem:[%s443 + $0x10] sm:%s436]
                  %454 = vst [vmem:[%s444 + $0x10] sm:%s436] %v453
                  %v455 = vld [vmem:[%s443 + $0x14] sm:%s436]
                  %456 = vst [vmem:[%s444 + $0x14] sm:%s436] %v455
                  %v457 = vld [vmem:[%s443 + $0x90] sm:%s436]
                  %458 = vst [vmem:[%s444 + $0x18] sm:%s436] %v457
                  %v459 = vld [vmem:[%s443 + $0x94] sm:%s436]
                  %460 = vst [vmem:[%s444 + $0x1c] sm:%s436] %v459
                  %v461 = vld [vmem:[%s443 + $0x98] sm:%s436]
                  %462 = vst [vmem:[%s444 + $0x20] sm:%s436] %v461
                  %v463 = vld [vmem:[%s443 + $0x9c] sm:%s436]
                  %464 = vst [vmem:[%s444 + $0x24] sm:%s436] %v463
                  %v465 = vld [vmem:[%s443 + $0xa0] sm:%s436]
                  %466 = vst [vmem:[%s444 + $0x28] sm:%s436] %v465
                  %v467 = vld [vmem:[%s443 + $0xa4] sm:%s436]
                  %468 = vst [vmem:[%s444 + $0x2c] sm:%s436] %v467
                  %v469 = vld [vmem:[%s443 + $0x120] sm:%s436]
                  %470 = vst [vmem:[%s444 + $0x30] sm:%s436] %v469
                  %v471 = vld [vmem:[%s443 + $0x124] sm:%s436]
                  %472 = vst [vmem:[%s444 + $0x34] sm:%s436] %v471
                  %v473 = vld [vmem:[%s443 + $0x128] sm:%s436]
                  %474 = vst [vmem:[%s444 + $0x38] sm:%s436] %v473
                  %v475 = vld [vmem:[%s443 + $0x12c] sm:%s436]
                  %476 = vst [vmem:[%s444 + $0x3c] sm:%s436] %v475
                  %v477 = vld [vmem:[%s443 + $0x130] sm:%s436]
                  %478 = vst [vmem:[%s444 + $0x40] sm:%s436] %v477
                  %v479 = vld [vmem:[%s443 + $0x134] sm:%s436]
                  %480 = vst [vmem:[%s444 + $0x44] sm:%s436] %v479
                  %v481 = vld [vmem:[%s443 + $0x1b0] sm:%s436]
                  %482 = vst [vmem:[%s444 + $0x48] sm:%s436] %v481
                  %v483 = vld [vmem:[%s443 + $0x1b4] sm:%s436]
                  %484 = vst [vmem:[%s444 + $0x4c] sm:%s436] %v483
                  %v485 = vld [vmem:[%s443 + $0x1b8] sm:%s436]
                  %486 = vst [vmem:[%s444 + $0x50] sm:%s436] %v485
                  %v487 = vld [vmem:[%s443 + $0x1bc] sm:%s436]
                  %488 = vst [vmem:[%s444 + $0x54] sm:%s436] %v487
                  %v489 = vld [vmem:[%s443 + $0x1c0] sm:%s436]
                  %490 = vst [vmem:[%s444 + $0x58] sm:%s436] %v489
                  %v491 = vld [vmem:[%s443 + $0x1c4] sm:%s436]
                  %492 = vst [vmem:[%s444 + $0x5c] sm:%s436] %v491
                $region83: #{critic_forward.1} parent=70 // loop_footer
                  %s442 = sadd.s32 1, %s438
                $region84: #{critic_forward.1} parent=70 // loop_footer_branch
                  %437 = sbr.rel target = $region80
                $region85: #{critic_forward.1} parent=70 // loop_exit
                  _
              $region71: #{critic_forward.1} parent=55 // pred_fallthru
                _
            $region56: #{critic_forward.1} parent=51 // pred_fallthru
              _
            // Predicated region
            $region57: #{critic_forward.1} parent=51 // pred_check
              _
            $region58: #{critic_forward.1} parent=51 // pred_check_branch
              %366 = sbr.rel (0) target = $region60
            $region59: #{critic_forward.1} parent=51 // pred_region
              %s368 = ssub.s32 16, 1
              loop: start=0, step=1, limit=1
              $region61: #{critic_forward.1} parent=59 // loop_pre_header
                _
              $region62: #{critic_forward.1} parent=59 // loop_header
                %s370 = sphi 0, %s374
                %p371 = scmp.ge.s32.totalorder %s370, 1
                %s375 = sphi %s360, %s360
                %s376 = sphi %s354, %s354
              $region63: #{critic_forward.1} parent=59 // loop_header_branch
                %373 = sbr.rel (%p371) target = $region67
              $region64: #{critic_forward.1} parent=59 // loop_body
                %v377 = vld [vmem:[%s375] sm:%s368]
                %378 = vst [vmem:[%s376] sm:%s368] %v377
                %v379 = vld [vmem:[%s375 + $0x4] sm:%s368]
                %380 = vst [vmem:[%s376 + $0x4] sm:%s368] %v379
                %v381 = vld [vmem:[%s375 + $0x8] sm:%s368]
                %382 = vst [vmem:[%s376 + $0x8] sm:%s368] %v381
                %v383 = vld [vmem:[%s375 + $0xc] sm:%s368]
                %384 = vst [vmem:[%s376 + $0xc] sm:%s368] %v383
                %v385 = vld [vmem:[%s375 + $0x10] sm:%s368]
                %386 = vst [vmem:[%s376 + $0x10] sm:%s368] %v385
                %v387 = vld [vmem:[%s375 + $0x14] sm:%s368]
                %388 = vst [vmem:[%s376 + $0x14] sm:%s368] %v387
                %v389 = vld [vmem:[%s375 + $0x90] sm:%s368]
                %390 = vst [vmem:[%s376 + $0x18] sm:%s368] %v389
                %v391 = vld [vmem:[%s375 + $0x94] sm:%s368]
                %392 = vst [vmem:[%s376 + $0x1c] sm:%s368] %v391
                %v393 = vld [vmem:[%s375 + $0x98] sm:%s368]
                %394 = vst [vmem:[%s376 + $0x20] sm:%s368] %v393
                %v395 = vld [vmem:[%s375 + $0x9c] sm:%s368]
                %396 = vst [vmem:[%s376 + $0x24] sm:%s368] %v395
                %v397 = vld [vmem:[%s375 + $0xa0] sm:%s368]
                %398 = vst [vmem:[%s376 + $0x28] sm:%s368] %v397
                %v399 = vld [vmem:[%s375 + $0xa4] sm:%s368]
                %400 = vst [vmem:[%s376 + $0x2c] sm:%s368] %v399
                %v401 = vld [vmem:[%s375 + $0x120] sm:%s368]
                %402 = vst [vmem:[%s376 + $0x30] sm:%s368] %v401
                %v403 = vld [vmem:[%s375 + $0x124] sm:%s368]
                %404 = vst [vmem:[%s376 + $0x34] sm:%s368] %v403
                %v405 = vld [vmem:[%s375 + $0x128] sm:%s368]
                %406 = vst [vmem:[%s376 + $0x38] sm:%s368] %v405
                %v407 = vld [vmem:[%s375 + $0x12c] sm:%s368]
                %408 = vst [vmem:[%s376 + $0x3c] sm:%s368] %v407
                %v409 = vld [vmem:[%s375 + $0x130] sm:%s368]
                %410 = vst [vmem:[%s376 + $0x40] sm:%s368] %v409
                %v411 = vld [vmem:[%s375 + $0x134] sm:%s368]
                %412 = vst [vmem:[%s376 + $0x44] sm:%s368] %v411
                %v413 = vld [vmem:[%s375 + $0x1b0] sm:%s368]
                %414 = vst [vmem:[%s376 + $0x48] sm:%s368] %v413
                %v415 = vld [vmem:[%s375 + $0x1b4] sm:%s368]
                %416 = vst [vmem:[%s376 + $0x4c] sm:%s368] %v415
                %v417 = vld [vmem:[%s375 + $0x1b8] sm:%s368]
                %418 = vst [vmem:[%s376 + $0x50] sm:%s368] %v417
                %v419 = vld [vmem:[%s375 + $0x1bc] sm:%s368]
                %420 = vst [vmem:[%s376 + $0x54] sm:%s368] %v419
                %v421 = vld [vmem:[%s375 + $0x1c0] sm:%s368]
                %422 = vst [vmem:[%s376 + $0x58] sm:%s368] %v421
                %v423 = vld [vmem:[%s375 + $0x1c4] sm:%s368]
                %424 = vst [vmem:[%s376 + $0x5c] sm:%s368] %v423
              $region65: #{critic_forward.1} parent=59 // loop_footer
                %s374 = sadd.s32 1, %s370
              $region66: #{critic_forward.1} parent=59 // loop_footer_branch
                %369 = sbr.rel target = $region62
              $region67: #{critic_forward.1} parent=59 // loop_exit
                _
            $region60: #{critic_forward.1} parent=51 // pred_fallthru
              _
          $region52: #{critic_forward.1} parent=47 // pred_fallthru
            _
          %493 = vnop
        $region48: #{critic_forward.1} parent=43 // pred_fallthru
          _
        // Predicated region
        $region86: #{critic_forward.1} parent=43 // pred_check
          %p494 = pneg %p101
        $region87: #{critic_forward.1} parent=43 // pred_check_branch
          %496 = sbr.rel (%p494) target = $region89
        $region88: #{critic_forward.1} parent=43 // pred_region
          %s497 = sand.u32 %s91, 1
          %s498 = sand.u32 %s91, 1
          %s499 = smul.addr %s498, 96
          %s500 = scalar_lea.vmem [#allocation5], %s499
          %s501 = sadd.s32 %s24, 1
          %s502 = smul.u32 4, %s23
          %s503 = smul.addr %s501, 6
          %s504 = smul.addr %s502, 36
          %s505 = sadd.s32 %s503, %s504
          %s506 = smul.addr %s505, 4
          %s507 = scalar_lea.vmem %s2, %s506
          // Predicated region
          $region90: #{critic_forward.1} parent=88 // pred_check
            _
          $region91: #{critic_forward.1} parent=88 // pred_check_branch
            %509 = sbr.rel (0) target = $region93
          $region92: #{critic_forward.1} parent=88 // pred_region
            // Predicated region
            $region94: #{critic_forward.1} parent=92 // pred_check
              _
            $region95: #{critic_forward.1} parent=92 // pred_check_branch
              %511 = sbr.rel target = $region97
            $region96: #{critic_forward.1} parent=92 // pred_region
              // Predicated region
              $region109: #{critic_forward.1} parent=96 // pred_check
                _
              $region110: #{critic_forward.1} parent=96 // pred_check_branch
                %573 = sbr.rel (0) target = $region112
              $region111: #{critic_forward.1} parent=96 // pred_region
                loop: start=0, step=1, limit=1
                $region113: #{critic_forward.1} parent=111 // loop_pre_header
                  _
                $region114: #{critic_forward.1} parent=111 // loop_header
                  %s575 = sphi 0, %s579
                  %p576 = scmp.ge.s32.totalorder %s575, 1
                  %s580 = sphi %s507, %s507
                  %s581 = sphi %s500, %s500
                $region115: #{critic_forward.1} parent=111 // loop_header_branch
                  %578 = sbr.rel (%p576) target = $region119
                $region116: #{critic_forward.1} parent=111 // loop_body
                  _
                $region117: #{critic_forward.1} parent=111 // loop_footer
                  %s579 = sadd.s32 1, %s575
                $region118: #{critic_forward.1} parent=111 // loop_footer_branch
                  %574 = sbr.rel target = $region114
                $region119: #{critic_forward.1} parent=111 // loop_exit
                  _
                %s583 = ssub.s32 16, 1
                loop: start=0, step=1, limit=1
                $region120: #{critic_forward.1} parent=111 // loop_pre_header
                  _
                $region121: #{critic_forward.1} parent=111 // loop_header
                  %s585 = sphi 0, %s589
                  %p586 = scmp.ge.s32.totalorder %s585, 1
                  %s590 = sphi %s507, %s507
                  %s591 = sphi %s500, %s500
                $region122: #{critic_forward.1} parent=111 // loop_header_branch
                  %588 = sbr.rel (%p586) target = $region126
                $region123: #{critic_forward.1} parent=111 // loop_body
                  %v592 = vld [vmem:[%s590] sm:%s583]
                  %593 = vst [vmem:[%s591] sm:%s583] %v592
                  %v594 = vld [vmem:[%s590 + $0x4] sm:%s583]
                  %595 = vst [vmem:[%s591 + $0x4] sm:%s583] %v594
                  %v596 = vld [vmem:[%s590 + $0x8] sm:%s583]
                  %597 = vst [vmem:[%s591 + $0x8] sm:%s583] %v596
                  %v598 = vld [vmem:[%s590 + $0xc] sm:%s583]
                  %599 = vst [vmem:[%s591 + $0xc] sm:%s583] %v598
                  %v600 = vld [vmem:[%s590 + $0x10] sm:%s583]
                  %601 = vst [vmem:[%s591 + $0x10] sm:%s583] %v600
                  %v602 = vld [vmem:[%s590 + $0x14] sm:%s583]
                  %603 = vst [vmem:[%s591 + $0x14] sm:%s583] %v602
                  %v604 = vld [vmem:[%s590 + $0x90] sm:%s583]
                  %605 = vst [vmem:[%s591 + $0x18] sm:%s583] %v604
                  %v606 = vld [vmem:[%s590 + $0x94] sm:%s583]
                  %607 = vst [vmem:[%s591 + $0x1c] sm:%s583] %v606
                  %v608 = vld [vmem:[%s590 + $0x98] sm:%s583]
                  %609 = vst [vmem:[%s591 + $0x20] sm:%s583] %v608
                  %v610 = vld [vmem:[%s590 + $0x9c] sm:%s583]
                  %611 = vst [vmem:[%s591 + $0x24] sm:%s583] %v610
                  %v612 = vld [vmem:[%s590 + $0xa0] sm:%s583]
                  %613 = vst [vmem:[%s591 + $0x28] sm:%s583] %v612
                  %v614 = vld [vmem:[%s590 + $0xa4] sm:%s583]
                  %615 = vst [vmem:[%s591 + $0x2c] sm:%s583] %v614
                  %v616 = vld [vmem:[%s590 + $0x120] sm:%s583]
                  %617 = vst [vmem:[%s591 + $0x30] sm:%s583] %v616
                  %v618 = vld [vmem:[%s590 + $0x124] sm:%s583]
                  %619 = vst [vmem:[%s591 + $0x34] sm:%s583] %v618
                  %v620 = vld [vmem:[%s590 + $0x128] sm:%s583]
                  %621 = vst [vmem:[%s591 + $0x38] sm:%s583] %v620
                  %v622 = vld [vmem:[%s590 + $0x12c] sm:%s583]
                  %623 = vst [vmem:[%s591 + $0x3c] sm:%s583] %v622
                  %v624 = vld [vmem:[%s590 + $0x130] sm:%s583]
                  %625 = vst [vmem:[%s591 + $0x40] sm:%s583] %v624
                  %v626 = vld [vmem:[%s590 + $0x134] sm:%s583]
                  %627 = vst [vmem:[%s591 + $0x44] sm:%s583] %v626
                  %v628 = vld [vmem:[%s590 + $0x1b0] sm:%s583]
                  %629 = vst [vmem:[%s591 + $0x48] sm:%s583] %v628
                  %v630 = vld [vmem:[%s590 + $0x1b4] sm:%s583]
                  %631 = vst [vmem:[%s591 + $0x4c] sm:%s583] %v630
                  %v632 = vld [vmem:[%s590 + $0x1b8] sm:%s583]
                  %633 = vst [vmem:[%s591 + $0x50] sm:%s583] %v632
                  %v634 = vld [vmem:[%s590 + $0x1bc] sm:%s583]
                  %635 = vst [vmem:[%s591 + $0x54] sm:%s583] %v634
                  %v636 = vld [vmem:[%s590 + $0x1c0] sm:%s583]
                  %637 = vst [vmem:[%s591 + $0x58] sm:%s583] %v636
                  %v638 = vld [vmem:[%s590 + $0x1c4] sm:%s583]
                  %639 = vst [vmem:[%s591 + $0x5c] sm:%s583] %v638
                $region124: #{critic_forward.1} parent=111 // loop_footer
                  %s589 = sadd.s32 1, %s585
                $region125: #{critic_forward.1} parent=111 // loop_footer_branch
                  %584 = sbr.rel target = $region121
                $region126: #{critic_forward.1} parent=111 // loop_exit
                  _
              $region112: #{critic_forward.1} parent=96 // pred_fallthru
                _
            $region97: #{critic_forward.1} parent=92 // pred_fallthru
              _
            // Predicated region
            $region98: #{critic_forward.1} parent=92 // pred_check
              _
            $region99: #{critic_forward.1} parent=92 // pred_check_branch
              %513 = sbr.rel (0) target = $region101
            $region100: #{critic_forward.1} parent=92 // pred_region
              %s515 = ssub.s32 16, 1
              loop: start=0, step=1, limit=1
              $region102: #{critic_forward.1} parent=100 // loop_pre_header
                _
              $region103: #{critic_forward.1} parent=100 // loop_header
                %s517 = sphi 0, %s521
                %p518 = scmp.ge.s32.totalorder %s517, 1
                %s522 = sphi %s507, %s507
                %s523 = sphi %s500, %s500
              $region104: #{critic_forward.1} parent=100 // loop_header_branch
                %520 = sbr.rel (%p518) target = $region108
              $region105: #{critic_forward.1} parent=100 // loop_body
                %v524 = vld [vmem:[%s522] sm:%s515]
                %525 = vst [vmem:[%s523] sm:%s515] %v524
                %v526 = vld [vmem:[%s522 + $0x4] sm:%s515]
                %527 = vst [vmem:[%s523 + $0x4] sm:%s515] %v526
                %v528 = vld [vmem:[%s522 + $0x8] sm:%s515]
                %529 = vst [vmem:[%s523 + $0x8] sm:%s515] %v528
                %v530 = vld [vmem:[%s522 + $0xc] sm:%s515]
                %531 = vst [vmem:[%s523 + $0xc] sm:%s515] %v530
                %v532 = vld [vmem:[%s522 + $0x10] sm:%s515]
                %533 = vst [vmem:[%s523 + $0x10] sm:%s515] %v532
                %v534 = vld [vmem:[%s522 + $0x14] sm:%s515]
                %535 = vst [vmem:[%s523 + $0x14] sm:%s515] %v534
                %v536 = vld [vmem:[%s522 + $0x90] sm:%s515]
                %537 = vst [vmem:[%s523 + $0x18] sm:%s515] %v536
                %v538 = vld [vmem:[%s522 + $0x94] sm:%s515]
                %539 = vst [vmem:[%s523 + $0x1c] sm:%s515] %v538
                %v540 = vld [vmem:[%s522 + $0x98] sm:%s515]
                %541 = vst [vmem:[%s523 + $0x20] sm:%s515] %v540
                %v542 = vld [vmem:[%s522 + $0x9c] sm:%s515]
                %543 = vst [vmem:[%s523 + $0x24] sm:%s515] %v542
                %v544 = vld [vmem:[%s522 + $0xa0] sm:%s515]
                %545 = vst [vmem:[%s523 + $0x28] sm:%s515] %v544
                %v546 = vld [vmem:[%s522 + $0xa4] sm:%s515]
                %547 = vst [vmem:[%s523 + $0x2c] sm:%s515] %v546
                %v548 = vld [vmem:[%s522 + $0x120] sm:%s515]
                %549 = vst [vmem:[%s523 + $0x30] sm:%s515] %v548
                %v550 = vld [vmem:[%s522 + $0x124] sm:%s515]
                %551 = vst [vmem:[%s523 + $0x34] sm:%s515] %v550
                %v552 = vld [vmem:[%s522 + $0x128] sm:%s515]
                %553 = vst [vmem:[%s523 + $0x38] sm:%s515] %v552
                %v554 = vld [vmem:[%s522 + $0x12c] sm:%s515]
                %555 = vst [vmem:[%s523 + $0x3c] sm:%s515] %v554
                %v556 = vld [vmem:[%s522 + $0x130] sm:%s515]
                %557 = vst [vmem:[%s523 + $0x40] sm:%s515] %v556
                %v558 = vld [vmem:[%s522 + $0x134] sm:%s515]
                %559 = vst [vmem:[%s523 + $0x44] sm:%s515] %v558
                %v560 = vld [vmem:[%s522 + $0x1b0] sm:%s515]
                %561 = vst [vmem:[%s523 + $0x48] sm:%s515] %v560
                %v562 = vld [vmem:[%s522 + $0x1b4] sm:%s515]
                %563 = vst [vmem:[%s523 + $0x4c] sm:%s515] %v562
                %v564 = vld [vmem:[%s522 + $0x1b8] sm:%s515]
                %565 = vst [vmem:[%s523 + $0x50] sm:%s515] %v564
                %v566 = vld [vmem:[%s522 + $0x1bc] sm:%s515]
                %567 = vst [vmem:[%s523 + $0x54] sm:%s515] %v566
                %v568 = vld [vmem:[%s522 + $0x1c0] sm:%s515]
                %569 = vst [vmem:[%s523 + $0x58] sm:%s515] %v568
                %v570 = vld [vmem:[%s522 + $0x1c4] sm:%s515]
                %571 = vst [vmem:[%s523 + $0x5c] sm:%s515] %v570
              $region106: #{critic_forward.1} parent=100 // loop_footer
                %s521 = sadd.s32 1, %s517
              $region107: #{critic_forward.1} parent=100 // loop_footer_branch
                %516 = sbr.rel target = $region103
              $region108: #{critic_forward.1} parent=100 // loop_exit
                _
            $region101: #{critic_forward.1} parent=92 // pred_fallthru
              _
          $region93: #{critic_forward.1} parent=88 // pred_fallthru
            _
          %640 = vnop
        $region89: #{critic_forward.1} parent=43 // pred_fallthru
          _
        // Predicated region
        $region127: #{critic_forward.1} parent=43 // pred_check
          %p641 = pneg %p131
        $region128: #{critic_forward.1} parent=43 // pred_check_branch
          %643 = sbr.rel (%p641) target = $region130
        $region129: #{critic_forward.1} parent=43 // pred_region
          %s644 = sand.u32 %s121, 1
          %s645 = sand.u32 %s121, 1
          %s646 = smul.addr %s645, 96
          %s647 = scalar_lea.vmem [#allocation6], %s646
          %s648 = sadd.s32 %s24, 2
          %s649 = smul.u32 4, %s23
          %s650 = smul.addr %s648, 6
          %s651 = smul.addr %s649, 36
          %s652 = sadd.s32 %s650, %s651
          %s653 = smul.addr %s652, 4
          %s654 = scalar_lea.vmem %s3, %s653
          // Predicated region
          $region131: #{critic_forward.1} parent=129 // pred_check
            _
          $region132: #{critic_forward.1} parent=129 // pred_check_branch
            %656 = sbr.rel (0) target = $region134
          $region133: #{critic_forward.1} parent=129 // pred_region
            // Predicated region
            $region135: #{critic_forward.1} parent=133 // pred_check
              _
            $region136: #{critic_forward.1} parent=133 // pred_check_branch
              %658 = sbr.rel target = $region138
            $region137: #{critic_forward.1} parent=133 // pred_region
              // Predicated region
              $region150: #{critic_forward.1} parent=137 // pred_check
                _
              $region151: #{critic_forward.1} parent=137 // pred_check_branch
                %720 = sbr.rel (0) target = $region153
              $region152: #{critic_forward.1} parent=137 // pred_region
                loop: start=0, step=1, limit=1
                $region154: #{critic_forward.1} parent=152 // loop_pre_header
                  _
                $region155: #{critic_forward.1} parent=152 // loop_header
                  %s722 = sphi 0, %s726
                  %p723 = scmp.ge.s32.totalorder %s722, 1
                  %s727 = sphi %s654, %s654
                  %s728 = sphi %s647, %s647
                $region156: #{critic_forward.1} parent=152 // loop_header_branch
                  %725 = sbr.rel (%p723) target = $region160
                $region157: #{critic_forward.1} parent=152 // loop_body
                  _
                $region158: #{critic_forward.1} parent=152 // loop_footer
                  %s726 = sadd.s32 1, %s722
                $region159: #{critic_forward.1} parent=152 // loop_footer_branch
                  %721 = sbr.rel target = $region155
                $region160: #{critic_forward.1} parent=152 // loop_exit
                  _
                %s730 = ssub.s32 16, 1
                loop: start=0, step=1, limit=1
                $region161: #{critic_forward.1} parent=152 // loop_pre_header
                  _
                $region162: #{critic_forward.1} parent=152 // loop_header
                  %s732 = sphi 0, %s736
                  %p733 = scmp.ge.s32.totalorder %s732, 1
                  %s737 = sphi %s654, %s654
                  %s738 = sphi %s647, %s647
                $region163: #{critic_forward.1} parent=152 // loop_header_branch
                  %735 = sbr.rel (%p733) target = $region167
                $region164: #{critic_forward.1} parent=152 // loop_body
                  %v739 = vld [vmem:[%s737] sm:%s730]
                  %740 = vst [vmem:[%s738] sm:%s730] %v739
                  %v741 = vld [vmem:[%s737 + $0x4] sm:%s730]
                  %742 = vst [vmem:[%s738 + $0x4] sm:%s730] %v741
                  %v743 = vld [vmem:[%s737 + $0x8] sm:%s730]
                  %744 = vst [vmem:[%s738 + $0x8] sm:%s730] %v743
                  %v745 = vld [vmem:[%s737 + $0xc] sm:%s730]
                  %746 = vst [vmem:[%s738 + $0xc] sm:%s730] %v745
                  %v747 = vld [vmem:[%s737 + $0x10] sm:%s730]
                  %748 = vst [vmem:[%s738 + $0x10] sm:%s730] %v747
                  %v749 = vld [vmem:[%s737 + $0x14] sm:%s730]
                  %750 = vst [vmem:[%s738 + $0x14] sm:%s730] %v749
                  %v751 = vld [vmem:[%s737 + $0x90] sm:%s730]
                  %752 = vst [vmem:[%s738 + $0x18] sm:%s730] %v751
                  %v753 = vld [vmem:[%s737 + $0x94] sm:%s730]
                  %754 = vst [vmem:[%s738 + $0x1c] sm:%s730] %v753
                  %v755 = vld [vmem:[%s737 + $0x98] sm:%s730]
                  %756 = vst [vmem:[%s738 + $0x20] sm:%s730] %v755
                  %v757 = vld [vmem:[%s737 + $0x9c] sm:%s730]
                  %758 = vst [vmem:[%s738 + $0x24] sm:%s730] %v757
                  %v759 = vld [vmem:[%s737 + $0xa0] sm:%s730]
                  %760 = vst [vmem:[%s738 + $0x28] sm:%s730] %v759
                  %v761 = vld [vmem:[%s737 + $0xa4] sm:%s730]
                  %762 = vst [vmem:[%s738 + $0x2c] sm:%s730] %v761
                  %v763 = vld [vmem:[%s737 + $0x120] sm:%s730]
                  %764 = vst [vmem:[%s738 + $0x30] sm:%s730] %v763
                  %v765 = vld [vmem:[%s737 + $0x124] sm:%s730]
                  %766 = vst [vmem:[%s738 + $0x34] sm:%s730] %v765
                  %v767 = vld [vmem:[%s737 + $0x128] sm:%s730]
                  %768 = vst [vmem:[%s738 + $0x38] sm:%s730] %v767
                  %v769 = vld [vmem:[%s737 + $0x12c] sm:%s730]
                  %770 = vst [vmem:[%s738 + $0x3c] sm:%s730] %v769
                  %v771 = vld [vmem:[%s737 + $0x130] sm:%s730]
                  %772 = vst [vmem:[%s738 + $0x40] sm:%s730] %v771
                  %v773 = vld [vmem:[%s737 + $0x134] sm:%s730]
                  %774 = vst [vmem:[%s738 + $0x44] sm:%s730] %v773
                  %v775 = vld [vmem:[%s737 + $0x1b0] sm:%s730]
                  %776 = vst [vmem:[%s738 + $0x48] sm:%s730] %v775
                  %v777 = vld [vmem:[%s737 + $0x1b4] sm:%s730]
                  %778 = vst [vmem:[%s738 + $0x4c] sm:%s730] %v777
                  %v779 = vld [vmem:[%s737 + $0x1b8] sm:%s730]
                  %780 = vst [vmem:[%s738 + $0x50] sm:%s730] %v779
                  %v781 = vld [vmem:[%s737 + $0x1bc] sm:%s730]
                  %782 = vst [vmem:[%s738 + $0x54] sm:%s730] %v781
                  %v783 = vld [vmem:[%s737 + $0x1c0] sm:%s730]
                  %784 = vst [vmem:[%s738 + $0x58] sm:%s730] %v783
                  %v785 = vld [vmem:[%s737 + $0x1c4] sm:%s730]
                  %786 = vst [vmem:[%s738 + $0x5c] sm:%s730] %v785
                $region165: #{critic_forward.1} parent=152 // loop_footer
                  %s736 = sadd.s32 1, %s732
                $region166: #{critic_forward.1} parent=152 // loop_footer_branch
                  %731 = sbr.rel target = $region162
                $region167: #{critic_forward.1} parent=152 // loop_exit
                  _
              $region153: #{critic_forward.1} parent=137 // pred_fallthru
                _
            $region138: #{critic_forward.1} parent=133 // pred_fallthru
              _
            // Predicated region
            $region139: #{critic_forward.1} parent=133 // pred_check
              _
            $region140: #{critic_forward.1} parent=133 // pred_check_branch
              %660 = sbr.rel (0) target = $region142
            $region141: #{critic_forward.1} parent=133 // pred_region
              %s662 = ssub.s32 16, 1
              loop: start=0, step=1, limit=1
              $region143: #{critic_forward.1} parent=141 // loop_pre_header
                _
              $region144: #{critic_forward.1} parent=141 // loop_header
                %s664 = sphi 0, %s668
                %p665 = scmp.ge.s32.totalorder %s664, 1
                %s669 = sphi %s654, %s654
                %s670 = sphi %s647, %s647
              $region145: #{critic_forward.1} parent=141 // loop_header_branch
                %667 = sbr.rel (%p665) target = $region149
              $region146: #{critic_forward.1} parent=141 // loop_body
                %v671 = vld [vmem:[%s669] sm:%s662]
                %672 = vst [vmem:[%s670] sm:%s662] %v671
                %v673 = vld [vmem:[%s669 + $0x4] sm:%s662]
                %674 = vst [vmem:[%s670 + $0x4] sm:%s662] %v673
                %v675 = vld [vmem:[%s669 + $0x8] sm:%s662]
                %676 = vst [vmem:[%s670 + $0x8] sm:%s662] %v675
                %v677 = vld [vmem:[%s669 + $0xc] sm:%s662]
                %678 = vst [vmem:[%s670 + $0xc] sm:%s662] %v677
                %v679 = vld [vmem:[%s669 + $0x10] sm:%s662]
                %680 = vst [vmem:[%s670 + $0x10] sm:%s662] %v679
                %v681 = vld [vmem:[%s669 + $0x14] sm:%s662]
                %682 = vst [vmem:[%s670 + $0x14] sm:%s662] %v681
                %v683 = vld [vmem:[%s669 + $0x90] sm:%s662]
                %684 = vst [vmem:[%s670 + $0x18] sm:%s662] %v683
                %v685 = vld [vmem:[%s669 + $0x94] sm:%s662]
                %686 = vst [vmem:[%s670 + $0x1c] sm:%s662] %v685
                %v687 = vld [vmem:[%s669 + $0x98] sm:%s662]
                %688 = vst [vmem:[%s670 + $0x20] sm:%s662] %v687
                %v689 = vld [vmem:[%s669 + $0x9c] sm:%s662]
                %690 = vst [vmem:[%s670 + $0x24] sm:%s662] %v689
                %v691 = vld [vmem:[%s669 + $0xa0] sm:%s662]
                %692 = vst [vmem:[%s670 + $0x28] sm:%s662] %v691
                %v693 = vld [vmem:[%s669 + $0xa4] sm:%s662]
                %694 = vst [vmem:[%s670 + $0x2c] sm:%s662] %v693
                %v695 = vld [vmem:[%s669 + $0x120] sm:%s662]
                %696 = vst [vmem:[%s670 + $0x30] sm:%s662] %v695
                %v697 = vld [vmem:[%s669 + $0x124] sm:%s662]
                %698 = vst [vmem:[%s670 + $0x34] sm:%s662] %v697
                %v699 = vld [vmem:[%s669 + $0x128] sm:%s662]
                %700 = vst [vmem:[%s670 + $0x38] sm:%s662] %v699
                %v701 = vld [vmem:[%s669 + $0x12c] sm:%s662]
                %702 = vst [vmem:[%s670 + $0x3c] sm:%s662] %v701
                %v703 = vld [vmem:[%s669 + $0x130] sm:%s662]
                %704 = vst [vmem:[%s670 + $0x40] sm:%s662] %v703
                %v705 = vld [vmem:[%s669 + $0x134] sm:%s662]
                %706 = vst [vmem:[%s670 + $0x44] sm:%s662] %v705
                %v707 = vld [vmem:[%s669 + $0x1b0] sm:%s662]
                %708 = vst [vmem:[%s670 + $0x48] sm:%s662] %v707
                %v709 = vld [vmem:[%s669 + $0x1b4] sm:%s662]
                %710 = vst [vmem:[%s670 + $0x4c] sm:%s662] %v709
                %v711 = vld [vmem:[%s669 + $0x1b8] sm:%s662]
                %712 = vst [vmem:[%s670 + $0x50] sm:%s662] %v711
                %v713 = vld [vmem:[%s669 + $0x1bc] sm:%s662]
                %714 = vst [vmem:[%s670 + $0x54] sm:%s662] %v713
                %v715 = vld [vmem:[%s669 + $0x1c0] sm:%s662]
                %716 = vst [vmem:[%s670 + $0x58] sm:%s662] %v715
                %v717 = vld [vmem:[%s669 + $0x1c4] sm:%s662]
                %718 = vst [vmem:[%s670 + $0x5c] sm:%s662] %v717
              $region147: #{critic_forward.1} parent=141 // loop_footer
                %s668 = sadd.s32 1, %s664
              $region148: #{critic_forward.1} parent=141 // loop_footer_branch
                %663 = sbr.rel target = $region144
              $region149: #{critic_forward.1} parent=141 // loop_exit
                _
            $region142: #{critic_forward.1} parent=133 // pred_fallthru
              _
          $region134: #{critic_forward.1} parent=129 // pred_fallthru
            _
          %787 = vnop
        $region130: #{critic_forward.1} parent=43 // pred_fallthru
          _
      $region44: #{critic_forward.1} parent=5 // pred_fallthru
        _
      %p788 = scmp.le.s32.totalorder 1, %s16
      %p789 = scmp.lt.s32.totalorder %s16, 5
      %p790 = pnand %p788, %p789
      %p791 = pneg %p790
      // Predicated region
      $region168: #{critic_forward.1} parent=5 // pred_check
        _
      $region169: #{critic_forward.1} parent=5 // pred_check_branch
        %793 = sbr.rel (%p790) target = $region171
      $region170: #{critic_forward.1} parent=5 // pred_region
        %s794 = ssub.s32 %s16, 1
        %s795 = sand.u32 %s64, 1
        %s796 = sand.u32 %s64, 1
        %s797 = smul.addr %s796, 96
        %s798 = scalar_lea.vmem [#allocation4], %s797
        // Predicated region
        $region172: #{critic_forward.1} parent=170 // pred_check
          %p799 = pneg %p77
        $region173: #{critic_forward.1} parent=170 // pred_check_branch
          %801 = sbr.rel (%p799) target = $region175
        $region174: #{critic_forward.1} parent=170 // pred_region
          _
        $region175: #{critic_forward.1} parent=170 // pred_fallthru
          _
        %s802 = sand.u32 %s94, 1
        %s803 = sand.u32 %s94, 1
        %s804 = smul.addr %s803, 96
        %s805 = scalar_lea.vmem [#allocation5], %s804
        // Predicated region
        $region176: #{critic_forward.1} parent=170 // pred_check
          %p806 = pneg %p107
        $region177: #{critic_forward.1} parent=170 // pred_check_branch
          %808 = sbr.rel (%p806) target = $region179
        $region178: #{critic_forward.1} parent=170 // pred_region
          _
        $region179: #{critic_forward.1} parent=170 // pred_fallthru
          _
        %s809 = sand.u32 %s124, 1
        %s810 = sand.u32 %s124, 1
        %s811 = smul.addr %s810, 96
        %s812 = scalar_lea.vmem [#allocation6], %s811
        // Predicated region
        $region180: #{critic_forward.1} parent=170 // pred_check
          %p813 = pneg %p137
        $region181: #{critic_forward.1} parent=170 // pred_check_branch
          %815 = sbr.rel (%p813) target = $region183
        $region182: #{critic_forward.1} parent=170 // pred_region
          _
        $region183: #{critic_forward.1} parent=170 // pred_fallthru
          _
        %p816 = pneg %p49
        %p817 = pneg %p46
        %s818 = sand.u32 %s64, 1
        %s819 = sand.u32 %s64, 1
        %s820 = smul.addr %s819, 96
        %s821 = scalar_lea.vmem [#allocation4], %s820
        %p822 = pneg %p77
        %p823 = pneg %p74
        %s824 = sand.u32 %s94, 1
        %s825 = sand.u32 %s94, 1
        %s826 = smul.addr %s825, 96
        %s827 = scalar_lea.vmem [#allocation5], %s826
        %p828 = pneg %p107
        %p829 = pneg %p104
        %s830 = sand.u32 %s124, 1
        %s831 = sand.u32 %s124, 1
        %s832 = smul.addr %s831, 96
        %s833 = scalar_lea.vmem [#allocation6], %s832
        %p834 = pneg %p137
        %p835 = pneg %p134
        %p836 = pneg %p158
        %p837 = pneg %p155
        %p838 = pneg %p179
        %p839 = pneg %p176
        %p840 = pneg %p200
        %p841 = pneg %p197
        %p842 = pneg %p221
        %p843 = pneg %p218
        %p844 = scmp.lt.s32.totalorder %s25, 0
        %s845 = scalar_select %p844, %s25, 0
        %s846 = smul.addr %s845, 2
        %s847 = smul.addr %s846, 4
        %s848 = scalar_lea.vmem %s8, %s847
        %p849 = pneg %p247
        %p850 = pneg %p244
        %p851 = scmp.lt.s32.totalorder %s25, 0
        %s852 = scalar_select %p851, %s25, 0
        %s853 = smul.addr %s852, 4
        %s854 = scalar_lea.vmem %s9, %s853
        %p855 = pneg %p273
        %p856 = pneg %p270
        %p857 = pneg %p299
        %p858 = pneg %p296
        %p859 = scmp.lt.s32.totalorder %s25, 0
        %s860 = scalar_select %p859, %s25, 0
        %s861 = smul.addr %s860, 4
        %s862 = scalar_lea.vmem %s10, %s861
        %s863 = smul.u32 4, %s25
        %s864 = sadd.s32 %s26, 1
        %s865 = smul.u32 4, %s25
        %s866 = sadd.s32 %s26, 2
        %s867 = smul.u32 4, %s25
        %p868 = scmp.lt.s32.totalorder %s25, 0
        %s869 = scalar_select %p868, %s25, 0
        %s870 = smul.addr %s869, 2
        %s871 = smul.addr %s870, 4
        %s872 = scalar_lea.vmem %s8, %s871
        %p873 = scmp.lt.s32.totalorder %s25, 0
        %s874 = scalar_select %p873, %s25, 0
        %s875 = smul.addr %s874, 4
        %s876 = scalar_lea.vmem %s9, %s875
        %p877 = scmp.lt.s32.totalorder %s25, 0
        %s878 = scalar_select %p877, %s25, 0
        %s879 = smul.addr %s878, 4
        %s880 = scalar_lea.vmem %s10, %s879
        %p882 = scmp.eq.s32.totalorder %s26, 0
        // Predicated region
        $region184: #{critic_forward.1} parent=170 // pred_check
          %p883 = pneg %p882
        $region185: #{critic_forward.1} parent=170 // pred_check_branch
          %885 = sbr.rel (%p883) target = $region187
        $region186: #{critic_forward.1} parent=170 // pred_region
          %vm886 = vcmask 125952
          %887 = vst.msk [vmem:[#allocation2] sm:$0xf] %vm886, 0.0
        $region187: #{critic_forward.1} parent=170 // pred_fallthru
          _
        %v888 = vld [vmem:[%s798] sm:$0xf]
        %v889 = vld [vmem:[%s798 + $0x4] sm:$0xf]
        %v890 = vld [vmem:[%s798 + $0x8] sm:$0xf]
        %v891 = vld [vmem:[%s798 + $0xc] sm:$0xf]
        %v892 = vld [vmem:[%s798 + $0x18] sm:$0xf]
        %v893 = vld [vmem:[%s798 + $0x1c] sm:$0xf]
        %v894 = vld [vmem:[%s798 + $0x20] sm:$0xf]
        %v895 = vld [vmem:[%s798 + $0x24] sm:$0xf]
        %v896 = vld [vmem:[%s798 + $0x30] sm:$0xf]
        %v897 = vld [vmem:[%s798 + $0x34] sm:$0xf]
        %v898 = vld [vmem:[%s798 + $0x38] sm:$0xf]
        %v899 = vld [vmem:[%s798 + $0x3c] sm:$0xf]
        %v900 = vld [vmem:[%s798 + $0x48] sm:$0xf]
        %v901 = vld [vmem:[%s798 + $0x4c] sm:$0xf]
        %v902 = vld [vmem:[%s798 + $0x50] sm:$0xf]
        %v903 = vld [vmem:[%s798 + $0x54] sm:$0xf]
        %vm904 = vcmask 27648
        %905 = vst.msk [vmem:[#allocation3] sm:$0xf] %vm904, %v888
        %906 = vst.msk [vmem:[#allocation3 + $0x4] sm:$0xf] %vm904, %v889
        %907 = vst.msk [vmem:[#allocation3 + $0x8] sm:$0xf] %vm904, %v890
        %908 = vst.msk [vmem:[#allocation3 + $0xc] sm:$0xf] %vm904, %v891
        %909 = vst.msk [vmem:[#allocation3 + $0x10] sm:$0xf] %vm904, %v892
        %910 = vst.msk [vmem:[#allocation3 + $0x14] sm:$0xf] %vm904, %v893
        %911 = vst.msk [vmem:[#allocation3 + $0x18] sm:$0xf] %vm904, %v894
        %912 = vst.msk [vmem:[#allocation3 + $0x1c] sm:$0xf] %vm904, %v895
        %913 = vst.msk [vmem:[#allocation3 + $0x20] sm:$0xf] %vm904, %v896
        %914 = vst.msk [vmem:[#allocation3 + $0x24] sm:$0xf] %vm904, %v897
        %915 = vst.msk [vmem:[#allocation3 + $0x28] sm:$0xf] %vm904, %v898
        %916 = vst.msk [vmem:[#allocation3 + $0x2c] sm:$0xf] %vm904, %v899
        %917 = vst.msk [vmem:[#allocation3 + $0x30] sm:$0xf] %vm904, %v900
        %918 = vst.msk [vmem:[#allocation3 + $0x34] sm:$0xf] %vm904, %v901
        %919 = vst.msk [vmem:[#allocation3 + $0x38] sm:$0xf] %vm904, %v902
        %920 = vst.msk [vmem:[#allocation3 + $0x3c] sm:$0xf] %vm904, %v903
        %v921 = vld [vmem:[%s798] sm:$0xf]
        %v922 = vld [vmem:[%s798 + $0x4] sm:$0xf]
        %v923 = vld [vmem:[%s798 + $0x8] sm:$0xf]
        %v924 = vld [vmem:[%s798 + $0xc] sm:$0xf]
        %v925 = vld [vmem:[%s798 + $0x10] sm:$0x1]
        %v926 = vld [vmem:[%s798 + $0x18] sm:$0xf]
        %v927 = vld [vmem:[%s798 + $0x1c] sm:$0xf]
        %v928 = vld [vmem:[%s798 + $0x20] sm:$0xf]
        %v929 = vld [vmem:[%s798 + $0x24] sm:$0xf]
        %v930 = vld [vmem:[%s798 + $0x28] sm:$0x1]
        %v931 = vld [vmem:[%s798 + $0x30] sm:$0xf]
        %v932 = vld [vmem:[%s798 + $0x34] sm:$0xf]
        %v933 = vld [vmem:[%s798 + $0x38] sm:$0xf]
        %v934 = vld [vmem:[%s798 + $0x3c] sm:$0xf]
        %v935 = vld [vmem:[%s798 + $0x40] sm:$0x1]
        %v936 = vld [vmem:[%s798 + $0x48] sm:$0xf]
        %v937 = vld [vmem:[%s798 + $0x4c] sm:$0xf]
        %v938 = vld [vmem:[%s798 + $0x50] sm:$0xf]
        %v939 = vld [vmem:[%s798 + $0x54] sm:$0xf]
        %v940 = vld [vmem:[%s798 + $0x58] sm:$0x1]
        %vm941 = vsmask.f32 3328
        %vm942 = vsmask.f32 7440
        %vm943 = vmor %vm941, %vm942
        %v945 = vshrl.u32 %v921, 16
        %v947 = vrot.slane %v945, 4
        %v948 = vshll.u32 %v921, 16
        %v950 = vrot.slane %v948, 5
        %v951 = vor.u32 %v947, %v950
        %v952 = vrot.slane %v951, 4
        %v954 = vshll.u32 %v922, 16
        %v956 = vrot.slane %v954, 5
        %v957 = vsel %vm943, %v952, %v956
        %v958 = vshrl.u32 %v922, 16
        %v960 = vrot.slane %v958, 4
        %v961 = vor.u32 %v960, %v956
        %v962 = vrot.slane %v961, 4
        %v964 = vshll.u32 %v923, 16
        %v966 = vrot.slane %v964, 5
        %v967 = vsel %vm943, %v962, %v966
        %v968 = vshrl.u32 %v923, 16
        %v970 = vrot.slane %v968, 4
        %v971 = vor.u32 %v970, %v966
        %v972 = vrot.slane %v971, 4
        %v974 = vshll.u32 %v924, 16
        %v976 = vrot.slane %v974, 5
        %v977 = vsel %vm943, %v972, %v976
        %v978 = vshrl.u32 %v924, 16
        %v980 = vrot.slane %v978, 4
        %v981 = vor.u32 %v980, %v976
        %v982 = vrot.slane %v981, 4
        %v984 = vshll.u32 %v925, 16
        %v986 = vrot.slane %v984, 5
        %v987 = vsel %vm943, %v982, %v986
        %v989 = vshrl.u32 %v926, 16
        %v991 = vrot.slane %v989, 4
        %v992 = vshll.u32 %v926, 16
        %v994 = vrot.slane %v992, 5
        %v995 = vor.u32 %v991, %v994
        %v996 = vrot.slane %v995, 4
        %v998 = vshll.u32 %v927, 16
        %v1000 = vrot.slane %v998, 5
        %v1001 = vsel %vm943, %v996, %v1000
        %v1002 = vshrl.u32 %v927, 16
        %v1004 = vrot.slane %v1002, 4
        %v1005 = vor.u32 %v1004, %v1000
        %v1006 = vrot.slane %v1005, 4
        %v1008 = vshll.u32 %v928, 16
        %v1010 = vrot.slane %v1008, 5
        %v1011 = vsel %vm943, %v1006, %v1010
        %v1012 = vshrl.u32 %v928, 16
        %v1014 = vrot.slane %v1012, 4
        %v1015 = vor.u32 %v1014, %v1010
        %v1016 = vrot.slane %v1015, 4
        %v1018 = vshll.u32 %v929, 16
        %v1020 = vrot.slane %v1018, 5
        %v1021 = vsel %vm943, %v1016, %v1020
        %v1022 = vshrl.u32 %v929, 16
        %v1024 = vrot.slane %v1022, 4
        %v1025 = vor.u32 %v1024, %v1020
        %v1026 = vrot.slane %v1025, 4
        %v1028 = vshll.u32 %v930, 16
        %v1030 = vrot.slane %v1028, 5
        %v1031 = vsel %vm943, %v1026, %v1030
        %v1033 = vshrl.u32 %v931, 16
        %v1035 = vrot.slane %v1033, 4
        %v1036 = vshll.u32 %v931, 16
        %v1038 = vrot.slane %v1036, 5
        %v1039 = vor.u32 %v1035, %v1038
        %v1040 = vrot.slane %v1039, 4
        %v1042 = vshll.u32 %v932, 16
        %v1044 = vrot.slane %v1042, 5
        %v1045 = vsel %vm943, %v1040, %v1044
        %v1046 = vshrl.u32 %v932, 16
        %v1048 = vrot.slane %v1046, 4
        %v1049 = vor.u32 %v1048, %v1044
        %v1050 = vrot.slane %v1049, 4
        %v1052 = vshll.u32 %v933, 16
        %v1054 = vrot.slane %v1052, 5
        %v1055 = vsel %vm943, %v1050, %v1054
        %v1056 = vshrl.u32 %v933, 16
        %v1058 = vrot.slane %v1056, 4
        %v1059 = vor.u32 %v1058, %v1054
        %v1060 = vrot.slane %v1059, 4
        %v1062 = vshll.u32 %v934, 16
        %v1064 = vrot.slane %v1062, 5
        %v1065 = vsel %vm943, %v1060, %v1064
        %v1066 = vshrl.u32 %v934, 16
        %v1068 = vrot.slane %v1066, 4
        %v1069 = vor.u32 %v1068, %v1064
        %v1070 = vrot.slane %v1069, 4
        %v1072 = vshll.u32 %v935, 16
        %v1074 = vrot.slane %v1072, 5
        %v1075 = vsel %vm943, %v1070, %v1074
        %v1077 = vshrl.u32 %v936, 16
        %v1079 = vrot.slane %v1077, 4
        %v1080 = vshll.u32 %v936, 16
        %v1082 = vrot.slane %v1080, 5
        %v1083 = vor.u32 %v1079, %v1082
        %v1084 = vrot.slane %v1083, 4
        %v1086 = vshll.u32 %v937, 16
        %v1088 = vrot.slane %v1086, 5
        %v1089 = vsel %vm943, %v1084, %v1088
        %v1090 = vshrl.u32 %v937, 16
        %v1092 = vrot.slane %v1090, 4
        %v1093 = vor.u32 %v1092, %v1088
        %v1094 = vrot.slane %v1093, 4
        %v1096 = vshll.u32 %v938, 16
        %v1098 = vrot.slane %v1096, 5
        %v1099 = vsel %vm943, %v1094, %v1098
        %v1100 = vshrl.u32 %v938, 16
        %v1102 = vrot.slane %v1100, 4
        %v1103 = vor.u32 %v1102, %v1098
        %v1104 = vrot.slane %v1103, 4
        %v1106 = vshll.u32 %v939, 16
        %v1108 = vrot.slane %v1106, 5
        %v1109 = vsel %vm943, %v1104, %v1108
        %v1110 = vshrl.u32 %v939, 16
        %v1112 = vrot.slane %v1110, 4
        %v1113 = vor.u32 %v1112, %v1108
        %v1114 = vrot.slane %v1113, 4
        %v1116 = vshll.u32 %v940, 16
        %v1118 = vrot.slane %v1116, 5
        %v1119 = vsel %vm943, %v1114, %v1118
        %1120 = vrot.lane.b32.xlu0 %v957, 4
        %v1121 = vpop.permute.xlu0 %1120
        %1122 = vrot.lane.b32.xlu0 %v967, 4
        %v1123 = vpop.permute.xlu0 %1122
        %1124 = vrot.lane.b32.xlu0 %v977, 4
        %v1125 = vpop.permute.xlu0 %1124
        %1126 = vrot.lane.b32.xlu0 %v987, 4
        %v1127 = vpop.permute.xlu0 %1126
        %1128 = vrot.lane.b32.xlu0 %v1001, 4
        %v1129 = vpop.permute.xlu0 %1128
        %1130 = vrot.lane.b32.xlu0 %v1011, 4
        %v1131 = vpop.permute.xlu0 %1130
        %1132 = vrot.lane.b32.xlu0 %v1021, 4
        %v1133 = vpop.permute.xlu0 %1132
        %1134 = vrot.lane.b32.xlu0 %v1031, 4
        %v1135 = vpop.permute.xlu0 %1134
        %1136 = vrot.lane.b32.xlu0 %v1045, 4
        %v1137 = vpop.permute.xlu0 %1136
        %1138 = vrot.lane.b32.xlu0 %v1055, 4
        %v1139 = vpop.permute.xlu0 %1138
        %1140 = vrot.lane.b32.xlu0 %v1065, 4
        %v1141 = vpop.permute.xlu0 %1140
        %1142 = vrot.lane.b32.xlu0 %v1075, 4
        %v1143 = vpop.permute.xlu0 %1142
        %1144 = vrot.lane.b32.xlu0 %v1089, 4
        %v1145 = vpop.permute.xlu0 %1144
        %1146 = vrot.lane.b32.xlu0 %v1099, 4
        %v1147 = vpop.permute.xlu0 %1146
        %1148 = vrot.lane.b32.xlu0 %v1109, 4
        %v1149 = vpop.permute.xlu0 %1148
        %1150 = vrot.lane.b32.xlu0 %v1119, 4
        %v1151 = vpop.permute.xlu0 %1150
        %vm1168 = vcmask 60448
        %1169 = vst.msk [vmem:[#allocation3] sm:$0xf] %vm1168, %v1121
        %1170 = vst.msk [vmem:[#allocation3 + $0x4] sm:$0xf] %vm1168, %v1123
        %1171 = vst.msk [vmem:[#allocation3 + $0x8] sm:$0xf] %vm1168, %v1125
        %1172 = vst.msk [vmem:[#allocation3 + $0xc] sm:$0xf] %vm1168, %v1127
        %1173 = vst.msk [vmem:[#allocation3 + $0x10] sm:$0xf] %vm1168, %v1129
        %1174 = vst.msk [vmem:[#allocation3 + $0x14] sm:$0xf] %vm1168, %v1131
        %1175 = vst.msk [vmem:[#allocation3 + $0x18] sm:$0xf] %vm1168, %v1133
        %1176 = vst.msk [vmem:[#allocation3 + $0x1c] sm:$0xf] %vm1168, %v1135
        %1177 = vst.msk [vmem:[#allocation3 + $0x20] sm:$0xf] %vm1168, %v1137
        %1178 = vst.msk [vmem:[#allocation3 + $0x24] sm:$0xf] %vm1168, %v1139
        %1179 = vst.msk [vmem:[#allocation3 + $0x28] sm:$0xf] %vm1168, %v1141
        %1180 = vst.msk [vmem:[#allocation3 + $0x2c] sm:$0xf] %vm1168, %v1143
        %1181 = vst.msk [vmem:[#allocation3 + $0x30] sm:$0xf] %vm1168, %v1145
        %1182 = vst.msk [vmem:[#allocation3 + $0x34] sm:$0xf] %vm1168, %v1147
        %1183 = vst.msk [vmem:[#allocation3 + $0x38] sm:$0xf] %vm1168, %v1149
        %1184 = vst.msk [vmem:[#allocation3 + $0x3c] sm:$0xf] %vm1168, %v1151
        %v1185 = vld [vmem:[%s798] sm:$0xe]
        %v1186 = vld [vmem:[%s798 + $0x4] sm:$0xf]
        %v1187 = vld [vmem:[%s798 + $0x8] sm:$0xf]
        %v1188 = vld [vmem:[%s798 + $0xc] sm:$0xf]
        %v1189 = vld [vmem:[%s798 + $0x10] sm:$0x1]
        %v1190 = vld [vmem:[%s798 + $0x18] sm:$0xe]
        %v1191 = vld [vmem:[%s798 + $0x1c] sm:$0xf]
        %v1192 = vld [vmem:[%s798 + $0x20] sm:$0xf]
        %v1193 = vld [vmem:[%s798 + $0x24] sm:$0xf]
        %v1194 = vld [vmem:[%s798 + $0x28] sm:$0x1]
        %v1195 = vld [vmem:[%s798 + $0x30] sm:$0xe]
        %v1196 = vld [vmem:[%s798 + $0x34] sm:$0xf]
        %v1197 = vld [vmem:[%s798 + $0x38] sm:$0xf]
        %v1198 = vld [vmem:[%s798 + $0x3c] sm:$0xf]
        %v1199 = vld [vmem:[%s798 + $0x40] sm:$0x1]
        %v1200 = vld [vmem:[%s798 + $0x48] sm:$0xe]
        %v1201 = vld [vmem:[%s798 + $0x4c] sm:$0xf]
        %v1202 = vld [vmem:[%s798 + $0x50] sm:$0xf]
        %v1203 = vld [vmem:[%s798 + $0x54] sm:$0xf]
        %v1204 = vld [vmem:[%s798 + $0x58] sm:$0x1]
        %vm1225 = vcmask 1042432
        %vm1226 = vcmask 1046532
        %vm1227 = vmor %vm1225, %vm1226
        %v1228 = vrot.slane %v1185, 5
        %v1229 = vrot.slane %v1228, 4
        %v1230 = vrot.slane %v1186, 5
        %v1231 = vsel %vm1227, %v1229, %v1230
        %v1232 = vrot.slane %v1230, 4
        %v1233 = vrot.slane %v1187, 5
        %v1234 = vsel %vm1227, %v1232, %v1233
        %v1235 = vrot.slane %v1233, 4
        %v1236 = vrot.slane %v1188, 5
        %v1237 = vsel %vm1227, %v1235, %v1236
        %v1238 = vrot.slane %v1236, 4
        %v1239 = vrot.slane %v1189, 5
        %v1240 = vsel %vm1227, %v1238, %v1239
        %v1241 = vrot.slane %v1190, 5
        %v1242 = vrot.slane %v1241, 4
        %v1243 = vrot.slane %v1191, 5
        %v1244 = vsel %vm1227, %v1242, %v1243
        %v1245 = vrot.slane %v1243, 4
        %v1246 = vrot.slane %v1192, 5
        %v1247 = vsel %vm1227, %v1245, %v1246
        %v1248 = vrot.slane %v1246, 4
        %v1249 = vrot.slane %v1193, 5
        %v1250 = vsel %vm1227, %v1248, %v1249
        %v1251 = vrot.slane %v1249, 4
        %v1252 = vrot.slane %v1194, 5
        %v1253 = vsel %vm1227, %v1251, %v1252
        %v1254 = vrot.slane %v1195, 5
        %v1255 = vrot.slane %v1254, 4
        %v1256 = vrot.slane %v1196, 5
        %v1257 = vsel %vm1227, %v1255, %v1256
        %v1258 = vrot.slane %v1256, 4
        %v1259 = vrot.slane %v1197, 5
        %v1260 = vsel %vm1227, %v1258, %v1259
        %v1261 = vrot.slane %v1259, 4
        %v1262 = vrot.slane %v1198, 5
        %v1263 = vsel %vm1227, %v1261, %v1262
        %v1264 = vrot.slane %v1262, 4
        %v1265 = vrot.slane %v1199, 5
        %v1266 = vsel %vm1227, %v1264, %v1265
        %v1267 = vrot.slane %v1200, 5
        %v1268 = vrot.slane %v1267, 4
        %v1269 = vrot.slane %v1201, 5
        %v1270 = vsel %vm1227, %v1268, %v1269
        %v1271 = vrot.slane %v1269, 4
        %v1272 = vrot.slane %v1202, 5
        %v1273 = vsel %vm1227, %v1271, %v1272
        %v1274 = vrot.slane %v1272, 4
        %v1275 = vrot.slane %v1203, 5
        %v1276 = vsel %vm1227, %v1274, %v1275
        %v1277 = vrot.slane %v1275, 4
        %v1278 = vrot.slane %v1204, 5
        %v1279 = vsel %vm1227, %v1277, %v1278
        %1280 = vrot.lane.b32.xlu0 %v1231, 8
        %v1281 = vpop.permute.xlu0 %1280
        %1282 = vrot.lane.b32.xlu0 %v1234, 8
        %v1283 = vpop.permute.xlu0 %1282
        %1284 = vrot.lane.b32.xlu0 %v1237, 8
        %v1285 = vpop.permute.xlu0 %1284
        %1286 = vrot.lane.b32.xlu0 %v1240, 8
        %v1287 = vpop.permute.xlu0 %1286
        %1288 = vrot.lane.b32.xlu0 %v1244, 8
        %v1289 = vpop.permute.xlu0 %1288
        %1290 = vrot.lane.b32.xlu0 %v1247, 8
        %v1291 = vpop.permute.xlu0 %1290
        %1292 = vrot.lane.b32.xlu0 %v1250, 8
        %v1293 = vpop.permute.xlu0 %1292
        %1294 = vrot.lane.b32.xlu0 %v1253, 8
        %v1295 = vpop.permute.xlu0 %1294
        %1296 = vrot.lane.b32.xlu0 %v1257, 8
        %v1297 = vpop.permute.xlu0 %1296
        %1298 = vrot.lane.b32.xlu0 %v1260, 8
        %v1299 = vpop.permute.xlu0 %1298
        %1300 = vrot.lane.b32.xlu0 %v1263, 8
        %v1301 = vpop.permute.xlu0 %1300
        %1302 = vrot.lane.b32.xlu0 %v1266, 8
        %v1303 = vpop.permute.xlu0 %1302
        %1304 = vrot.lane.b32.xlu0 %v1270, 8
        %v1305 = vpop.permute.xlu0 %1304
        %1306 = vrot.lane.b32.xlu0 %v1273, 8
        %v1307 = vpop.permute.xlu0 %1306
        %1308 = vrot.lane.b32.xlu0 %v1276, 8
        %v1309 = vpop.permute.xlu0 %1308
        %1310 = vrot.lane.b32.xlu0 %v1279, 8
        %v1311 = vpop.permute.xlu0 %1310
        %vm1328 = vcmask 93248
        %1329 = vst.msk [vmem:[#allocation3] sm:$0xf] %vm1328, %v1281
        %1330 = vst.msk [vmem:[#allocation3 + $0x4] sm:$0xf] %vm1328, %v1283
        %1331 = vst.msk [vmem:[#allocation3 + $0x8] sm:$0xf] %vm1328, %v1285
        %1332 = vst.msk [vmem:[#allocation3 + $0xc] sm:$0xf] %vm1328, %v1287
        %1333 = vst.msk [vmem:[#allocation3 + $0x10] sm:$0xf] %vm1328, %v1289
        %1334 = vst.msk [vmem:[#allocation3 + $0x14] sm:$0xf] %vm1328, %v1291
        %1335 = vst.msk [vmem:[#allocation3 + $0x18] sm:$0xf] %vm1328, %v1293
        %1336 = vst.msk [vmem:[#allocation3 + $0x1c] sm:$0xf] %vm1328, %v1295
        %1337 = vst.msk [vmem:[#allocation3 + $0x20] sm:$0xf] %vm1328, %v1297
        %1338 = vst.msk [vmem:[#allocation3 + $0x24] sm:$0xf] %vm1328, %v1299
        %1339 = vst.msk [vmem:[#allocation3 + $0x28] sm:$0xf] %vm1328, %v1301
        %1340 = vst.msk [vmem:[#allocation3 + $0x2c] sm:$0xf] %vm1328, %v1303
        %1341 = vst.msk [vmem:[#allocation3 + $0x30] sm:$0xf] %vm1328, %v1305
        %1342 = vst.msk [vmem:[#allocation3 + $0x34] sm:$0xf] %vm1328, %v1307
        %1343 = vst.msk [vmem:[#allocation3 + $0x38] sm:$0xf] %vm1328, %v1309
        %1344 = vst.msk [vmem:[#allocation3 + $0x3c] sm:$0xf] %vm1328, %v1311
        %v1345 = vld [vmem:[%s798] sm:$0x8]
        %v1346 = vld [vmem:[%s798 + $0x4] sm:$0xf]
        %v1347 = vld [vmem:[%s798 + $0x8] sm:$0xf]
        %v1348 = vld [vmem:[%s798 + $0xc] sm:$0xf]
        %v1349 = vld [vmem:[%s798 + $0x10] sm:$0x7]
        %v1350 = vld [vmem:[%s798 + $0x18] sm:$0x8]
        %v1351 = vld [vmem:[%s798 + $0x1c] sm:$0xf]
        %v1352 = vld [vmem:[%s798 + $0x20] sm:$0xf]
        %v1353 = vld [vmem:[%s798 + $0x24] sm:$0xf]
        %v1354 = vld [vmem:[%s798 + $0x28] sm:$0x7]
        %v1355 = vld [vmem:[%s798 + $0x30] sm:$0x8]
        %v1356 = vld [vmem:[%s798 + $0x34] sm:$0xf]
        %v1357 = vld [vmem:[%s798 + $0x38] sm:$0xf]
        %v1358 = vld [vmem:[%s798 + $0x3c] sm:$0xf]
        %v1359 = vld [vmem:[%s798 + $0x40] sm:$0x7]
        %v1360 = vld [vmem:[%s798 + $0x48] sm:$0x8]
        %v1361 = vld [vmem:[%s798 + $0x4c] sm:$0xf]
        %v1362 = vld [vmem:[%s798 + $0x50] sm:$0xf]
        %v1363 = vld [vmem:[%s798 + $0x54] sm:$0xf]
        %v1364 = vld [vmem:[%s798 + $0x58] sm:$0x7]
        %vm1385 = vcmask 1040384
        %vm1386 = vcmask 1044484
        %vm1387 = vmor %vm1385, %vm1386
        %v1388 = vrot.slane %v1345, 7
        %v1389 = vrot.slane %v1388, 4
        %v1390 = vrot.slane %v1346, 7
        %v1391 = vsel %vm1387, %v1389, %v1390
        %v1392 = vrot.slane %v1390, 4
        %v1393 = vrot.slane %v1347, 7
        %v1394 = vsel %vm1387, %v1392, %v1393
        %v1395 = vrot.slane %v1393, 4
        %v1396 = vrot.slane %v1348, 7
        %v1397 = vsel %vm1387, %v1395, %v1396
        %v1398 = vrot.slane %v1396, 4
        %v1399 = vrot.slane %v1349, 7
        %v1400 = vsel %vm1387, %v1398, %v1399
        %v1401 = vrot.slane %v1350, 7
        %v1402 = vrot.slane %v1401, 4
        %v1403 = vrot.slane %v1351, 7
        %v1404 = vsel %vm1387, %v1402, %v1403
        %v1405 = vrot.slane %v1403, 4
        %v1406 = vrot.slane %v1352, 7
        %v1407 = vsel %vm1387, %v1405, %v1406
        %v1408 = vrot.slane %v1406, 4
        %v1409 = vrot.slane %v1353, 7
        %v1410 = vsel %vm1387, %v1408, %v1409
        %v1411 = vrot.slane %v1409, 4
        %v1412 = vrot.slane %v1354, 7
        %v1413 = vsel %vm1387, %v1411, %v1412
        %v1414 = vrot.slane %v1355, 7
        %v1415 = vrot.slane %v1414, 4
        %v1416 = vrot.slane %v1356, 7
        %v1417 = vsel %vm1387, %v1415, %v1416
        %v1418 = vrot.slane %v1416, 4
        %v1419 = vrot.slane %v1357, 7
        %v1420 = vsel %vm1387, %v1418, %v1419
        %v1421 = vrot.slane %v1419, 4
        %v1422 = vrot.slane %v1358, 7
        %v1423 = vsel %vm1387, %v1421, %v1422
        %v1424 = vrot.slane %v1422, 4
        %v1425 = vrot.slane %v1359, 7
        %v1426 = vsel %vm1387, %v1424, %v1425
        %v1427 = vrot.slane %v1360, 7
        %v1428 = vrot.slane %v1427, 4
        %v1429 = vrot.slane %v1361, 7
        %v1430 = vsel %vm1387, %v1428, %v1429
        %v1431 = vrot.slane %v1429, 4
        %v1432 = vrot.slane %v1362, 7
        %v1433 = vsel %vm1387, %v1431, %v1432
        %v1434 = vrot.slane %v1432, 4
        %v1435 = vrot.slane %v1363, 7
        %v1436 = vsel %vm1387, %v1434, %v1435
        %v1437 = vrot.slane %v1435, 4
        %v1438 = vrot.slane %v1364, 7
        %v1439 = vsel %vm1387, %v1437, %v1438
        %1440 = vrot.lane.b32.xlu0 %v1391, 12
        %v1441 = vpop.permute.xlu0 %1440
        %1442 = vrot.lane.b32.xlu0 %v1394, 12
        %v1443 = vpop.permute.xlu0 %1442
        %1444 = vrot.lane.b32.xlu0 %v1397, 12
        %v1445 = vpop.permute.xlu0 %1444
        %1446 = vrot.lane.b32.xlu0 %v1400, 12
        %v1447 = vpop.permute.xlu0 %1446
        %1448 = vrot.lane.b32.xlu0 %v1404, 12
        %v1449 = vpop.permute.xlu0 %1448
        %1450 = vrot.lane.b32.xlu0 %v1407, 12
        %v1451 = vpop.permute.xlu0 %1450
        %1452 = vrot.lane.b32.xlu0 %v1410, 12
        %v1453 = vpop.permute.xlu0 %1452
        %1454 = vrot.lane.b32.xlu0 %v1413, 12
        %v1455 = vpop.permute.xlu0 %1454
        %1456 = vrot.lane.b32.xlu0 %v1417, 12
        %v1457 = vpop.permute.xlu0 %1456
        %1458 = vrot.lane.b32.xlu0 %v1420, 12
        %v1459 = vpop.permute.xlu0 %1458
        %1460 = vrot.lane.b32.xlu0 %v1423, 12
        %v1461 = vpop.permute.xlu0 %1460
        %1462 = vrot.lane.b32.xlu0 %v1426, 12
        %v1463 = vpop.permute.xlu0 %1462
        %1464 = vrot.lane.b32.xlu0 %v1430, 12
        %v1465 = vpop.permute.xlu0 %1464
        %1466 = vrot.lane.b32.xlu0 %v1433, 12
        %v1467 = vpop.permute.xlu0 %1466
        %1468 = vrot.lane.b32.xlu0 %v1436, 12
        %v1469 = vpop.permute.xlu0 %1468
        %1470 = vrot.lane.b32.xlu0 %v1439, 12
        %v1471 = vpop.permute.xlu0 %1470
        %vm1488 = vcmask 126048
        %1489 = vst.msk [vmem:[#allocation3] sm:$0xf] %vm1488, %v1441
        %1490 = vst.msk [vmem:[#allocation3 + $0x4] sm:$0xf] %vm1488, %v1443
        %1491 = vst.msk [vmem:[#allocation3 + $0x8] sm:$0xf] %vm1488, %v1445
        %1492 = vst.msk [vmem:[#allocation3 + $0xc] sm:$0xf] %vm1488, %v1447
        %1493 = vst.msk [vmem:[#allocation3 + $0x10] sm:$0xf] %vm1488, %v1449
        %1494 = vst.msk [vmem:[#allocation3 + $0x14] sm:$0xf] %vm1488, %v1451
        %1495 = vst.msk [vmem:[#allocation3 + $0x18] sm:$0xf] %vm1488, %v1453
        %1496 = vst.msk [vmem:[#allocation3 + $0x1c] sm:$0xf] %vm1488, %v1455
        %1497 = vst.msk [vmem:[#allocation3 + $0x20] sm:$0xf] %vm1488, %v1457
        %1498 = vst.msk [vmem:[#allocation3 + $0x24] sm:$0xf] %vm1488, %v1459
        %1499 = vst.msk [vmem:[#allocation3 + $0x28] sm:$0xf] %vm1488, %v1461
        %1500 = vst.msk [vmem:[#allocation3 + $0x2c] sm:$0xf] %vm1488, %v1463
        %1501 = vst.msk [vmem:[#allocation3 + $0x30] sm:$0xf] %vm1488, %v1465
        %1502 = vst.msk [vmem:[#allocation3 + $0x34] sm:$0xf] %vm1488, %v1467
        %1503 = vst.msk [vmem:[#allocation3 + $0x38] sm:$0xf] %vm1488, %v1469
        %1504 = vst.msk [vmem:[#allocation3 + $0x3c] sm:$0xf] %vm1488, %v1471
        %v1505 = vld [vmem:[%s798] sm:$0x8]
        %v1506 = vld [vmem:[%s798 + $0x4] sm:$0xf]
        %v1507 = vld [vmem:[%s798 + $0x8] sm:$0xf]
        %v1508 = vld [vmem:[%s798 + $0xc] sm:$0xf]
        %v1509 = vld [vmem:[%s798 + $0x10] sm:$0xf]
        %v1510 = vld [vmem:[%s798 + $0x18] sm:$0x8]
        %v1511 = vld [vmem:[%s798 + $0x1c] sm:$0xf]
        %v1512 = vld [vmem:[%s798 + $0x20] sm:$0xf]
        %v1513 = vld [vmem:[%s798 + $0x24] sm:$0xf]
        %v1514 = vld [vmem:[%s798 + $0x28] sm:$0xf]
        %v1515 = vld [vmem:[%s798 + $0x30] sm:$0x8]
        %v1516 = vld [vmem:[%s798 + $0x34] sm:$0xf]
        %v1517 = vld [vmem:[%s798 + $0x38] sm:$0xf]
        %v1518 = vld [vmem:[%s798 + $0x3c] sm:$0xf]
        %v1519 = vld [vmem:[%s798 + $0x40] sm:$0xf]
        %v1520 = vld [vmem:[%s798 + $0x48] sm:$0x8]
        %v1521 = vld [vmem:[%s798 + $0x4c] sm:$0xf]
        %v1522 = vld [vmem:[%s798 + $0x50] sm:$0xf]
        %v1523 = vld [vmem:[%s798 + $0x54] sm:$0xf]
        %v1524 = vld [vmem:[%s798 + $0x58] sm:$0xf]
        %vm1525 = vsmask.f32 256
        %vm1526 = vsmask.f32 4368
        %vm1527 = vmor %vm1525, %vm1526
        %v1529 = vshrl.u32 %v1505, 16
        %v1531 = vrot.slane %v1529, 7
        %v1532 = vrot.slane %v1531, 4
        %v1534 = vshrl.u32 %v1506, 16
        %v1536 = vrot.slane %v1534, 7
        %v1537 = vshll.u32 %v1506, 16
        %v1539 = vor.u32 %v1536, %v1537
        %v1540 = vsel %vm1527, %v1532, %v1539
        %v1541 = vrot.slane %v1536, 4
        %v1543 = vshrl.u32 %v1507, 16
        %v1545 = vrot.slane %v1543, 7
        %v1546 = vshll.u32 %v1507, 16
        %v1548 = vor.u32 %v1545, %v1546
        %v1549 = vsel %vm1527, %v1541, %v1548
        %v1550 = vrot.slane %v1545, 4
        %v1552 = vshrl.u32 %v1508, 16
        %v1554 = vrot.slane %v1552, 7
        %v1555 = vshll.u32 %v1508, 16
        %v1557 = vor.u32 %v1554, %v1555
        %v1558 = vsel %vm1527, %v1550, %v1557
        %v1559 = vrot.slane %v1554, 4
        %v1561 = vshrl.u32 %v1509, 16
        %v1563 = vrot.slane %v1561, 7
        %v1564 = vshll.u32 %v1509, 16
        %v1566 = vor.u32 %v1563, %v1564
        %v1567 = vsel %vm1527, %v1559, %v1566
        %v1569 = vshrl.u32 %v1510, 16
        %v1571 = vrot.slane %v1569, 7
        %v1572 = vrot.slane %v1571, 4
        %v1574 = vshrl.u32 %v1511, 16
        %v1576 = vrot.slane %v1574, 7
        %v1577 = vshll.u32 %v1511, 16
        %v1579 = vor.u32 %v1576, %v1577
        %v1580 = vsel %vm1527, %v1572, %v1579
        %v1581 = vrot.slane %v1576, 4
        %v1583 = vshrl.u32 %v1512, 16
        %v1585 = vrot.slane %v1583, 7
        %v1586 = vshll.u32 %v1512, 16
        %v1588 = vor.u32 %v1585, %v1586
        %v1589 = vsel %vm1527, %v1581, %v1588
        %v1590 = vrot.slane %v1585, 4
        %v1592 = vshrl.u32 %v1513, 16
        %v1594 = vrot.slane %v1592, 7
        %v1595 = vshll.u32 %v1513, 16
        %v1597 = vor.u32 %v1594, %v1595
        %v1598 = vsel %vm1527, %v1590, %v1597
        %v1599 = vrot.slane %v1594, 4
        %v1601 = vshrl.u32 %v1514, 16
        %v1603 = vrot.slane %v1601, 7
        %v1604 = vshll.u32 %v1514, 16
        %v1606 = vor.u32 %v1603, %v1604
        %v1607 = vsel %vm1527, %v1599, %v1606
        %v1609 = vshrl.u32 %v1515, 16
        %v1611 = vrot.slane %v1609, 7
        %v1612 = vrot.slane %v1611, 4
        %v1614 = vshrl.u32 %v1516, 16
        %v1616 = vrot.slane %v1614, 7
        %v1617 = vshll.u32 %v1516, 16
        %v1619 = vor.u32 %v1616, %v1617
        %v1620 = vsel %vm1527, %v1612, %v1619
        %v1621 = vrot.slane %v1616, 4
        %v1623 = vshrl.u32 %v1517, 16
        %v1625 = vrot.slane %v1623, 7
        %v1626 = vshll.u32 %v1517, 16
        %v1628 = vor.u32 %v1625, %v1626
        %v1629 = vsel %vm1527, %v1621, %v1628
        %v1630 = vrot.slane %v1625, 4
        %v1632 = vshrl.u32 %v1518, 16
        %v1634 = vrot.slane %v1632, 7
        %v1635 = vshll.u32 %v1518, 16
        %v1637 = vor.u32 %v1634, %v1635
        %v1638 = vsel %vm1527, %v1630, %v1637
        %v1639 = vrot.slane %v1634, 4
        %v1641 = vshrl.u32 %v1519, 16
        %v1643 = vrot.slane %v1641, 7
        %v1644 = vshll.u32 %v1519, 16
        %v1646 = vor.u32 %v1643, %v1644
        %v1647 = vsel %vm1527, %v1639, %v1646
        %v1649 = vshrl.u32 %v1520, 16
        %v1651 = vrot.slane %v1649, 7
        %v1652 = vrot.slane %v1651, 4
        %v1654 = vshrl.u32 %v1521, 16
        %v1656 = vrot.slane %v1654, 7
        %v1657 = vshll.u32 %v1521, 16
        %v1659 = vor.u32 %v1656, %v1657
        %v1660 = vsel %vm1527, %v1652, %v1659
        %v1661 = vrot.slane %v1656, 4
        %v1663 = vshrl.u32 %v1522, 16
        %v1665 = vrot.slane %v1663, 7
        %v1666 = vshll.u32 %v1522, 16
        %v1668 = vor.u32 %v1665, %v1666
        %v1669 = vsel %vm1527, %v1661, %v1668
        %v1670 = vrot.slane %v1665, 4
        %v1672 = vshrl.u32 %v1523, 16
        %v1674 = vrot.slane %v1672, 7
        %v1675 = vshll.u32 %v1523, 16
        %v1677 = vor.u32 %v1674, %v1675
        %v1678 = vsel %vm1527, %v1670, %v1677
        %v1679 = vrot.slane %v1674, 4
        %v1681 = vshrl.u32 %v1524, 16
        %v1683 = vrot.slane %v1681, 7
        %v1684 = vshll.u32 %v1524, 16
        %v1686 = vor.u32 %v1683, %v1684
        %v1687 = vsel %vm1527, %v1679, %v1686
        %1688 = vrot.lane.b32.xlu0 %v1540, 16
        %v1689 = vpop.permute.xlu0 %1688
        %1690 = vrot.lane.b32.xlu0 %v1549, 16
        %v1691 = vpop.permute.xlu0 %1690
        %1692 = vrot.lane.b32.xlu0 %v1558, 16
        %v1693 = vpop.permute.xlu0 %1692
        %1694 = vrot.lane.b32.xlu0 %v1567, 16
        %v1695 = vpop.permute.xlu0 %1694
        %1696 = vrot.lane.b32.xlu0 %v1580, 16
        %v1697 = vpop.permute.xlu0 %1696
        %1698 = vrot.lane.b32.xlu0 %v1589, 16
        %v1699 = vpop.permute.xlu0 %1698
        %1700 = vrot.lane.b32.xlu0 %v1598, 16
        %v1701 = vpop.permute.xlu0 %1700
        %1702 = vrot.lane.b32.xlu0 %v1607, 16
        %v1703 = vpop.permute.xlu0 %1702
        %1704 = vrot.lane.b32.xlu0 %v1620, 16
        %v1705 = vpop.permute.xlu0 %1704
        %1706 = vrot.lane.b32.xlu0 %v1629, 16
        %v1707 = vpop.permute.xlu0 %1706
        %1708 = vrot.lane.b32.xlu0 %v1638, 16
        %v1709 = vpop.permute.xlu0 %1708
        %1710 = vrot.lane.b32.xlu0 %v1647, 16
        %v1711 = vpop.permute.xlu0 %1710
        %1712 = vrot.lane.b32.xlu0 %v1660, 16
        %v1713 = vpop.permute.xlu0 %1712
        %1714 = vrot.lane.b32.xlu0 %v1669, 16
        %v1715 = vpop.permute.xlu0 %1714
        %1716 = vrot.lane.b32.xlu0 %v1678, 16
        %v1717 = vpop.permute.xlu0 %1716
        %1718 = vrot.lane.b32.xlu0 %v1687, 16
        %v1719 = vpop.permute.xlu0 %1718
        %vm1736 = vcmask 158848
        %1737 = vst.msk [vmem:[#allocation3] sm:$0xf] %vm1736, %v1689
        %1738 = vst.msk [vmem:[#allocation3 + $0x4] sm:$0xf] %vm1736, %v1691
        %1739 = vst.msk [vmem:[#allocation3 + $0x8] sm:$0xf] %vm1736, %v1693
        %1740 = vst.msk [vmem:[#allocation3 + $0xc] sm:$0xf] %vm1736, %v1695
        %1741 = vst.msk [vmem:[#allocation3 + $0x10] sm:$0xf] %vm1736, %v1697
        %1742 = vst.msk [vmem:[#allocation3 + $0x14] sm:$0xf] %vm1736, %v1699
        %1743 = vst.msk [vmem:[#allocation3 + $0x18] sm:$0xf] %vm1736, %v1701
        %1744 = vst.msk [vmem:[#allocation3 + $0x1c] sm:$0xf] %vm1736, %v1703
        %1745 = vst.msk [vmem:[#allocation3 + $0x20] sm:$0xf] %vm1736, %v1705
        %1746 = vst.msk [vmem:[#allocation3 + $0x24] sm:$0xf] %vm1736, %v1707
        %1747 = vst.msk [vmem:[#allocation3 + $0x28] sm:$0xf] %vm1736, %v1709
        %1748 = vst.msk [vmem:[#allocation3 + $0x2c] sm:$0xf] %vm1736, %v1711
        %1749 = vst.msk [vmem:[#allocation3 + $0x30] sm:$0xf] %vm1736, %v1713
        %1750 = vst.msk [vmem:[#allocation3 + $0x34] sm:$0xf] %vm1736, %v1715
        %1751 = vst.msk [vmem:[#allocation3 + $0x38] sm:$0xf] %vm1736, %v1717
        %1752 = vst.msk [vmem:[#allocation3 + $0x3c] sm:$0xf] %vm1736, %v1719
        %v1753 = vld [vmem:[%s798 + $0x4] sm:$0xf]
        %v1754 = vld [vmem:[%s798 + $0x8] sm:$0xf]
        %v1755 = vld [vmem:[%s798 + $0xc] sm:$0xf]
        %v1756 = vld [vmem:[%s798 + $0x10] sm:$0xf]
        %v1757 = vld [vmem:[%s798 + $0x1c] sm:$0xf]
        %v1758 = vld [vmem:[%s798 + $0x20] sm:$0xf]
        %v1759 = vld [vmem:[%s798 + $0x24] sm:$0xf]
        %v1760 = vld [vmem:[%s798 + $0x28] sm:$0xf]
        %v1761 = vld [vmem:[%s798 + $0x34] sm:$0xf]
        %v1762 = vld [vmem:[%s798 + $0x38] sm:$0xf]
        %v1763 = vld [vmem:[%s798 + $0x3c] sm:$0xf]
        %v1764 = vld [vmem:[%s798 + $0x40] sm:$0xf]
        %v1765 = vld [vmem:[%s798 + $0x4c] sm:$0xf]
        %v1766 = vld [vmem:[%s798 + $0x50] sm:$0xf]
        %v1767 = vld [vmem:[%s798 + $0x54] sm:$0xf]
        %v1768 = vld [vmem:[%s798 + $0x58] sm:$0xf]
        %1785 = vrot.lane.b32.xlu0 %v1753, 20
        %v1786 = vpop.permute.xlu0 %1785
        %1787 = vrot.lane.b32.xlu0 %v1754, 20
        %v1788 = vpop.permute.xlu0 %1787
        %1789 = vrot.lane.b32.xlu0 %v1755, 20
        %v1790 = vpop.permute.xlu0 %1789
        %1791 = vrot.lane.b32.xlu0 %v1756, 20
        %v1792 = vpop.permute.xlu0 %1791
        %1793 = vrot.lane.b32.xlu0 %v1757, 20
        %v1794 = vpop.permute.xlu0 %1793
        %1795 = vrot.lane.b32.xlu0 %v1758, 20
        %v1796 = vpop.permute.xlu0 %1795
        %1797 = vrot.lane.b32.xlu0 %v1759, 20
        %v1798 = vpop.permute.xlu0 %1797
        %1799 = vrot.lane.b32.xlu0 %v1760, 20
        %v1800 = vpop.permute.xlu0 %1799
        %1801 = vrot.lane.b32.xlu0 %v1761, 20
        %v1802 = vpop.permute.xlu0 %1801
        %1803 = vrot.lane.b32.xlu0 %v1762, 20
        %v1804 = vpop.permute.xlu0 %1803
        %1805 = vrot.lane.b32.xlu0 %v1763, 20
        %v1806 = vpop.permute.xlu0 %1805
        %1807 = vrot.lane.b32.xlu0 %v1764, 20
        %v1808 = vpop.permute.xlu0 %1807
        %1809 = vrot.lane.b32.xlu0 %v1765, 20
        %v1810 = vpop.permute.xlu0 %1809
        %1811 = vrot.lane.b32.xlu0 %v1766, 20
        %v1812 = vpop.permute.xlu0 %1811
        %1813 = vrot.lane.b32.xlu0 %v1767, 20
        %v1814 = vpop.permute.xlu0 %1813
        %1815 = vrot.lane.b32.xlu0 %v1768, 20
        %v1816 = vpop.permute.xlu0 %1815
        %vm1833 = vcmask 191648
        %1834 = vst.msk [vmem:[#allocation3] sm:$0xf] %vm1833, %v1786
        %1835 = vst.msk [vmem:[#allocation3 + $0x4] sm:$0xf] %vm1833, %v1788
        %1836 = vst.msk [vmem:[#allocation3 + $0x8] sm:$0xf] %vm1833, %v1790
        %1837 = vst.msk [vmem:[#allocation3 + $0xc] sm:$0xf] %vm1833, %v1792
        %1838 = vst.msk [vmem:[#allocation3 + $0x10] sm:$0xf] %vm1833, %v1794
        %1839 = vst.msk [vmem:[#allocation3 + $0x14] sm:$0xf] %vm1833, %v1796
        %1840 = vst.msk [vmem:[#allocation3 + $0x18] sm:$0xf] %vm1833, %v1798
        %1841 = vst.msk [vmem:[#allocation3 + $0x1c] sm:$0xf] %vm1833, %v1800
        %1842 = vst.msk [vmem:[#allocation3 + $0x20] sm:$0xf] %vm1833, %v1802
        %1843 = vst.msk [vmem:[#allocation3 + $0x24] sm:$0xf] %vm1833, %v1804
        %1844 = vst.msk [vmem:[#allocation3 + $0x28] sm:$0xf] %vm1833, %v1806
        %1845 = vst.msk [vmem:[#allocation3 + $0x2c] sm:$0xf] %vm1833, %v1808
        %1846 = vst.msk [vmem:[#allocation3 + $0x30] sm:$0xf] %vm1833, %v1810
        %1847 = vst.msk [vmem:[#allocation3 + $0x34] sm:$0xf] %vm1833, %v1812
        %1848 = vst.msk [vmem:[#allocation3 + $0x38] sm:$0xf] %vm1833, %v1814
        %1849 = vst.msk [vmem:[#allocation3 + $0x3c] sm:$0xf] %vm1833, %v1816
        %v1850 = vld [vmem:[%s798 + $0x4] sm:$0xc]
        %v1851 = vld [vmem:[%s798 + $0x8] sm:$0xf]
        %v1852 = vld [vmem:[%s798 + $0xc] sm:$0xf]
        %v1853 = vld [vmem:[%s798 + $0x10] sm:$0xf]
        %v1854 = vld [vmem:[%s798 + $0x14] sm:$0x3]
        %v1855 = vld [vmem:[%s798 + $0x1c] sm:$0xc]
        %v1856 = vld [vmem:[%s798 + $0x20] sm:$0xf]
        %v1857 = vld [vmem:[%s798 + $0x24] sm:$0xf]
        %v1858 = vld [vmem:[%s798 + $0x28] sm:$0xf]
        %v1859 = vld [vmem:[%s798 + $0x2c] sm:$0x3]
        %v1860 = vld [vmem:[%s798 + $0x34] sm:$0xc]
        %v1861 = vld [vmem:[%s798 + $0x38] sm:$0xf]
        %v1862 = vld [vmem:[%s798 + $0x3c] sm:$0xf]
        %v1863 = vld [vmem:[%s798 + $0x40] sm:$0xf]
        %v1864 = vld [vmem:[%s798 + $0x44] sm:$0x3]
        %v1865 = vld [vmem:[%s798 + $0x4c] sm:$0xc]
        %v1866 = vld [vmem:[%s798 + $0x50] sm:$0xf]
        %v1867 = vld [vmem:[%s798 + $0x54] sm:$0xf]
        %v1868 = vld [vmem:[%s798 + $0x58] sm:$0xf]
        %v1869 = vld [vmem:[%s798 + $0x5c] sm:$0x3]
        %vm1890 = vcmask 1041408
        %vm1891 = vcmask 1045508
        %vm1892 = vmor %vm1890, %vm1891
        %v1893 = vrot.slane %v1850, 6
        %v1894 = vrot.slane %v1893, 4
        %v1895 = vrot.slane %v1851, 6
        %v1896 = vsel %vm1892, %v1894, %v1895
        %v1897 = vrot.slane %v1895, 4
        %v1898 = vrot.slane %v1852, 6
        %v1899 = vsel %vm1892, %v1897, %v1898
        %v1900 = vrot.slane %v1898, 4
        %v1901 = vrot.slane %v1853, 6
        %v1902 = vsel %vm1892, %v1900, %v1901
        %v1903 = vrot.slane %v1901, 4
        %v1904 = vrot.slane %v1854, 6
        %v1905 = vsel %vm1892, %v1903, %v1904
        %v1906 = vrot.slane %v1855, 6
        %v1907 = vrot.slane %v1906, 4
        %v1908 = vrot.slane %v1856, 6
        %v1909 = vsel %vm1892, %v1907, %v1908
        %v1910 = vrot.slane %v1908, 4
        %v1911 = vrot.slane %v1857, 6
        %v1912 = vsel %vm1892, %v1910, %v1911
        %v1913 = vrot.slane %v1911, 4
        %v1914 = vrot.slane %v1858, 6
        %v1915 = vsel %vm1892, %v1913, %v1914
        %v1916 = vrot.slane %v1914, 4
        %v1917 = vrot.slane %v1859, 6
        %v1918 = vsel %vm1892, %v1916, %v1917
        %v1919 = vrot.slane %v1860, 6
        %v1920 = vrot.slane %v1919, 4
        %v1921 = vrot.slane %v1861, 6
        %v1922 = vsel %vm1892, %v1920, %v1921
        %v1923 = vrot.slane %v1921, 4
        %v1924 = vrot.slane %v1862, 6
        %v1925 = vsel %vm1892, %v1923, %v1924
        %v1926 = vrot.slane %v1924, 4
        %v1927 = vrot.slane %v1863, 6
        %v1928 = vsel %vm1892, %v1926, %v1927
        %v1929 = vrot.slane %v1927, 4
        %v1930 = vrot.slane %v1864, 6
        %v1931 = vsel %vm1892, %v1929, %v1930
        %v1932 = vrot.slane %v1865, 6
        %v1933 = vrot.slane %v1932, 4
        %v1934 = vrot.slane %v1866, 6
        %v1935 = vsel %vm1892, %v1933, %v1934
        %v1936 = vrot.slane %v1934, 4
        %v1937 = vrot.slane %v1867, 6
        %v1938 = vsel %vm1892, %v1936, %v1937
        %v1939 = vrot.slane %v1937, 4
        %v1940 = vrot.slane %v1868, 6
        %v1941 = vsel %vm1892, %v1939, %v1940
        %v1942 = vrot.slane %v1940, 4
        %v1943 = vrot.slane %v1869, 6
        %v1944 = vsel %vm1892, %v1942, %v1943
        %1945 = vrot.lane.b32.xlu0 %v1896, 24
        %v1946 = vpop.permute.xlu0 %1945
        %1947 = vrot.lane.b32.xlu0 %v1899, 24
        %v1948 = vpop.permute.xlu0 %1947
        %1949 = vrot.lane.b32.xlu0 %v1902, 24
        %v1950 = vpop.permute.xlu0 %1949
        %1951 = vrot.lane.b32.xlu0 %v1905, 24
        %v1952 = vpop.permute.xlu0 %1951
        %1953 = vrot.lane.b32.xlu0 %v1909, 24
        %v1954 = vpop.permute.xlu0 %1953
        %1955 = vrot.lane.b32.xlu0 %v1912, 24
        %v1956 = vpop.permute.xlu0 %1955
        %1957 = vrot.lane.b32.xlu0 %v1915, 24
        %v1958 = vpop.permute.xlu0 %1957
        %1959 = vrot.lane.b32.xlu0 %v1918, 24
        %v1960 = vpop.permute.xlu0 %1959
        %1961 = vrot.lane.b32.xlu0 %v1922, 24
        %v1962 = vpop.permute.xlu0 %1961
        %1963 = vrot.lane.b32.xlu0 %v1925, 24
        %v1964 = vpop.permute.xlu0 %1963
        %1965 = vrot.lane.b32.xlu0 %v1928, 24
        %v1966 = vpop.permute.xlu0 %1965
        %1967 = vrot.lane.b32.xlu0 %v1931, 24
        %v1968 = vpop.permute.xlu0 %1967
        %1969 = vrot.lane.b32.xlu0 %v1935, 24
        %v1970 = vpop.permute.xlu0 %1969
        %1971 = vrot.lane.b32.xlu0 %v1938, 24
        %v1972 = vpop.permute.xlu0 %1971
        %1973 = vrot.lane.b32.xlu0 %v1941, 24
        %v1974 = vpop.permute.xlu0 %1973
        %1975 = vrot.lane.b32.xlu0 %v1944, 24
        %v1976 = vpop.permute.xlu0 %1975
        %vm1993 = vcmask 224448
        %1994 = vst.msk [vmem:[#allocation3] sm:$0xf] %vm1993, %v1946
        %1995 = vst.msk [vmem:[#allocation3 + $0x4] sm:$0xf] %vm1993, %v1948
        %1996 = vst.msk [vmem:[#allocation3 + $0x8] sm:$0xf] %vm1993, %v1950
        %1997 = vst.msk [vmem:[#allocation3 + $0xc] sm:$0xf] %vm1993, %v1952
        %1998 = vst.msk [vmem:[#allocation3 + $0x10] sm:$0xf] %vm1993, %v1954
        %1999 = vst.msk [vmem:[#allocation3 + $0x14] sm:$0xf] %vm1993, %v1956
        %2000 = vst.msk [vmem:[#allocation3 + $0x18] sm:$0xf] %vm1993, %v1958
        %2001 = vst.msk [vmem:[#allocation3 + $0x1c] sm:$0xf] %vm1993, %v1960
        %2002 = vst.msk [vmem:[#allocation3 + $0x20] sm:$0xf] %vm1993, %v1962
        %2003 = vst.msk [vmem:[#allocation3 + $0x24] sm:$0xf] %vm1993, %v1964
        %2004 = vst.msk [vmem:[#allocation3 + $0x28] sm:$0xf] %vm1993, %v1966
        %2005 = vst.msk [vmem:[#allocation3 + $0x2c] sm:$0xf] %vm1993, %v1968
        %2006 = vst.msk [vmem:[#allocation3 + $0x30] sm:$0xf] %vm1993, %v1970
        %2007 = vst.msk [vmem:[#allocation3 + $0x34] sm:$0xf] %vm1993, %v1972
        %2008 = vst.msk [vmem:[#allocation3 + $0x38] sm:$0xf] %vm1993, %v1974
        %2009 = vst.msk [vmem:[#allocation3 + $0x3c] sm:$0xf] %vm1993, %v1976
        %v2010 = vld [vmem:[%s798 + $0x4] sm:$0xc]
        %v2011 = vld [vmem:[%s798 + $0x8] sm:$0xf]
        %v2012 = vld [vmem:[%s798 + $0xc] sm:$0xf]
        %v2013 = vld [vmem:[%s798 + $0x10] sm:$0xf]
        %v2014 = vld [vmem:[%s798 + $0x14] sm:$0x7]
        %v2015 = vld [vmem:[%s798 + $0x1c] sm:$0xc]
        %v2016 = vld [vmem:[%s798 + $0x20] sm:$0xf]
        %v2017 = vld [vmem:[%s798 + $0x24] sm:$0xf]
        %v2018 = vld [vmem:[%s798 + $0x28] sm:$0xf]
        %v2019 = vld [vmem:[%s798 + $0x2c] sm:$0x7]
        %v2020 = vld [vmem:[%s798 + $0x34] sm:$0xc]
        %v2021 = vld [vmem:[%s798 + $0x38] sm:$0xf]
        %v2022 = vld [vmem:[%s798 + $0x3c] sm:$0xf]
        %v2023 = vld [vmem:[%s798 + $0x40] sm:$0xf]
        %v2024 = vld [vmem:[%s798 + $0x44] sm:$0x7]
        %v2025 = vld [vmem:[%s798 + $0x4c] sm:$0xc]
        %v2026 = vld [vmem:[%s798 + $0x50] sm:$0xf]
        %v2027 = vld [vmem:[%s798 + $0x54] sm:$0xf]
        %v2028 = vld [vmem:[%s798 + $0x58] sm:$0xf]
        %v2029 = vld [vmem:[%s798 + $0x5c] sm:$0x7]
        %vm2030 = vsmask.f32 1280
        %vm2031 = vsmask.f32 5392
        %vm2032 = vmor %vm2030, %vm2031
        %v2034 = vshrl.u32 %v2010, 16
        %v2036 = vrot.slane %v2034, 6
        %v2037 = vshll.u32 %v2010, 16
        %v2039 = vrot.slane %v2037, 7
        %v2040 = vor.u32 %v2036, %v2039
        %v2041 = vrot.slane %v2040, 4
        %v2043 = vshrl.u32 %v2011, 16
        %v2045 = vrot.slane %v2043, 6
        %v2046 = vshll.u32 %v2011, 16
        %v2048 = vrot.slane %v2046, 7
        %v2049 = vor.u32 %v2045, %v2048
        %v2050 = vsel %vm2032, %v2041, %v2049
        %v2051 = vrot.slane %v2049, 4
        %v2053 = vshrl.u32 %v2012, 16
        %v2055 = vrot.slane %v2053, 6
        %v2056 = vshll.u32 %v2012, 16
        %v2058 = vrot.slane %v2056, 7
        %v2059 = vor.u32 %v2055, %v2058
        %v2060 = vsel %vm2032, %v2051, %v2059
        %v2061 = vrot.slane %v2059, 4
        %v2063 = vshrl.u32 %v2013, 16
        %v2065 = vrot.slane %v2063, 6
        %v2066 = vshll.u32 %v2013, 16
        %v2068 = vrot.slane %v2066, 7
        %v2069 = vor.u32 %v2065, %v2068
        %v2070 = vsel %vm2032, %v2061, %v2069
        %v2071 = vrot.slane %v2069, 4
        %v2073 = vshrl.u32 %v2014, 16
        %v2075 = vrot.slane %v2073, 6
        %v2076 = vshll.u32 %v2014, 16
        %v2078 = vrot.slane %v2076, 7
        %v2079 = vor.u32 %v2075, %v2078
        %v2080 = vsel %vm2032, %v2071, %v2079
        %v2082 = vshrl.u32 %v2015, 16
        %v2084 = vrot.slane %v2082, 6
        %v2085 = vshll.u32 %v2015, 16
        %v2087 = vrot.slane %v2085, 7
        %v2088 = vor.u32 %v2084, %v2087
        %v2089 = vrot.slane %v2088, 4
        %v2091 = vshrl.u32 %v2016, 16
        %v2093 = vrot.slane %v2091, 6
        %v2094 = vshll.u32 %v2016, 16
        %v2096 = vrot.slane %v2094, 7
        %v2097 = vor.u32 %v2093, %v2096
        %v2098 = vsel %vm2032, %v2089, %v2097
        %v2099 = vrot.slane %v2097, 4
        %v2101 = vshrl.u32 %v2017, 16
        %v2103 = vrot.slane %v2101, 6
        %v2104 = vshll.u32 %v2017, 16
        %v2106 = vrot.slane %v2104, 7
        %v2107 = vor.u32 %v2103, %v2106
        %v2108 = vsel %vm2032, %v2099, %v2107
        %v2109 = vrot.slane %v2107, 4
        %v2111 = vshrl.u32 %v2018, 16
        %v2113 = vrot.slane %v2111, 6
        %v2114 = vshll.u32 %v2018, 16
        %v2116 = vrot.slane %v2114, 7
        %v2117 = vor.u32 %v2113, %v2116
        %v2118 = vsel %vm2032, %v2109, %v2117
        %v2119 = vrot.slane %v2117, 4
        %v2121 = vshrl.u32 %v2019, 16
        %v2123 = vrot.slane %v2121, 6
        %v2124 = vshll.u32 %v2019, 16
        %v2126 = vrot.slane %v2124, 7
        %v2127 = vor.u32 %v2123, %v2126
        %v2128 = vsel %vm2032, %v2119, %v2127
        %v2130 = vshrl.u32 %v2020, 16
        %v2132 = vrot.slane %v2130, 6
        %v2133 = vshll.u32 %v2020, 16
        %v2135 = vrot.slane %v2133, 7
        %v2136 = vor.u32 %v2132, %v2135
        %v2137 = vrot.slane %v2136, 4
        %v2139 = vshrl.u32 %v2021, 16
        %v2141 = vrot.slane %v2139, 6
        %v2142 = vshll.u32 %v2021, 16
        %v2144 = vrot.slane %v2142, 7
        %v2145 = vor.u32 %v2141, %v2144
        %v2146 = vsel %vm2032, %v2137, %v2145
        %v2147 = vrot.slane %v2145, 4
        %v2149 = vshrl.u32 %v2022, 16
        %v2151 = vrot.slane %v2149, 6
        %v2152 = vshll.u32 %v2022, 16
        %v2154 = vrot.slane %v2152, 7
        %v2155 = vor.u32 %v2151, %v2154
        %v2156 = vsel %vm2032, %v2147, %v2155
        %v2157 = vrot.slane %v2155, 4
        %v2159 = vshrl.u32 %v2023, 16
        %v2161 = vrot.slane %v2159, 6
        %v2162 = vshll.u32 %v2023, 16
        %v2164 = vrot.slane %v2162, 7
        %v2165 = vor.u32 %v2161, %v2164
        %v2166 = vsel %vm2032, %v2157, %v2165
        %v2167 = vrot.slane %v2165, 4
        %v2169 = vshrl.u32 %v2024, 16
        %v2171 = vrot.slane %v2169, 6
        %v2172 = vshll.u32 %v2024, 16
        %v2174 = vrot.slane %v2172, 7
        %v2175 = vor.u32 %v2171, %v2174
        %v2176 = vsel %vm2032, %v2167, %v2175
        %v2178 = vshrl.u32 %v2025, 16
        %v2180 = vrot.slane %v2178, 6
        %v2181 = vshll.u32 %v2025, 16
        %v2183 = vrot.slane %v2181, 7
        %v2184 = vor.u32 %v2180, %v2183
        %v2185 = vrot.slane %v2184, 4
        %v2187 = vshrl.u32 %v2026, 16
        %v2189 = vrot.slane %v2187, 6
        %v2190 = vshll.u32 %v2026, 16
        %v2192 = vrot.slane %v2190, 7
        %v2193 = vor.u32 %v2189, %v2192
        %v2194 = vsel %vm2032, %v2185, %v2193
        %v2195 = vrot.slane %v2193, 4
        %v2197 = vshrl.u32 %v2027, 16
        %v2199 = vrot.slane %v2197, 6
        %v2200 = vshll.u32 %v2027, 16
        %v2202 = vrot.slane %v2200, 7
        %v2203 = vor.u32 %v2199, %v2202
        %v2204 = vsel %vm2032, %v2195, %v2203
        %v2205 = vrot.slane %v2203, 4
        %v2207 = vshrl.u32 %v2028, 16
        %v2209 = vrot.slane %v2207, 6
        %v2210 = vshll.u32 %v2028, 16
        %v2212 = vrot.slane %v2210, 7
        %v2213 = vor.u32 %v2209, %v2212
        %v2214 = vsel %vm2032, %v2205, %v2213
        %v2215 = vrot.slane %v2213, 4
        %v2217 = vshrl.u32 %v2029, 16
        %v2219 = vrot.slane %v2217, 6
        %v2220 = vshll.u32 %v2029, 16
        %v2222 = vrot.slane %v2220, 7
        %v2223 = vor.u32 %v2219, %v2222
        %v2224 = vsel %vm2032, %v2215, %v2223
        %2225 = vrot.lane.b32.xlu0 %v2050, 28
        %v2226 = vpop.permute.xlu0 %2225
        %2227 = vrot.lane.b32.xlu0 %v2060, 28
        %v2228 = vpop.permute.xlu0 %2227
        %2229 = vrot.lane.b32.xlu0 %v2070, 28
        %v2230 = vpop.permute.xlu0 %2229
        %2231 = vrot.lane.b32.xlu0 %v2080, 28
        %v2232 = vpop.permute.xlu0 %2231
        %2233 = vrot.lane.b32.xlu0 %v2098, 28
        %v2234 = vpop.permute.xlu0 %2233
        %2235 = vrot.lane.b32.xlu0 %v2108, 28
        %v2236 = vpop.permute.xlu0 %2235
        %2237 = vrot.lane.b32.xlu0 %v2118, 28
        %v2238 = vpop.permute.xlu0 %2237
        %2239 = vrot.lane.b32.xlu0 %v2128, 28
        %v2240 = vpop.permute.xlu0 %2239
        %2241 = vrot.lane.b32.xlu0 %v2146, 28
        %v2242 = vpop.permute.xlu0 %2241
        %2243 = vrot.lane.b32.xlu0 %v2156, 28
        %v2244 = vpop.permute.xlu0 %2243
        %2245 = vrot.lane.b32.xlu0 %v2166, 28
        %v2246 = vpop.permute.xlu0 %2245
        %2247 = vrot.lane.b32.xlu0 %v2176, 28
        %v2248 = vpop.permute.xlu0 %2247
        %2249 = vrot.lane.b32.xlu0 %v2194, 28
        %v2250 = vpop.permute.xlu0 %2249
        %2251 = vrot.lane.b32.xlu0 %v2204, 28
        %v2252 = vpop.permute.xlu0 %2251
        %2253 = vrot.lane.b32.xlu0 %v2214, 28
        %v2254 = vpop.permute.xlu0 %2253
        %2255 = vrot.lane.b32.xlu0 %v2224, 28
        %v2256 = vpop.permute.xlu0 %2255
        %vm2273 = vcmask 257248
        %2274 = vst.msk [vmem:[#allocation3] sm:$0xf] %vm2273, %v2226
        %2275 = vst.msk [vmem:[#allocation3 + $0x4] sm:$0xf] %vm2273, %v2228
        %2276 = vst.msk [vmem:[#allocation3 + $0x8] sm:$0xf] %vm2273, %v2230
        %2277 = vst.msk [vmem:[#allocation3 + $0xc] sm:$0xf] %vm2273, %v2232
        %2278 = vst.msk [vmem:[#allocation3 + $0x10] sm:$0xf] %vm2273, %v2234
        %2279 = vst.msk [vmem:[#allocation3 + $0x14] sm:$0xf] %vm2273, %v2236
        %2280 = vst.msk [vmem:[#allocation3 + $0x18] sm:$0xf] %vm2273, %v2238
        %2281 = vst.msk [vmem:[#allocation3 + $0x1c] sm:$0xf] %vm2273, %v2240
        %2282 = vst.msk [vmem:[#allocation3 + $0x20] sm:$0xf] %vm2273, %v2242
        %2283 = vst.msk [vmem:[#allocation3 + $0x24] sm:$0xf] %vm2273, %v2244
        %2284 = vst.msk [vmem:[#allocation3 + $0x28] sm:$0xf] %vm2273, %v2246
        %2285 = vst.msk [vmem:[#allocation3 + $0x2c] sm:$0xf] %vm2273, %v2248
        %2286 = vst.msk [vmem:[#allocation3 + $0x30] sm:$0xf] %vm2273, %v2250
        %2287 = vst.msk [vmem:[#allocation3 + $0x34] sm:$0xf] %vm2273, %v2252
        %2288 = vst.msk [vmem:[#allocation3 + $0x38] sm:$0xf] %vm2273, %v2254
        %2289 = vst.msk [vmem:[#allocation3 + $0x3c] sm:$0xf] %vm2273, %v2256
        %v2290 = vld [vmem:[%s798 + $0x4] sm:$0x8]
        %v2291 = vld [vmem:[%s798 + $0x8] sm:$0xf]
        %v2292 = vld [vmem:[%s798 + $0xc] sm:$0xf]
        %v2293 = vld [vmem:[%s798 + $0x10] sm:$0xf]
        %v2294 = vld [vmem:[%s798 + $0x14] sm:$0x7]
        %v2295 = vld [vmem:[%s798 + $0x1c] sm:$0x8]
        %v2296 = vld [vmem:[%s798 + $0x20] sm:$0xf]
        %v2297 = vld [vmem:[%s798 + $0x24] sm:$0xf]
        %v2298 = vld [vmem:[%s798 + $0x28] sm:$0xf]
        %v2299 = vld [vmem:[%s798 + $0x2c] sm:$0x7]
        %v2300 = vld [vmem:[%s798 + $0x34] sm:$0x8]
        %v2301 = vld [vmem:[%s798 + $0x38] sm:$0xf]
        %v2302 = vld [vmem:[%s798 + $0x3c] sm:$0xf]
        %v2303 = vld [vmem:[%s798 + $0x40] sm:$0xf]
        %v2304 = vld [vmem:[%s798 + $0x44] sm:$0x7]
        %v2305 = vld [vmem:[%s798 + $0x4c] sm:$0x8]
        %v2306 = vld [vmem:[%s798 + $0x50] sm:$0xf]
        %v2307 = vld [vmem:[%s798 + $0x54] sm:$0xf]
        %v2308 = vld [vmem:[%s798 + $0x58] sm:$0xf]
        %v2309 = vld [vmem:[%s798 + $0x5c] sm:$0x7]
        %v2330 = vrot.slane %v2290, 7
        %v2331 = vrot.slane %v2330, 4
        %v2332 = vrot.slane %v2291, 7
        %v2333 = vsel %vm1387, %v2331, %v2332
        %v2334 = vrot.slane %v2332, 4
        %v2335 = vrot.slane %v2292, 7
        %v2336 = vsel %vm1387, %v2334, %v2335
        %v2337 = vrot.slane %v2335, 4
        %v2338 = vrot.slane %v2293, 7
        %v2339 = vsel %vm1387, %v2337, %v2338
        %v2340 = vrot.slane %v2338, 4
        %v2341 = vrot.slane %v2294, 7
        %v2342 = vsel %vm1387, %v2340, %v2341
        %v2343 = vrot.slane %v2295, 7
        %v2344 = vrot.slane %v2343, 4
        %v2345 = vrot.slane %v2296, 7
        %v2346 = vsel %vm1387, %v2344, %v2345
        %v2347 = vrot.slane %v2345, 4
        %v2348 = vrot.slane %v2297, 7
        %v2349 = vsel %vm1387, %v2347, %v2348
        %v2350 = vrot.slane %v2348, 4
        %v2351 = vrot.slane %v2298, 7
        %v2352 = vsel %vm1387, %v2350, %v2351
        %v2353 = vrot.slane %v2351, 4
        %v2354 = vrot.slane %v2299, 7
        %v2355 = vsel %vm1387, %v2353, %v2354
        %v2356 = vrot.slane %v2300, 7
        %v2357 = vrot.slane %v2356, 4
        %v2358 = vrot.slane %v2301, 7
        %v2359 = vsel %vm1387, %v2357, %v2358
        %v2360 = vrot.slane %v2358, 4
        %v2361 = vrot.slane %v2302, 7
        %v2362 = vsel %vm1387, %v2360, %v2361
        %v2363 = vrot.slane %v2361, 4
        %v2364 = vrot.slane %v2303, 7
        %v2365 = vsel %vm1387, %v2363, %v2364
        %v2366 = vrot.slane %v2364, 4
        %v2367 = vrot.slane %v2304, 7
        %v2368 = vsel %vm1387, %v2366, %v2367
        %v2369 = vrot.slane %v2305, 7
        %v2370 = vrot.slane %v2369, 4
        %v2371 = vrot.slane %v2306, 7
        %v2372 = vsel %vm1387, %v2370, %v2371
        %v2373 = vrot.slane %v2371, 4
        %v2374 = vrot.slane %v2307, 7
        %v2375 = vsel %vm1387, %v2373, %v2374
        %v2376 = vrot.slane %v2374, 4
        %v2377 = vrot.slane %v2308, 7
        %v2378 = vsel %vm1387, %v2376, %v2377
        %v2379 = vrot.slane %v2377, 4
        %v2380 = vrot.slane %v2309, 7
        %v2381 = vsel %vm1387, %v2379, %v2380
        %2382 = vrot.lane.b32.xlu0 %v2333, 32
        %v2383 = vpop.permute.xlu0 %2382
        %2384 = vrot.lane.b32.xlu0 %v2336, 32
        %v2385 = vpop.permute.xlu0 %2384
        %2386 = vrot.lane.b32.xlu0 %v2339, 32
        %v2387 = vpop.permute.xlu0 %2386
        %2388 = vrot.lane.b32.xlu0 %v2342, 32
        %v2389 = vpop.permute.xlu0 %2388
        %2390 = vrot.lane.b32.xlu0 %v2346, 32
        %v2391 = vpop.permute.xlu0 %2390
        %2392 = vrot.lane.b32.xlu0 %v2349, 32
        %v2393 = vpop.permute.xlu0 %2392
        %2394 = vrot.lane.b32.xlu0 %v2352, 32
        %v2395 = vpop.permute.xlu0 %2394
        %2396 = vrot.lane.b32.xlu0 %v2355, 32
        %v2397 = vpop.permute.xlu0 %2396
        %2398 = vrot.lane.b32.xlu0 %v2359, 32
        %v2399 = vpop.permute.xlu0 %2398
        %2400 = vrot.lane.b32.xlu0 %v2362, 32
        %v2401 = vpop.permute.xlu0 %2400
        %2402 = vrot.lane.b32.xlu0 %v2365, 32
        %v2403 = vpop.permute.xlu0 %2402
        %2404 = vrot.lane.b32.xlu0 %v2368, 32
        %v2405 = vpop.permute.xlu0 %2404
        %2406 = vrot.lane.b32.xlu0 %v2372, 32
        %v2407 = vpop.permute.xlu0 %2406
        %2408 = vrot.lane.b32.xlu0 %v2375, 32
        %v2409 = vpop.permute.xlu0 %2408
        %2410 = vrot.lane.b32.xlu0 %v2378, 32
        %v2411 = vpop.permute.xlu0 %2410
        %2412 = vrot.lane.b32.xlu0 %v2381, 32
        %v2413 = vpop.permute.xlu0 %2412
        %vm2430 = vcmask 290048
        %2431 = vst.msk [vmem:[#allocation3] sm:$0xf] %vm2430, %v2383
        %2432 = vst.msk [vmem:[#allocation3 + $0x4] sm:$0xf] %vm2430, %v2385
        %2433 = vst.msk [vmem:[#allocation3 + $0x8] sm:$0xf] %vm2430, %v2387
        %2434 = vst.msk [vmem:[#allocation3 + $0xc] sm:$0xf] %vm2430, %v2389
        %2435 = vst.msk [vmem:[#allocation3 + $0x10] sm:$0xf] %vm2430, %v2391
        %2436 = vst.msk [vmem:[#allocation3 + $0x14] sm:$0xf] %vm2430, %v2393
        %2437 = vst.msk [vmem:[#allocation3 + $0x18] sm:$0xf] %vm2430, %v2395
        %2438 = vst.msk [vmem:[#allocation3 + $0x1c] sm:$0xf] %vm2430, %v2397
        %2439 = vst.msk [vmem:[#allocation3 + $0x20] sm:$0xf] %vm2430, %v2399
        %2440 = vst.msk [vmem:[#allocation3 + $0x24] sm:$0xf] %vm2430, %v2401
        %2441 = vst.msk [vmem:[#allocation3 + $0x28] sm:$0xf] %vm2430, %v2403
        %2442 = vst.msk [vmem:[#allocation3 + $0x2c] sm:$0xf] %vm2430, %v2405
        %2443 = vst.msk [vmem:[#allocation3 + $0x30] sm:$0xf] %vm2430, %v2407
        %2444 = vst.msk [vmem:[#allocation3 + $0x34] sm:$0xf] %vm2430, %v2409
        %2445 = vst.msk [vmem:[#allocation3 + $0x38] sm:$0xf] %vm2430, %v2411
        %2446 = vst.msk [vmem:[#allocation3 + $0x3c] sm:$0xf] %vm2430, %v2413
        %v2447 = vld [vmem:[%s805] sm:$0xf]
        %v2448 = vld [vmem:[%s805 + $0x4] sm:$0xf]
        %v2449 = vld [vmem:[%s805 + $0x8] sm:$0xf]
        %v2450 = vld [vmem:[%s805 + $0xc] sm:$0xf]
        %v2451 = vld [vmem:[%s805 + $0x18] sm:$0xf]
        %v2452 = vld [vmem:[%s805 + $0x1c] sm:$0xf]
        %v2453 = vld [vmem:[%s805 + $0x20] sm:$0xf]
        %v2454 = vld [vmem:[%s805 + $0x24] sm:$0xf]
        %v2455 = vld [vmem:[%s805 + $0x30] sm:$0xf]
        %v2456 = vld [vmem:[%s805 + $0x34] sm:$0xf]
        %v2457 = vld [vmem:[%s805 + $0x38] sm:$0xf]
        %v2458 = vld [vmem:[%s805 + $0x3c] sm:$0xf]
        %v2459 = vld [vmem:[%s805 + $0x48] sm:$0xf]
        %v2460 = vld [vmem:[%s805 + $0x4c] sm:$0xf]
        %v2461 = vld [vmem:[%s805 + $0x50] sm:$0xf]
        %v2462 = vld [vmem:[%s805 + $0x54] sm:$0xf]
        %2479 = vrot.lane.b32.xlu0 %v2447, 36
        %v2480 = vpop.permute.xlu0 %2479
        %2481 = vrot.lane.b32.xlu0 %v2448, 36
        %v2482 = vpop.permute.xlu0 %2481
        %2483 = vrot.lane.b32.xlu0 %v2449, 36
        %v2484 = vpop.permute.xlu0 %2483
        %2485 = vrot.lane.b32.xlu0 %v2450, 36
        %v2486 = vpop.permute.xlu0 %2485
        %2487 = vrot.lane.b32.xlu0 %v2451, 36
        %v2488 = vpop.permute.xlu0 %2487
        %2489 = vrot.lane.b32.xlu0 %v2452, 36
        %v2490 = vpop.permute.xlu0 %2489
        %2491 = vrot.lane.b32.xlu0 %v2453, 36
        %v2492 = vpop.permute.xlu0 %2491
        %2493 = vrot.lane.b32.xlu0 %v2454, 36
        %v2494 = vpop.permute.xlu0 %2493
        %2495 = vrot.lane.b32.xlu0 %v2455, 36
        %v2496 = vpop.permute.xlu0 %2495
        %2497 = vrot.lane.b32.xlu0 %v2456, 36
        %v2498 = vpop.permute.xlu0 %2497
        %2499 = vrot.lane.b32.xlu0 %v2457, 36
        %v2500 = vpop.permute.xlu0 %2499
        %2501 = vrot.lane.b32.xlu0 %v2458, 36
        %v2502 = vpop.permute.xlu0 %2501
        %2503 = vrot.lane.b32.xlu0 %v2459, 36
        %v2504 = vpop.permute.xlu0 %2503
        %2505 = vrot.lane.b32.xlu0 %v2460, 36
        %v2506 = vpop.permute.xlu0 %2505
        %2507 = vrot.lane.b32.xlu0 %v2461, 36
        %v2508 = vpop.permute.xlu0 %2507
        %2509 = vrot.lane.b32.xlu0 %v2462, 36
        %v2510 = vpop.permute.xlu0 %2509
        %vm2527 = vcmask 322848
        %2528 = vst.msk [vmem:[#allocation3] sm:$0xf] %vm2527, %v2480
        %2529 = vst.msk [vmem:[#allocation3 + $0x4] sm:$0xf] %vm2527, %v2482
        %2530 = vst.msk [vmem:[#allocation3 + $0x8] sm:$0xf] %vm2527, %v2484
        %2531 = vst.msk [vmem:[#allocation3 + $0xc] sm:$0xf] %vm2527, %v2486
        %2532 = vst.msk [vmem:[#allocation3 + $0x10] sm:$0xf] %vm2527, %v2488
        %2533 = vst.msk [vmem:[#allocation3 + $0x14] sm:$0xf] %vm2527, %v2490
        %2534 = vst.msk [vmem:[#allocation3 + $0x18] sm:$0xf] %vm2527, %v2492
        %2535 = vst.msk [vmem:[#allocation3 + $0x1c] sm:$0xf] %vm2527, %v2494
        %2536 = vst.msk [vmem:[#allocation3 + $0x20] sm:$0xf] %vm2527, %v2496
        %2537 = vst.msk [vmem:[#allocation3 + $0x24] sm:$0xf] %vm2527, %v2498
        %2538 = vst.msk [vmem:[#allocation3 + $0x28] sm:$0xf] %vm2527, %v2500
        %2539 = vst.msk [vmem:[#allocation3 + $0x2c] sm:$0xf] %vm2527, %v2502
        %2540 = vst.msk [vmem:[#allocation3 + $0x30] sm:$0xf] %vm2527, %v2504
        %2541 = vst.msk [vmem:[#allocation3 + $0x34] sm:$0xf] %vm2527, %v2506
        %2542 = vst.msk [vmem:[#allocation3 + $0x38] sm:$0xf] %vm2527, %v2508
        %2543 = vst.msk [vmem:[#allocation3 + $0x3c] sm:$0xf] %vm2527, %v2510
        %v2544 = vld [vmem:[%s805] sm:$0xf]
        %v2545 = vld [vmem:[%s805 + $0x4] sm:$0xf]
        %v2546 = vld [vmem:[%s805 + $0x8] sm:$0xf]
        %v2547 = vld [vmem:[%s805 + $0xc] sm:$0xf]
        %v2548 = vld [vmem:[%s805 + $0x10] sm:$0x1]
        %v2549 = vld [vmem:[%s805 + $0x18] sm:$0xf]
        %v2550 = vld [vmem:[%s805 + $0x1c] sm:$0xf]
        %v2551 = vld [vmem:[%s805 + $0x20] sm:$0xf]
        %v2552 = vld [vmem:[%s805 + $0x24] sm:$0xf]
        %v2553 = vld [vmem:[%s805 + $0x28] sm:$0x1]
        %v2554 = vld [vmem:[%s805 + $0x30] sm:$0xf]
        %v2555 = vld [vmem:[%s805 + $0x34] sm:$0xf]
        %v2556 = vld [vmem:[%s805 + $0x38] sm:$0xf]
        %v2557 = vld [vmem:[%s805 + $0x3c] sm:$0xf]
        %v2558 = vld [vmem:[%s805 + $0x40] sm:$0x1]
        %v2559 = vld [vmem:[%s805 + $0x48] sm:$0xf]
        %v2560 = vld [vmem:[%s805 + $0x4c] sm:$0xf]
        %v2561 = vld [vmem:[%s805 + $0x50] sm:$0xf]
        %v2562 = vld [vmem:[%s805 + $0x54] sm:$0xf]
        %v2563 = vld [vmem:[%s805 + $0x58] sm:$0x1]
        %v2565 = vshrl.u32 %v2544, 16
        %v2567 = vrot.slane %v2565, 4
        %v2568 = vshll.u32 %v2544, 16
        %v2570 = vrot.slane %v2568, 5
        %v2571 = vor.u32 %v2567, %v2570
        %v2572 = vrot.slane %v2571, 4
        %v2574 = vshll.u32 %v2545, 16
        %v2576 = vrot.slane %v2574, 5
        %v2577 = vsel %vm943, %v2572, %v2576
        %v2578 = vshrl.u32 %v2545, 16
        %v2580 = vrot.slane %v2578, 4
        %v2581 = vor.u32 %v2580, %v2576
        %v2582 = vrot.slane %v2581, 4
        %v2584 = vshll.u32 %v2546, 16
        %v2586 = vrot.slane %v2584, 5
        %v2587 = vsel %vm943, %v2582, %v2586
        %v2588 = vshrl.u32 %v2546, 16
        %v2590 = vrot.slane %v2588, 4
        %v2591 = vor.u32 %v2590, %v2586
        %v2592 = vrot.slane %v2591, 4
        %v2594 = vshll.u32 %v2547, 16
        %v2596 = vrot.slane %v2594, 5
        %v2597 = vsel %vm943, %v2592, %v2596
        %v2598 = vshrl.u32 %v2547, 16
        %v2600 = vrot.slane %v2598, 4
        %v2601 = vor.u32 %v2600, %v2596
        %v2602 = vrot.slane %v2601, 4
        %v2604 = vshll.u32 %v2548, 16
        %v2606 = vrot.slane %v2604, 5
        %v2607 = vsel %vm943, %v2602, %v2606
        %v2609 = vshrl.u32 %v2549, 16
        %v2611 = vrot.slane %v2609, 4
        %v2612 = vshll.u32 %v2549, 16
        %v2614 = vrot.slane %v2612, 5
        %v2615 = vor.u32 %v2611, %v2614
        %v2616 = vrot.slane %v2615, 4
        %v2618 = vshll.u32 %v2550, 16
        %v2620 = vrot.slane %v2618, 5
        %v2621 = vsel %vm943, %v2616, %v2620
        %v2622 = vshrl.u32 %v2550, 16
        %v2624 = vrot.slane %v2622, 4
        %v2625 = vor.u32 %v2624, %v2620
        %v2626 = vrot.slane %v2625, 4
        %v2628 = vshll.u32 %v2551, 16
        %v2630 = vrot.slane %v2628, 5
        %v2631 = vsel %vm943, %v2626, %v2630
        %v2632 = vshrl.u32 %v2551, 16
        %v2634 = vrot.slane %v2632, 4
        %v2635 = vor.u32 %v2634, %v2630
        %v2636 = vrot.slane %v2635, 4
        %v2638 = vshll.u32 %v2552, 16
        %v2640 = vrot.slane %v2638, 5
        %v2641 = vsel %vm943, %v2636, %v2640
        %v2642 = vshrl.u32 %v2552, 16
        %v2644 = vrot.slane %v2642, 4
        %v2645 = vor.u32 %v2644, %v2640
        %v2646 = vrot.slane %v2645, 4
        %v2648 = vshll.u32 %v2553, 16
        %v2650 = vrot.slane %v2648, 5
        %v2651 = vsel %vm943, %v2646, %v2650
        %v2653 = vshrl.u32 %v2554, 16
        %v2655 = vrot.slane %v2653, 4
        %v2656 = vshll.u32 %v2554, 16
        %v2658 = vrot.slane %v2656, 5
        %v2659 = vor.u32 %v2655, %v2658
        %v2660 = vrot.slane %v2659, 4
        %v2662 = vshll.u32 %v2555, 16
        %v2664 = vrot.slane %v2662, 5
        %v2665 = vsel %vm943, %v2660, %v2664
        %v2666 = vshrl.u32 %v2555, 16
        %v2668 = vrot.slane %v2666, 4
        %v2669 = vor.u32 %v2668, %v2664
        %v2670 = vrot.slane %v2669, 4
        %v2672 = vshll.u32 %v2556, 16
        %v2674 = vrot.slane %v2672, 5
        %v2675 = vsel %vm943, %v2670, %v2674
        %v2676 = vshrl.u32 %v2556, 16
        %v2678 = vrot.slane %v2676, 4
        %v2679 = vor.u32 %v2678, %v2674
        %v2680 = vrot.slane %v2679, 4
        %v2682 = vshll.u32 %v2557, 16
        %v2684 = vrot.slane %v2682, 5
        %v2685 = vsel %vm943, %v2680, %v2684
        %v2686 = vshrl.u32 %v2557, 16
        %v2688 = vrot.slane %v2686, 4
        %v2689 = vor.u32 %v2688, %v2684
        %v2690 = vrot.slane %v2689, 4
        %v2692 = vshll.u32 %v2558, 16
        %v2694 = vrot.slane %v2692, 5
        %v2695 = vsel %vm943, %v2690, %v2694
        %v2697 = vshrl.u32 %v2559, 16
        %v2699 = vrot.slane %v2697, 4
        %v2700 = vshll.u32 %v2559, 16
        %v2702 = vrot.slane %v2700, 5
        %v2703 = vor.u32 %v2699, %v2702
        %v2704 = vrot.slane %v2703, 4
        %v2706 = vshll.u32 %v2560, 16
        %v2708 = vrot.slane %v2706, 5
        %v2709 = vsel %vm943, %v2704, %v2708
        %v2710 = vshrl.u32 %v2560, 16
        %v2712 = vrot.slane %v2710, 4
        %v2713 = vor.u32 %v2712, %v2708
        %v2714 = vrot.slane %v2713, 4
        %v2716 = vshll.u32 %v2561, 16
        %v2718 = vrot.slane %v2716, 5
        %v2719 = vsel %vm943, %v2714, %v2718
        %v2720 = vshrl.u32 %v2561, 16
        %v2722 = vrot.slane %v2720, 4
        %v2723 = vor.u32 %v2722, %v2718
        %v2724 = vrot.slane %v2723, 4
        %v2726 = vshll.u32 %v2562, 16
        %v2728 = vrot.slane %v2726, 5
        %v2729 = vsel %vm943, %v2724, %v2728
        %v2730 = vshrl.u32 %v2562, 16
        %v2732 = vrot.slane %v2730, 4
        %v2733 = vor.u32 %v2732, %v2728
        %v2734 = vrot.slane %v2733, 4
        %v2736 = vshll.u32 %v2563, 16
        %v2738 = vrot.slane %v2736, 5
        %v2739 = vsel %vm943, %v2734, %v2738
        %2740 = vrot.lane.b32.xlu0 %v2577, 40
        %v2741 = vpop.permute.xlu0 %2740
        %2742 = vrot.lane.b32.xlu0 %v2587, 40
        %v2743 = vpop.permute.xlu0 %2742
        %2744 = vrot.lane.b32.xlu0 %v2597, 40
        %v2745 = vpop.permute.xlu0 %2744
        %2746 = vrot.lane.b32.xlu0 %v2607, 40
        %v2747 = vpop.permute.xlu0 %2746
        %2748 = vrot.lane.b32.xlu0 %v2621, 40
        %v2749 = vpop.permute.xlu0 %2748
        %2750 = vrot.lane.b32.xlu0 %v2631, 40
        %v2751 = vpop.permute.xlu0 %2750
        %2752 = vrot.lane.b32.xlu0 %v2641, 40
        %v2753 = vpop.permute.xlu0 %2752
        %2754 = vrot.lane.b32.xlu0 %v2651, 40
        %v2755 = vpop.permute.xlu0 %2754
        %2756 = vrot.lane.b32.xlu0 %v2665, 40
        %v2757 = vpop.permute.xlu0 %2756
        %2758 = vrot.lane.b32.xlu0 %v2675, 40
        %v2759 = vpop.permute.xlu0 %2758
        %2760 = vrot.lane.b32.xlu0 %v2685, 40
        %v2761 = vpop.permute.xlu0 %2760
        %2762 = vrot.lane.b32.xlu0 %v2695, 40
        %v2763 = vpop.permute.xlu0 %2762
        %2764 = vrot.lane.b32.xlu0 %v2709, 40
        %v2765 = vpop.permute.xlu0 %2764
        %2766 = vrot.lane.b32.xlu0 %v2719, 40
        %v2767 = vpop.permute.xlu0 %2766
        %2768 = vrot.lane.b32.xlu0 %v2729, 40
        %v2769 = vpop.permute.xlu0 %2768
        %2770 = vrot.lane.b32.xlu0 %v2739, 40
        %v2771 = vpop.permute.xlu0 %2770
        %vm2788 = vcmask 355648
        %2789 = vst.msk [vmem:[#allocation3] sm:$0xf] %vm2788, %v2741
        %2790 = vst.msk [vmem:[#allocation3 + $0x4] sm:$0xf] %vm2788, %v2743
        %2791 = vst.msk [vmem:[#allocation3 + $0x8] sm:$0xf] %vm2788, %v2745
        %2792 = vst.msk [vmem:[#allocation3 + $0xc] sm:$0xf] %vm2788, %v2747
        %2793 = vst.msk [vmem:[#allocation3 + $0x10] sm:$0xf] %vm2788, %v2749
        %2794 = vst.msk [vmem:[#allocation3 + $0x14] sm:$0xf] %vm2788, %v2751
        %2795 = vst.msk [vmem:[#allocation3 + $0x18] sm:$0xf] %vm2788, %v2753
        %2796 = vst.msk [vmem:[#allocation3 + $0x1c] sm:$0xf] %vm2788, %v2755
        %2797 = vst.msk [vmem:[#allocation3 + $0x20] sm:$0xf] %vm2788, %v2757
        %2798 = vst.msk [vmem:[#allocation3 + $0x24] sm:$0xf] %vm2788, %v2759
        %2799 = vst.msk [vmem:[#allocation3 + $0x28] sm:$0xf] %vm2788, %v2761
        %2800 = vst.msk [vmem:[#allocation3 + $0x2c] sm:$0xf] %vm2788, %v2763
        %2801 = vst.msk [vmem:[#allocation3 + $0x30] sm:$0xf] %vm2788, %v2765
        %2802 = vst.msk [vmem:[#allocation3 + $0x34] sm:$0xf] %vm2788, %v2767
        %2803 = vst.msk [vmem:[#allocation3 + $0x38] sm:$0xf] %vm2788, %v2769
        %2804 = vst.msk [vmem:[#allocation3 + $0x3c] sm:$0xf] %vm2788, %v2771
        %v2805 = vld [vmem:[%s805] sm:$0xe]
        %v2806 = vld [vmem:[%s805 + $0x4] sm:$0xf]
        %v2807 = vld [vmem:[%s805 + $0x8] sm:$0xf]
        %v2808 = vld [vmem:[%s805 + $0xc] sm:$0xf]
        %v2809 = vld [vmem:[%s805 + $0x10] sm:$0x1]
        %v2810 = vld [vmem:[%s805 + $0x18] sm:$0xe]
        %v2811 = vld [vmem:[%s805 + $0x1c] sm:$0xf]
        %v2812 = vld [vmem:[%s805 + $0x20] sm:$0xf]
        %v2813 = vld [vmem:[%s805 + $0x24] sm:$0xf]
        %v2814 = vld [vmem:[%s805 + $0x28] sm:$0x1]
        %v2815 = vld [vmem:[%s805 + $0x30] sm:$0xe]
        %v2816 = vld [vmem:[%s805 + $0x34] sm:$0xf]
        %v2817 = vld [vmem:[%s805 + $0x38] sm:$0xf]
        %v2818 = vld [vmem:[%s805 + $0x3c] sm:$0xf]
        %v2819 = vld [vmem:[%s805 + $0x40] sm:$0x1]
        %v2820 = vld [vmem:[%s805 + $0x48] sm:$0xe]
        %v2821 = vld [vmem:[%s805 + $0x4c] sm:$0xf]
        %v2822 = vld [vmem:[%s805 + $0x50] sm:$0xf]
        %v2823 = vld [vmem:[%s805 + $0x54] sm:$0xf]
        %v2824 = vld [vmem:[%s805 + $0x58] sm:$0x1]
        %v2845 = vrot.slane %v2805, 5
        %v2846 = vrot.slane %v2845, 4
        %v2847 = vrot.slane %v2806, 5
        %v2848 = vsel %vm1227, %v2846, %v2847
        %v2849 = vrot.slane %v2847, 4
        %v2850 = vrot.slane %v2807, 5
        %v2851 = vsel %vm1227, %v2849, %v2850
        %v2852 = vrot.slane %v2850, 4
        %v2853 = vrot.slane %v2808, 5
        %v2854 = vsel %vm1227, %v2852, %v2853
        %v2855 = vrot.slane %v2853, 4
        %v2856 = vrot.slane %v2809, 5
        %v2857 = vsel %vm1227, %v2855, %v2856
        %v2858 = vrot.slane %v2810, 5
        %v2859 = vrot.slane %v2858, 4
        %v2860 = vrot.slane %v2811, 5
        %v2861 = vsel %vm1227, %v2859, %v2860
        %v2862 = vrot.slane %v2860, 4
        %v2863 = vrot.slane %v2812, 5
        %v2864 = vsel %vm1227, %v2862, %v2863
        %v2865 = vrot.slane %v2863, 4
        %v2866 = vrot.slane %v2813, 5
        %v2867 = vsel %vm1227, %v2865, %v2866
        %v2868 = vrot.slane %v2866, 4
        %v2869 = vrot.slane %v2814, 5
        %v2870 = vsel %vm1227, %v2868, %v2869
        %v2871 = vrot.slane %v2815, 5
        %v2872 = vrot.slane %v2871, 4
        %v2873 = vrot.slane %v2816, 5
        %v2874 = vsel %vm1227, %v2872, %v2873
        %v2875 = vrot.slane %v2873, 4
        %v2876 = vrot.slane %v2817, 5
        %v2877 = vsel %vm1227, %v2875, %v2876
        %v2878 = vrot.slane %v2876, 4
        %v2879 = vrot.slane %v2818, 5
        %v2880 = vsel %vm1227, %v2878, %v2879
        %v2881 = vrot.slane %v2879, 4
        %v2882 = vrot.slane %v2819, 5
        %v2883 = vsel %vm1227, %v2881, %v2882
        %v2884 = vrot.slane %v2820, 5
        %v2885 = vrot.slane %v2884, 4
        %v2886 = vrot.slane %v2821, 5
        %v2887 = vsel %vm1227, %v2885, %v2886
        %v2888 = vrot.slane %v2886, 4
        %v2889 = vrot.slane %v2822, 5
        %v2890 = vsel %vm1227, %v2888, %v2889
        %v2891 = vrot.slane %v2889, 4
        %v2892 = vrot.slane %v2823, 5
        %v2893 = vsel %vm1227, %v2891, %v2892
        %v2894 = vrot.slane %v2892, 4
        %v2895 = vrot.slane %v2824, 5
        %v2896 = vsel %vm1227, %v2894, %v2895
        %2897 = vrot.lane.b32.xlu0 %v2848, 44
        %v2898 = vpop.permute.xlu0 %2897
        %2899 = vrot.lane.b32.xlu0 %v2851, 44
        %v2900 = vpop.permute.xlu0 %2899
        %2901 = vrot.lane.b32.xlu0 %v2854, 44
        %v2902 = vpop.permute.xlu0 %2901
        %2903 = vrot.lane.b32.xlu0 %v2857, 44
        %v2904 = vpop.permute.xlu0 %2903
        %2905 = vrot.lane.b32.xlu0 %v2861, 44
        %v2906 = vpop.permute.xlu0 %2905
        %2907 = vrot.lane.b32.xlu0 %v2864, 44
        %v2908 = vpop.permute.xlu0 %2907
        %2909 = vrot.lane.b32.xlu0 %v2867, 44
        %v2910 = vpop.permute.xlu0 %2909
        %2911 = vrot.lane.b32.xlu0 %v2870, 44
        %v2912 = vpop.permute.xlu0 %2911
        %2913 = vrot.lane.b32.xlu0 %v2874, 44
        %v2914 = vpop.permute.xlu0 %2913
        %2915 = vrot.lane.b32.xlu0 %v2877, 44
        %v2916 = vpop.permute.xlu0 %2915
        %2917 = vrot.lane.b32.xlu0 %v2880, 44
        %v2918 = vpop.permute.xlu0 %2917
        %2919 = vrot.lane.b32.xlu0 %v2883, 44
        %v2920 = vpop.permute.xlu0 %2919
        %2921 = vrot.lane.b32.xlu0 %v2887, 44
        %v2922 = vpop.permute.xlu0 %2921
        %2923 = vrot.lane.b32.xlu0 %v2890, 44
        %v2924 = vpop.permute.xlu0 %2923
        %2925 = vrot.lane.b32.xlu0 %v2893, 44
        %v2926 = vpop.permute.xlu0 %2925
        %2927 = vrot.lane.b32.xlu0 %v2896, 44
        %v2928 = vpop.permute.xlu0 %2927
        %vm2945 = vcmask 388448
        %2946 = vst.msk [vmem:[#allocation3] sm:$0xf] %vm2945, %v2898
        %2947 = vst.msk [vmem:[#allocation3 + $0x4] sm:$0xf] %vm2945, %v2900
        %2948 = vst.msk [vmem:[#allocation3 + $0x8] sm:$0xf] %vm2945, %v2902
        %2949 = vst.msk [vmem:[#allocation3 + $0xc] sm:$0xf] %vm2945, %v2904
        %2950 = vst.msk [vmem:[#allocation3 + $0x10] sm:$0xf] %vm2945, %v2906
        %2951 = vst.msk [vmem:[#allocation3 + $0x14] sm:$0xf] %vm2945, %v2908
        %2952 = vst.msk [vmem:[#allocation3 + $0x18] sm:$0xf] %vm2945, %v2910
        %2953 = vst.msk [vmem:[#allocation3 + $0x1c] sm:$0xf] %vm2945, %v2912
        %2954 = vst.msk [vmem:[#allocation3 + $0x20] sm:$0xf] %vm2945, %v2914
        %2955 = vst.msk [vmem:[#allocation3 + $0x24] sm:$0xf] %vm2945, %v2916
        %2956 = vst.msk [vmem:[#allocation3 + $0x28] sm:$0xf] %vm2945, %v2918
        %2957 = vst.msk [vmem:[#allocation3 + $0x2c] sm:$0xf] %vm2945, %v2920
        %2958 = vst.msk [vmem:[#allocation3 + $0x30] sm:$0xf] %vm2945, %v2922
        %2959 = vst.msk [vmem:[#allocation3 + $0x34] sm:$0xf] %vm2945, %v2924
        %2960 = vst.msk [vmem:[#allocation3 + $0x38] sm:$0xf] %vm2945, %v2926
        %2961 = vst.msk [vmem:[#allocation3 + $0x3c] sm:$0xf] %vm2945, %v2928
        %v2962 = vld [vmem:[%s805] sm:$0x8]
        %v2963 = vld [vmem:[%s805 + $0x4] sm:$0xf]
        %v2964 = vld [vmem:[%s805 + $0x8] sm:$0xf]
        %v2965 = vld [vmem:[%s805 + $0xc] sm:$0xf]
        %v2966 = vld [vmem:[%s805 + $0x10] sm:$0x7]
        %v2967 = vld [vmem:[%s805 + $0x18] sm:$0x8]
        %v2968 = vld [vmem:[%s805 + $0x1c] sm:$0xf]
        %v2969 = vld [vmem:[%s805 + $0x20] sm:$0xf]
        %v2970 = vld [vmem:[%s805 + $0x24] sm:$0xf]
        %v2971 = vld [vmem:[%s805 + $0x28] sm:$0x7]
        %v2972 = vld [vmem:[%s805 + $0x30] sm:$0x8]
        %v2973 = vld [vmem:[%s805 + $0x34] sm:$0xf]
        %v2974 = vld [vmem:[%s805 + $0x38] sm:$0xf]
        %v2975 = vld [vmem:[%s805 + $0x3c] sm:$0xf]
        %v2976 = vld [vmem:[%s805 + $0x40] sm:$0x7]
        %v2977 = vld [vmem:[%s805 + $0x48] sm:$0x8]
        %v2978 = vld [vmem:[%s805 + $0x4c] sm:$0xf]
        %v2979 = vld [vmem:[%s805 + $0x50] sm:$0xf]
        %v2980 = vld [vmem:[%s805 + $0x54] sm:$0xf]
        %v2981 = vld [vmem:[%s805 + $0x58] sm:$0x7]
        %v3002 = vrot.slane %v2962, 7
        %v3003 = vrot.slane %v3002, 4
        %v3004 = vrot.slane %v2963, 7
        %v3005 = vsel %vm1387, %v3003, %v3004
        %v3006 = vrot.slane %v3004, 4
        %v3007 = vrot.slane %v2964, 7
        %v3008 = vsel %vm1387, %v3006, %v3007
        %v3009 = vrot.slane %v3007, 4
        %v3010 = vrot.slane %v2965, 7
        %v3011 = vsel %vm1387, %v3009, %v3010
        %v3012 = vrot.slane %v3010, 4
        %v3013 = vrot.slane %v2966, 7
        %v3014 = vsel %vm1387, %v3012, %v3013
        %v3015 = vrot.slane %v2967, 7
        %v3016 = vrot.slane %v3015, 4
        %v3017 = vrot.slane %v2968, 7
        %v3018 = vsel %vm1387, %v3016, %v3017
        %v3019 = vrot.slane %v3017, 4
        %v3020 = vrot.slane %v2969, 7
        %v3021 = vsel %vm1387, %v3019, %v3020
        %v3022 = vrot.slane %v3020, 4
        %v3023 = vrot.slane %v2970, 7
        %v3024 = vsel %vm1387, %v3022, %v3023
        %v3025 = vrot.slane %v3023, 4
        %v3026 = vrot.slane %v2971, 7
        %v3027 = vsel %vm1387, %v3025, %v3026
        %v3028 = vrot.slane %v2972, 7
        %v3029 = vrot.slane %v3028, 4
        %v3030 = vrot.slane %v2973, 7
        %v3031 = vsel %vm1387, %v3029, %v3030
        %v3032 = vrot.slane %v3030, 4
        %v3033 = vrot.slane %v2974, 7
        %v3034 = vsel %vm1387, %v3032, %v3033
        %v3035 = vrot.slane %v3033, 4
        %v3036 = vrot.slane %v2975, 7
        %v3037 = vsel %vm1387, %v3035, %v3036
        %v3038 = vrot.slane %v3036, 4
        %v3039 = vrot.slane %v2976, 7
        %v3040 = vsel %vm1387, %v3038, %v3039
        %v3041 = vrot.slane %v2977, 7
        %v3042 = vrot.slane %v3041, 4
        %v3043 = vrot.slane %v2978, 7
        %v3044 = vsel %vm1387, %v3042, %v3043
        %v3045 = vrot.slane %v3043, 4
        %v3046 = vrot.slane %v2979, 7
        %v3047 = vsel %vm1387, %v3045, %v3046
        %v3048 = vrot.slane %v3046, 4
        %v3049 = vrot.slane %v2980, 7
        %v3050 = vsel %vm1387, %v3048, %v3049
        %v3051 = vrot.slane %v3049, 4
        %v3052 = vrot.slane %v2981, 7
        %v3053 = vsel %vm1387, %v3051, %v3052
        %3054 = vrot.lane.b32.xlu0 %v3005, 48
        %v3055 = vpop.permute.xlu0 %3054
        %3056 = vrot.lane.b32.xlu0 %v3008, 48
        %v3057 = vpop.permute.xlu0 %3056
        %3058 = vrot.lane.b32.xlu0 %v3011, 48
        %v3059 = vpop.permute.xlu0 %3058
        %3060 = vrot.lane.b32.xlu0 %v3014, 48
        %v3061 = vpop.permute.xlu0 %3060
        %3062 = vrot.lane.b32.xlu0 %v3018, 48
        %v3063 = vpop.permute.xlu0 %3062
        %3064 = vrot.lane.b32.xlu0 %v3021, 48
        %v3065 = vpop.permute.xlu0 %3064
        %3066 = vrot.lane.b32.xlu0 %v3024, 48
        %v3067 = vpop.permute.xlu0 %3066
        %3068 = vrot.lane.b32.xlu0 %v3027, 48
        %v3069 = vpop.permute.xlu0 %3068
        %3070 = vrot.lane.b32.xlu0 %v3031, 48
        %v3071 = vpop.permute.xlu0 %3070
        %3072 = vrot.lane.b32.xlu0 %v3034, 48
        %v3073 = vpop.permute.xlu0 %3072
        %3074 = vrot.lane.b32.xlu0 %v3037, 48
        %v3075 = vpop.permute.xlu0 %3074
        %3076 = vrot.lane.b32.xlu0 %v3040, 48
        %v3077 = vpop.permute.xlu0 %3076
        %3078 = vrot.lane.b32.xlu0 %v3044, 48
        %v3079 = vpop.permute.xlu0 %3078
        %3080 = vrot.lane.b32.xlu0 %v3047, 48
        %v3081 = vpop.permute.xlu0 %3080
        %3082 = vrot.lane.b32.xlu0 %v3050, 48
        %v3083 = vpop.permute.xlu0 %3082
        %3084 = vrot.lane.b32.xlu0 %v3053, 48
        %v3085 = vpop.permute.xlu0 %3084
        %vm3102 = vcmask 421248
        %3103 = vst.msk [vmem:[#allocation3] sm:$0xf] %vm3102, %v3055
        %3104 = vst.msk [vmem:[#allocation3 + $0x4] sm:$0xf] %vm3102, %v3057
        %3105 = vst.msk [vmem:[#allocation3 + $0x8] sm:$0xf] %vm3102, %v3059
        %3106 = vst.msk [vmem:[#allocation3 + $0xc] sm:$0xf] %vm3102, %v3061
        %3107 = vst.msk [vmem:[#allocation3 + $0x10] sm:$0xf] %vm3102, %v3063
        %3108 = vst.msk [vmem:[#allocation3 + $0x14] sm:$0xf] %vm3102, %v3065
        %3109 = vst.msk [vmem:[#allocation3 + $0x18] sm:$0xf] %vm3102, %v3067
        %3110 = vst.msk [vmem:[#allocation3 + $0x1c] sm:$0xf] %vm3102, %v3069
        %3111 = vst.msk [vmem:[#allocation3 + $0x20] sm:$0xf] %vm3102, %v3071
        %3112 = vst.msk [vmem:[#allocation3 + $0x24] sm:$0xf] %vm3102, %v3073
        %3113 = vst.msk [vmem:[#allocation3 + $0x28] sm:$0xf] %vm3102, %v3075
        %3114 = vst.msk [vmem:[#allocation3 + $0x2c] sm:$0xf] %vm3102, %v3077
        %3115 = vst.msk [vmem:[#allocation3 + $0x30] sm:$0xf] %vm3102, %v3079
        %3116 = vst.msk [vmem:[#allocation3 + $0x34] sm:$0xf] %vm3102, %v3081
        %3117 = vst.msk [vmem:[#allocation3 + $0x38] sm:$0xf] %vm3102, %v3083
        %3118 = vst.msk [vmem:[#allocation3 + $0x3c] sm:$0xf] %vm3102, %v3085
        %v3119 = vld [vmem:[%s805] sm:$0x8]
        %v3120 = vld [vmem:[%s805 + $0x4] sm:$0xf]
        %v3121 = vld [vmem:[%s805 + $0x8] sm:$0xf]
        %v3122 = vld [vmem:[%s805 + $0xc] sm:$0xf]
        %v3123 = vld [vmem:[%s805 + $0x10] sm:$0xf]
        %v3124 = vld [vmem:[%s805 + $0x18] sm:$0x8]
        %v3125 = vld [vmem:[%s805 + $0x1c] sm:$0xf]
        %v3126 = vld [vmem:[%s805 + $0x20] sm:$0xf]
        %v3127 = vld [vmem:[%s805 + $0x24] sm:$0xf]
        %v3128 = vld [vmem:[%s805 + $0x28] sm:$0xf]
        %v3129 = vld [vmem:[%s805 + $0x30] sm:$0x8]
        %v3130 = vld [vmem:[%s805 + $0x34] sm:$0xf]
        %v3131 = vld [vmem:[%s805 + $0x38] sm:$0xf]
        %v3132 = vld [vmem:[%s805 + $0x3c] sm:$0xf]
        %v3133 = vld [vmem:[%s805 + $0x40] sm:$0xf]
        %v3134 = vld [vmem:[%s805 + $0x48] sm:$0x8]
        %v3135 = vld [vmem:[%s805 + $0x4c] sm:$0xf]
        %v3136 = vld [vmem:[%s805 + $0x50] sm:$0xf]
        %v3137 = vld [vmem:[%s805 + $0x54] sm:$0xf]
        %v3138 = vld [vmem:[%s805 + $0x58] sm:$0xf]
        %v3140 = vshrl.u32 %v3119, 16
        %v3142 = vrot.slane %v3140, 7
        %v3143 = vrot.slane %v3142, 4
        %v3145 = vshrl.u32 %v3120, 16
        %v3147 = vrot.slane %v3145, 7
        %v3148 = vshll.u32 %v3120, 16
        %v3150 = vor.u32 %v3147, %v3148
        %v3151 = vsel %vm1527, %v3143, %v3150
        %v3152 = vrot.slane %v3147, 4
        %v3154 = vshrl.u32 %v3121, 16
        %v3156 = vrot.slane %v3154, 7
        %v3157 = vshll.u32 %v3121, 16
        %v3159 = vor.u32 %v3156, %v3157
        %v3160 = vsel %vm1527, %v3152, %v3159
        %v3161 = vrot.slane %v3156, 4
        %v3163 = vshrl.u32 %v3122, 16
        %v3165 = vrot.slane %v3163, 7
        %v3166 = vshll.u32 %v3122, 16
        %v3168 = vor.u32 %v3165, %v3166
        %v3169 = vsel %vm1527, %v3161, %v3168
        %v3170 = vrot.slane %v3165, 4
        %v3172 = vshrl.u32 %v3123, 16
        %v3174 = vrot.slane %v3172, 7
        %v3175 = vshll.u32 %v3123, 16
        %v3177 = vor.u32 %v3174, %v3175
        %v3178 = vsel %vm1527, %v3170, %v3177
        %v3180 = vshrl.u32 %v3124, 16
        %v3182 = vrot.slane %v3180, 7
        %v3183 = vrot.slane %v3182, 4
        %v3185 = vshrl.u32 %v3125, 16
        %v3187 = vrot.slane %v3185, 7
        %v3188 = vshll.u32 %v3125, 16
        %v3190 = vor.u32 %v3187, %v3188
        %v3191 = vsel %vm1527, %v3183, %v3190
        %v3192 = vrot.slane %v3187, 4
        %v3194 = vshrl.u32 %v3126, 16
        %v3196 = vrot.slane %v3194, 7
        %v3197 = vshll.u32 %v3126, 16
        %v3199 = vor.u32 %v3196, %v3197
        %v3200 = vsel %vm1527, %v3192, %v3199
        %v3201 = vrot.slane %v3196, 4
        %v3203 = vshrl.u32 %v3127, 16
        %v3205 = vrot.slane %v3203, 7
        %v3206 = vshll.u32 %v3127, 16
        %v3208 = vor.u32 %v3205, %v3206
        %v3209 = vsel %vm1527, %v3201, %v3208
        %v3210 = vrot.slane %v3205, 4
        %v3212 = vshrl.u32 %v3128, 16
        %v3214 = vrot.slane %v3212, 7
        %v3215 = vshll.u32 %v3128, 16
        %v3217 = vor.u32 %v3214, %v3215
        %v3218 = vsel %vm1527, %v3210, %v3217
        %v3220 = vshrl.u32 %v3129, 16
        %v3222 = vrot.slane %v3220, 7
        %v3223 = vrot.slane %v3222, 4
        %v3225 = vshrl.u32 %v3130, 16
        %v3227 = vrot.slane %v3225, 7
        %v3228 = vshll.u32 %v3130, 16
        %v3230 = vor.u32 %v3227, %v3228
        %v3231 = vsel %vm1527, %v3223, %v3230
        %v3232 = vrot.slane %v3227, 4
        %v3234 = vshrl.u32 %v3131, 16
        %v3236 = vrot.slane %v3234, 7
        %v3237 = vshll.u32 %v3131, 16
        %v3239 = vor.u32 %v3236, %v3237
        %v3240 = vsel %vm1527, %v3232, %v3239
        %v3241 = vrot.slane %v3236, 4
        %v3243 = vshrl.u32 %v3132, 16
        %v3245 = vrot.slane %v3243, 7
        %v3246 = vshll.u32 %v3132, 16
        %v3248 = vor.u32 %v3245, %v3246
        %v3249 = vsel %vm1527, %v3241, %v3248
        %v3250 = vrot.slane %v3245, 4
        %v3252 = vshrl.u32 %v3133, 16
        %v3254 = vrot.slane %v3252, 7
        %v3255 = vshll.u32 %v3133, 16
        %v3257 = vor.u32 %v3254, %v3255
        %v3258 = vsel %vm1527, %v3250, %v3257
        %v3260 = vshrl.u32 %v3134, 16
        %v3262 = vrot.slane %v3260, 7
        %v3263 = vrot.slane %v3262, 4
        %v3265 = vshrl.u32 %v3135, 16
        %v3267 = vrot.slane %v3265, 7
        %v3268 = vshll.u32 %v3135, 16
        %v3270 = vor.u32 %v3267, %v3268
        %v3271 = vsel %vm1527, %v3263, %v3270
        %v3272 = vrot.slane %v3267, 4
        %v3274 = vshrl.u32 %v3136, 16
        %v3276 = vrot.slane %v3274, 7
        %v3277 = vshll.u32 %v3136, 16
        %v3279 = vor.u32 %v3276, %v3277
        %v3280 = vsel %vm1527, %v3272, %v3279
        %v3281 = vrot.slane %v3276, 4
        %v3283 = vshrl.u32 %v3137, 16
        %v3285 = vrot.slane %v3283, 7
        %v3286 = vshll.u32 %v3137, 16
        %v3288 = vor.u32 %v3285, %v3286
        %v3289 = vsel %vm1527, %v3281, %v3288
        %v3290 = vrot.slane %v3285, 4
        %v3292 = vshrl.u32 %v3138, 16
        %v3294 = vrot.slane %v3292, 7
        %v3295 = vshll.u32 %v3138, 16
        %v3297 = vor.u32 %v3294, %v3295
        %v3298 = vsel %vm1527, %v3290, %v3297
        %3299 = vrot.lane.b32.xlu0 %v3151, 52
        %v3300 = vpop.permute.xlu0 %3299
        %3301 = vrot.lane.b32.xlu0 %v3160, 52
        %v3302 = vpop.permute.xlu0 %3301
        %3303 = vrot.lane.b32.xlu0 %v3169, 52
        %v3304 = vpop.permute.xlu0 %3303
        %3305 = vrot.lane.b32.xlu0 %v3178, 52
        %v3306 = vpop.permute.xlu0 %3305
        %3307 = vrot.lane.b32.xlu0 %v3191, 52
        %v3308 = vpop.permute.xlu0 %3307
        %3309 = vrot.lane.b32.xlu0 %v3200, 52
        %v3310 = vpop.permute.xlu0 %3309
        %3311 = vrot.lane.b32.xlu0 %v3209, 52
        %v3312 = vpop.permute.xlu0 %3311
        %3313 = vrot.lane.b32.xlu0 %v3218, 52
        %v3314 = vpop.permute.xlu0 %3313
        %3315 = vrot.lane.b32.xlu0 %v3231, 52
        %v3316 = vpop.permute.xlu0 %3315
        %3317 = vrot.lane.b32.xlu0 %v3240, 52
        %v3318 = vpop.permute.xlu0 %3317
        %3319 = vrot.lane.b32.xlu0 %v3249, 52
        %v3320 = vpop.permute.xlu0 %3319
        %3321 = vrot.lane.b32.xlu0 %v3258, 52
        %v3322 = vpop.permute.xlu0 %3321
        %3323 = vrot.lane.b32.xlu0 %v3271, 52
        %v3324 = vpop.permute.xlu0 %3323
        %3325 = vrot.lane.b32.xlu0 %v3280, 52
        %v3326 = vpop.permute.xlu0 %3325
        %3327 = vrot.lane.b32.xlu0 %v3289, 52
        %v3328 = vpop.permute.xlu0 %3327
        %3329 = vrot.lane.b32.xlu0 %v3298, 52
        %v3330 = vpop.permute.xlu0 %3329
        %vm3347 = vcmask 454048
        %3348 = vst.msk [vmem:[#allocation3] sm:$0xf] %vm3347, %v3300
        %3349 = vst.msk [vmem:[#allocation3 + $0x4] sm:$0xf] %vm3347, %v3302
        %3350 = vst.msk [vmem:[#allocation3 + $0x8] sm:$0xf] %vm3347, %v3304
        %3351 = vst.msk [vmem:[#allocation3 + $0xc] sm:$0xf] %vm3347, %v3306
        %3352 = vst.msk [vmem:[#allocation3 + $0x10] sm:$0xf] %vm3347, %v3308
        %3353 = vst.msk [vmem:[#allocation3 + $0x14] sm:$0xf] %vm3347, %v3310
        %3354 = vst.msk [vmem:[#allocation3 + $0x18] sm:$0xf] %vm3347, %v3312
        %3355 = vst.msk [vmem:[#allocation3 + $0x1c] sm:$0xf] %vm3347, %v3314
        %3356 = vst.msk [vmem:[#allocation3 + $0x20] sm:$0xf] %vm3347, %v3316
        %3357 = vst.msk [vmem:[#allocation3 + $0x24] sm:$0xf] %vm3347, %v3318
        %3358 = vst.msk [vmem:[#allocation3 + $0x28] sm:$0xf] %vm3347, %v3320
        %3359 = vst.msk [vmem:[#allocation3 + $0x2c] sm:$0xf] %vm3347, %v3322
        %3360 = vst.msk [vmem:[#allocation3 + $0x30] sm:$0xf] %vm3347, %v3324
        %3361 = vst.msk [vmem:[#allocation3 + $0x34] sm:$0xf] %vm3347, %v3326
        %3362 = vst.msk [vmem:[#allocation3 + $0x38] sm:$0xf] %vm3347, %v3328
        %3363 = vst.msk [vmem:[#allocation3 + $0x3c] sm:$0xf] %vm3347, %v3330
        %v3364 = vld [vmem:[%s805 + $0x4] sm:$0xf]
        %v3365 = vld [vmem:[%s805 + $0x8] sm:$0xf]
        %v3366 = vld [vmem:[%s805 + $0xc] sm:$0xf]
        %v3367 = vld [vmem:[%s805 + $0x10] sm:$0xf]
        %v3368 = vld [vmem:[%s805 + $0x1c] sm:$0xf]
        %v3369 = vld [vmem:[%s805 + $0x20] sm:$0xf]
        %v3370 = vld [vmem:[%s805 + $0x24] sm:$0xf]
        %v3371 = vld [vmem:[%s805 + $0x28] sm:$0xf]
        %v3372 = vld [vmem:[%s805 + $0x34] sm:$0xf]
        %v3373 = vld [vmem:[%s805 + $0x38] sm:$0xf]
        %v3374 = vld [vmem:[%s805 + $0x3c] sm:$0xf]
        %v3375 = vld [vmem:[%s805 + $0x40] sm:$0xf]
        %v3376 = vld [vmem:[%s805 + $0x4c] sm:$0xf]
        %v3377 = vld [vmem:[%s805 + $0x50] sm:$0xf]
        %v3378 = vld [vmem:[%s805 + $0x54] sm:$0xf]
        %v3379 = vld [vmem:[%s805 + $0x58] sm:$0xf]
        %3396 = vrot.lane.b32.xlu0 %v3364, 56
        %v3397 = vpop.permute.xlu0 %3396
        %3398 = vrot.lane.b32.xlu0 %v3365, 56
        %v3399 = vpop.permute.xlu0 %3398
        %3400 = vrot.lane.b32.xlu0 %v3366, 56
        %v3401 = vpop.permute.xlu0 %3400
        %3402 = vrot.lane.b32.xlu0 %v3367, 56
        %v3403 = vpop.permute.xlu0 %3402
        %3404 = vrot.lane.b32.xlu0 %v3368, 56
        %v3405 = vpop.permute.xlu0 %3404
        %3406 = vrot.lane.b32.xlu0 %v3369, 56
        %v3407 = vpop.permute.xlu0 %3406
        %3408 = vrot.lane.b32.xlu0 %v3370, 56
        %v3409 = vpop.permute.xlu0 %3408
        %3410 = vrot.lane.b32.xlu0 %v3371, 56
        %v3411 = vpop.permute.xlu0 %3410
        %3412 = vrot.lane.b32.xlu0 %v3372, 56
        %v3413 = vpop.permute.xlu0 %3412
        %3414 = vrot.lane.b32.xlu0 %v3373, 56
        %v3415 = vpop.permute.xlu0 %3414
        %3416 = vrot.lane.b32.xlu0 %v3374, 56
        %v3417 = vpop.permute.xlu0 %3416
        %3418 = vrot.lane.b32.xlu0 %v3375, 56
        %v3419 = vpop.permute.xlu0 %3418
        %3420 = vrot.lane.b32.xlu0 %v3376, 56
        %v3421 = vpop.permute.xlu0 %3420
        %3422 = vrot.lane.b32.xlu0 %v3377, 56
        %v3423 = vpop.permute.xlu0 %3422
        %3424 = vrot.lane.b32.xlu0 %v3378, 56
        %v3425 = vpop.permute.xlu0 %3424
        %3426 = vrot.lane.b32.xlu0 %v3379, 56
        %v3427 = vpop.permute.xlu0 %3426
        %vm3444 = vcmask 486848
        %3445 = vst.msk [vmem:[#allocation3] sm:$0xf] %vm3444, %v3397
        %3446 = vst.msk [vmem:[#allocation3 + $0x4] sm:$0xf] %vm3444, %v3399
        %3447 = vst.msk [vmem:[#allocation3 + $0x8] sm:$0xf] %vm3444, %v3401
        %3448 = vst.msk [vmem:[#allocation3 + $0xc] sm:$0xf] %vm3444, %v3403
        %3449 = vst.msk [vmem:[#allocation3 + $0x10] sm:$0xf] %vm3444, %v3405
        %3450 = vst.msk [vmem:[#allocation3 + $0x14] sm:$0xf] %vm3444, %v3407
        %3451 = vst.msk [vmem:[#allocation3 + $0x18] sm:$0xf] %vm3444, %v3409
        %3452 = vst.msk [vmem:[#allocation3 + $0x1c] sm:$0xf] %vm3444, %v3411
        %3453 = vst.msk [vmem:[#allocation3 + $0x20] sm:$0xf] %vm3444, %v3413
        %3454 = vst.msk [vmem:[#allocation3 + $0x24] sm:$0xf] %vm3444, %v3415
        %3455 = vst.msk [vmem:[#allocation3 + $0x28] sm:$0xf] %vm3444, %v3417
        %3456 = vst.msk [vmem:[#allocation3 + $0x2c] sm:$0xf] %vm3444, %v3419
        %3457 = vst.msk [vmem:[#allocation3 + $0x30] sm:$0xf] %vm3444, %v3421
        %3458 = vst.msk [vmem:[#allocation3 + $0x34] sm:$0xf] %vm3444, %v3423
        %3459 = vst.msk [vmem:[#allocation3 + $0x38] sm:$0xf] %vm3444, %v3425
        %3460 = vst.msk [vmem:[#allocation3 + $0x3c] sm:$0xf] %vm3444, %v3427
        %v3461 = vld [vmem:[%s805 + $0x4] sm:$0xc]
        %v3462 = vld [vmem:[%s805 + $0x8] sm:$0xf]
        %v3463 = vld [vmem:[%s805 + $0xc] sm:$0xf]
        %v3464 = vld [vmem:[%s805 + $0x10] sm:$0xf]
        %v3465 = vld [vmem:[%s805 + $0x14] sm:$0x3]
        %v3466 = vld [vmem:[%s805 + $0x1c] sm:$0xc]
        %v3467 = vld [vmem:[%s805 + $0x20] sm:$0xf]
        %v3468 = vld [vmem:[%s805 + $0x24] sm:$0xf]
        %v3469 = vld [vmem:[%s805 + $0x28] sm:$0xf]
        %v3470 = vld [vmem:[%s805 + $0x2c] sm:$0x3]
        %v3471 = vld [vmem:[%s805 + $0x34] sm:$0xc]
        %v3472 = vld [vmem:[%s805 + $0x38] sm:$0xf]
        %v3473 = vld [vmem:[%s805 + $0x3c] sm:$0xf]
        %v3474 = vld [vmem:[%s805 + $0x40] sm:$0xf]
        %v3475 = vld [vmem:[%s805 + $0x44] sm:$0x3]
        %v3476 = vld [vmem:[%s805 + $0x4c] sm:$0xc]
        %v3477 = vld [vmem:[%s805 + $0x50] sm:$0xf]
        %v3478 = vld [vmem:[%s805 + $0x54] sm:$0xf]
        %v3479 = vld [vmem:[%s805 + $0x58] sm:$0xf]
        %v3480 = vld [vmem:[%s805 + $0x5c] sm:$0x3]
        %v3501 = vrot.slane %v3461, 6
        %v3502 = vrot.slane %v3501, 4
        %v3503 = vrot.slane %v3462, 6
        %v3504 = vsel %vm1892, %v3502, %v3503
        %v3505 = vrot.slane %v3503, 4
        %v3506 = vrot.slane %v3463, 6
        %v3507 = vsel %vm1892, %v3505, %v3506
        %v3508 = vrot.slane %v3506, 4
        %v3509 = vrot.slane %v3464, 6
        %v3510 = vsel %vm1892, %v3508, %v3509
        %v3511 = vrot.slane %v3509, 4
        %v3512 = vrot.slane %v3465, 6
        %v3513 = vsel %vm1892, %v3511, %v3512
        %v3514 = vrot.slane %v3466, 6
        %v3515 = vrot.slane %v3514, 4
        %v3516 = vrot.slane %v3467, 6
        %v3517 = vsel %vm1892, %v3515, %v3516
        %v3518 = vrot.slane %v3516, 4
        %v3519 = vrot.slane %v3468, 6
        %v3520 = vsel %vm1892, %v3518, %v3519
        %v3521 = vrot.slane %v3519, 4
        %v3522 = vrot.slane %v3469, 6
        %v3523 = vsel %vm1892, %v3521, %v3522
        %v3524 = vrot.slane %v3522, 4
        %v3525 = vrot.slane %v3470, 6
        %v3526 = vsel %vm1892, %v3524, %v3525
        %v3527 = vrot.slane %v3471, 6
        %v3528 = vrot.slane %v3527, 4
        %v3529 = vrot.slane %v3472, 6
        %v3530 = vsel %vm1892, %v3528, %v3529
        %v3531 = vrot.slane %v3529, 4
        %v3532 = vrot.slane %v3473, 6
        %v3533 = vsel %vm1892, %v3531, %v3532
        %v3534 = vrot.slane %v3532, 4
        %v3535 = vrot.slane %v3474, 6
        %v3536 = vsel %vm1892, %v3534, %v3535
        %v3537 = vrot.slane %v3535, 4
        %v3538 = vrot.slane %v3475, 6
        %v3539 = vsel %vm1892, %v3537, %v3538
        %v3540 = vrot.slane %v3476, 6
        %v3541 = vrot.slane %v3540, 4
        %v3542 = vrot.slane %v3477, 6
        %v3543 = vsel %vm1892, %v3541, %v3542
        %v3544 = vrot.slane %v3542, 4
        %v3545 = vrot.slane %v3478, 6
        %v3546 = vsel %vm1892, %v3544, %v3545
        %v3547 = vrot.slane %v3545, 4
        %v3548 = vrot.slane %v3479, 6
        %v3549 = vsel %vm1892, %v3547, %v3548
        %v3550 = vrot.slane %v3548, 4
        %v3551 = vrot.slane %v3480, 6
        %v3552 = vsel %vm1892, %v3550, %v3551
        %3553 = vrot.lane.b32.xlu0 %v3504, 60
        %v3554 = vpop.permute.xlu0 %3553
        %3555 = vrot.lane.b32.xlu0 %v3507, 60
        %v3556 = vpop.permute.xlu0 %3555
        %3557 = vrot.lane.b32.xlu0 %v3510, 60
        %v3558 = vpop.permute.xlu0 %3557
        %3559 = vrot.lane.b32.xlu0 %v3513, 60
        %v3560 = vpop.permute.xlu0 %3559
        %3561 = vrot.lane.b32.xlu0 %v3517, 60
        %v3562 = vpop.permute.xlu0 %3561
        %3563 = vrot.lane.b32.xlu0 %v3520, 60
        %v3564 = vpop.permute.xlu0 %3563
        %3565 = vrot.lane.b32.xlu0 %v3523, 60
        %v3566 = vpop.permute.xlu0 %3565
        %3567 = vrot.lane.b32.xlu0 %v3526, 60
        %v3568 = vpop.permute.xlu0 %3567
        %3569 = vrot.lane.b32.xlu0 %v3530, 60
        %v3570 = vpop.permute.xlu0 %3569
        %3571 = vrot.lane.b32.xlu0 %v3533, 60
        %v3572 = vpop.permute.xlu0 %3571
        %3573 = vrot.lane.b32.xlu0 %v3536, 60
        %v3574 = vpop.permute.xlu0 %3573
        %3575 = vrot.lane.b32.xlu0 %v3539, 60
        %v3576 = vpop.permute.xlu0 %3575
        %3577 = vrot.lane.b32.xlu0 %v3543, 60
        %v3578 = vpop.permute.xlu0 %3577
        %3579 = vrot.lane.b32.xlu0 %v3546, 60
        %v3580 = vpop.permute.xlu0 %3579
        %3581 = vrot.lane.b32.xlu0 %v3549, 60
        %v3582 = vpop.permute.xlu0 %3581
        %3583 = vrot.lane.b32.xlu0 %v3552, 60
        %v3584 = vpop.permute.xlu0 %3583
        %vm3601 = vcmask 519648
        %3602 = vst.msk [vmem:[#allocation3] sm:$0xf] %vm3601, %v3554
        %3603 = vst.msk [vmem:[#allocation3 + $0x4] sm:$0xf] %vm3601, %v3556
        %3604 = vst.msk [vmem:[#allocation3 + $0x8] sm:$0xf] %vm3601, %v3558
        %3605 = vst.msk [vmem:[#allocation3 + $0xc] sm:$0xf] %vm3601, %v3560
        %3606 = vst.msk [vmem:[#allocation3 + $0x10] sm:$0xf] %vm3601, %v3562
        %3607 = vst.msk [vmem:[#allocation3 + $0x14] sm:$0xf] %vm3601, %v3564
        %3608 = vst.msk [vmem:[#allocation3 + $0x18] sm:$0xf] %vm3601, %v3566
        %3609 = vst.msk [vmem:[#allocation3 + $0x1c] sm:$0xf] %vm3601, %v3568
        %3610 = vst.msk [vmem:[#allocation3 + $0x20] sm:$0xf] %vm3601, %v3570
        %3611 = vst.msk [vmem:[#allocation3 + $0x24] sm:$0xf] %vm3601, %v3572
        %3612 = vst.msk [vmem:[#allocation3 + $0x28] sm:$0xf] %vm3601, %v3574
        %3613 = vst.msk [vmem:[#allocation3 + $0x2c] sm:$0xf] %vm3601, %v3576
        %3614 = vst.msk [vmem:[#allocation3 + $0x30] sm:$0xf] %vm3601, %v3578
        %3615 = vst.msk [vmem:[#allocation3 + $0x34] sm:$0xf] %vm3601, %v3580
        %3616 = vst.msk [vmem:[#allocation3 + $0x38] sm:$0xf] %vm3601, %v3582
        %3617 = vst.msk [vmem:[#allocation3 + $0x3c] sm:$0xf] %vm3601, %v3584
        %v3618 = vld [vmem:[%s805 + $0x4] sm:$0xc]
        %v3619 = vld [vmem:[%s805 + $0x8] sm:$0xf]
        %v3620 = vld [vmem:[%s805 + $0xc] sm:$0xf]
        %v3621 = vld [vmem:[%s805 + $0x10] sm:$0xf]
        %v3622 = vld [vmem:[%s805 + $0x14] sm:$0x7]
        %v3623 = vld [vmem:[%s805 + $0x1c] sm:$0xc]
        %v3624 = vld [vmem:[%s805 + $0x20] sm:$0xf]
        %v3625 = vld [vmem:[%s805 + $0x24] sm:$0xf]
        %v3626 = vld [vmem:[%s805 + $0x28] sm:$0xf]
        %v3627 = vld [vmem:[%s805 + $0x2c] sm:$0x7]
        %v3628 = vld [vmem:[%s805 + $0x34] sm:$0xc]
        %v3629 = vld [vmem:[%s805 + $0x38] sm:$0xf]
        %v3630 = vld [vmem:[%s805 + $0x3c] sm:$0xf]
        %v3631 = vld [vmem:[%s805 + $0x40] sm:$0xf]
        %v3632 = vld [vmem:[%s805 + $0x44] sm:$0x7]
        %v3633 = vld [vmem:[%s805 + $0x4c] sm:$0xc]
        %v3634 = vld [vmem:[%s805 + $0x50] sm:$0xf]
        %v3635 = vld [vmem:[%s805 + $0x54] sm:$0xf]
        %v3636 = vld [vmem:[%s805 + $0x58] sm:$0xf]
        %v3637 = vld [vmem:[%s805 + $0x5c] sm:$0x7]
        %v3639 = vshrl.u32 %v3618, 16
        %v3641 = vrot.slane %v3639, 6
        %v3642 = vshll.u32 %v3618, 16
        %v3644 = vrot.slane %v3642, 7
        %v3645 = vor.u32 %v3641, %v3644
        %v3646 = vrot.slane %v3645, 4
        %v3648 = vshrl.u32 %v3619, 16
        %v3650 = vrot.slane %v3648, 6
        %v3651 = vshll.u32 %v3619, 16
        %v3653 = vrot.slane %v3651, 7
        %v3654 = vor.u32 %v3650, %v3653
        %v3655 = vsel %vm2032, %v3646, %v3654
        %v3656 = vrot.slane %v3654, 4
        %v3658 = vshrl.u32 %v3620, 16
        %v3660 = vrot.slane %v3658, 6
        %v3661 = vshll.u32 %v3620, 16
        %v3663 = vrot.slane %v3661, 7
        %v3664 = vor.u32 %v3660, %v3663
        %v3665 = vsel %vm2032, %v3656, %v3664
        %v3666 = vrot.slane %v3664, 4
        %v3668 = vshrl.u32 %v3621, 16
        %v3670 = vrot.slane %v3668, 6
        %v3671 = vshll.u32 %v3621, 16
        %v3673 = vrot.slane %v3671, 7
        %v3674 = vor.u32 %v3670, %v3673
        %v3675 = vsel %vm2032, %v3666, %v3674
        %v3676 = vrot.slane %v3674, 4
        %v3678 = vshrl.u32 %v3622, 16
        %v3680 = vrot.slane %v3678, 6
        %v3681 = vshll.u32 %v3622, 16
        %v3683 = vrot.slane %v3681, 7
        %v3684 = vor.u32 %v3680, %v3683
        %v3685 = vsel %vm2032, %v3676, %v3684
        %v3687 = vshrl.u32 %v3623, 16
        %v3689 = vrot.slane %v3687, 6
        %v3690 = vshll.u32 %v3623, 16
        %v3692 = vrot.slane %v3690, 7
        %v3693 = vor.u32 %v3689, %v3692
        %v3694 = vrot.slane %v3693, 4
        %v3696 = vshrl.u32 %v3624, 16
        %v3698 = vrot.slane %v3696, 6
        %v3699 = vshll.u32 %v3624, 16
        %v3701 = vrot.slane %v3699, 7
        %v3702 = vor.u32 %v3698, %v3701
        %v3703 = vsel %vm2032, %v3694, %v3702
        %v3704 = vrot.slane %v3702, 4
        %v3706 = vshrl.u32 %v3625, 16
        %v3708 = vrot.slane %v3706, 6
        %v3709 = vshll.u32 %v3625, 16
        %v3711 = vrot.slane %v3709, 7
        %v3712 = vor.u32 %v3708, %v3711
        %v3713 = vsel %vm2032, %v3704, %v3712
        %v3714 = vrot.slane %v3712, 4
        %v3716 = vshrl.u32 %v3626, 16
        %v3718 = vrot.slane %v3716, 6
        %v3719 = vshll.u32 %v3626, 16
        %v3721 = vrot.slane %v3719, 7
        %v3722 = vor.u32 %v3718, %v3721
        %v3723 = vsel %vm2032, %v3714, %v3722
        %v3724 = vrot.slane %v3722, 4
        %v3726 = vshrl.u32 %v3627, 16
        %v3728 = vrot.slane %v3726, 6
        %v3729 = vshll.u32 %v3627, 16
        %v3731 = vrot.slane %v3729, 7
        %v3732 = vor.u32 %v3728, %v3731
        %v3733 = vsel %vm2032, %v3724, %v3732
        %v3735 = vshrl.u32 %v3628, 16
        %v3737 = vrot.slane %v3735, 6
        %v3738 = vshll.u32 %v3628, 16
        %v3740 = vrot.slane %v3738, 7
        %v3741 = vor.u32 %v3737, %v3740
        %v3742 = vrot.slane %v3741, 4
        %v3744 = vshrl.u32 %v3629, 16
        %v3746 = vrot.slane %v3744, 6
        %v3747 = vshll.u32 %v3629, 16
        %v3749 = vrot.slane %v3747, 7
        %v3750 = vor.u32 %v3746, %v3749
        %v3751 = vsel %vm2032, %v3742, %v3750
        %v3752 = vrot.slane %v3750, 4
        %v3754 = vshrl.u32 %v3630, 16
        %v3756 = vrot.slane %v3754, 6
        %v3757 = vshll.u32 %v3630, 16
        %v3759 = vrot.slane %v3757, 7
        %v3760 = vor.u32 %v3756, %v3759
        %v3761 = vsel %vm2032, %v3752, %v3760
        %v3762 = vrot.slane %v3760, 4
        %v3764 = vshrl.u32 %v3631, 16
        %v3766 = vrot.slane %v3764, 6
        %v3767 = vshll.u32 %v3631, 16
        %v3769 = vrot.slane %v3767, 7
        %v3770 = vor.u32 %v3766, %v3769
        %v3771 = vsel %vm2032, %v3762, %v3770
        %v3772 = vrot.slane %v3770, 4
        %v3774 = vshrl.u32 %v3632, 16
        %v3776 = vrot.slane %v3774, 6
        %v3777 = vshll.u32 %v3632, 16
        %v3779 = vrot.slane %v3777, 7
        %v3780 = vor.u32 %v3776, %v3779
        %v3781 = vsel %vm2032, %v3772, %v3780
        %v3783 = vshrl.u32 %v3633, 16
        %v3785 = vrot.slane %v3783, 6
        %v3786 = vshll.u32 %v3633, 16
        %v3788 = vrot.slane %v3786, 7
        %v3789 = vor.u32 %v3785, %v3788
        %v3790 = vrot.slane %v3789, 4
        %v3792 = vshrl.u32 %v3634, 16
        %v3794 = vrot.slane %v3792, 6
        %v3795 = vshll.u32 %v3634, 16
        %v3797 = vrot.slane %v3795, 7
        %v3798 = vor.u32 %v3794, %v3797
        %v3799 = vsel %vm2032, %v3790, %v3798
        %v3800 = vrot.slane %v3798, 4
        %v3802 = vshrl.u32 %v3635, 16
        %v3804 = vrot.slane %v3802, 6
        %v3805 = vshll.u32 %v3635, 16
        %v3807 = vrot.slane %v3805, 7
        %v3808 = vor.u32 %v3804, %v3807
        %v3809 = vsel %vm2032, %v3800, %v3808
        %v3810 = vrot.slane %v3808, 4
        %v3812 = vshrl.u32 %v3636, 16
        %v3814 = vrot.slane %v3812, 6
        %v3815 = vshll.u32 %v3636, 16
        %v3817 = vrot.slane %v3815, 7
        %v3818 = vor.u32 %v3814, %v3817
        %v3819 = vsel %vm2032, %v3810, %v3818
        %v3820 = vrot.slane %v3818, 4
        %v3822 = vshrl.u32 %v3637, 16
        %v3824 = vrot.slane %v3822, 6
        %v3825 = vshll.u32 %v3637, 16
        %v3827 = vrot.slane %v3825, 7
        %v3828 = vor.u32 %v3824, %v3827
        %v3829 = vsel %vm2032, %v3820, %v3828
        %3830 = vrot.lane.b32.xlu0 %v3655, 64
        %v3831 = vpop.permute.xlu0 %3830
        %3832 = vrot.lane.b32.xlu0 %v3665, 64
        %v3833 = vpop.permute.xlu0 %3832
        %3834 = vrot.lane.b32.xlu0 %v3675, 64
        %v3835 = vpop.permute.xlu0 %3834
        %3836 = vrot.lane.b32.xlu0 %v3685, 64
        %v3837 = vpop.permute.xlu0 %3836
        %3838 = vrot.lane.b32.xlu0 %v3703, 64
        %v3839 = vpop.permute.xlu0 %3838
        %3840 = vrot.lane.b32.xlu0 %v3713, 64
        %v3841 = vpop.permute.xlu0 %3840
        %3842 = vrot.lane.b32.xlu0 %v3723, 64
        %v3843 = vpop.permute.xlu0 %3842
        %3844 = vrot.lane.b32.xlu0 %v3733, 64
        %v3845 = vpop.permute.xlu0 %3844
        %3846 = vrot.lane.b32.xlu0 %v3751, 64
        %v3847 = vpop.permute.xlu0 %3846
        %3848 = vrot.lane.b32.xlu0 %v3761, 64
        %v3849 = vpop.permute.xlu0 %3848
        %3850 = vrot.lane.b32.xlu0 %v3771, 64
        %v3851 = vpop.permute.xlu0 %3850
        %3852 = vrot.lane.b32.xlu0 %v3781, 64
        %v3853 = vpop.permute.xlu0 %3852
        %3854 = vrot.lane.b32.xlu0 %v3799, 64
        %v3855 = vpop.permute.xlu0 %3854
        %3856 = vrot.lane.b32.xlu0 %v3809, 64
        %v3857 = vpop.permute.xlu0 %3856
        %3858 = vrot.lane.b32.xlu0 %v3819, 64
        %v3859 = vpop.permute.xlu0 %3858
        %3860 = vrot.lane.b32.xlu0 %v3829, 64
        %v3861 = vpop.permute.xlu0 %3860
        %vm3878 = vcmask 552448
        %3879 = vst.msk [vmem:[#allocation3] sm:$0xf] %vm3878, %v3831
        %3880 = vst.msk [vmem:[#allocation3 + $0x4] sm:$0xf] %vm3878, %v3833
        %3881 = vst.msk [vmem:[#allocation3 + $0x8] sm:$0xf] %vm3878, %v3835
        %3882 = vst.msk [vmem:[#allocation3 + $0xc] sm:$0xf] %vm3878, %v3837
        %3883 = vst.msk [vmem:[#allocation3 + $0x10] sm:$0xf] %vm3878, %v3839
        %3884 = vst.msk [vmem:[#allocation3 + $0x14] sm:$0xf] %vm3878, %v3841
        %3885 = vst.msk [vmem:[#allocation3 + $0x18] sm:$0xf] %vm3878, %v3843
        %3886 = vst.msk [vmem:[#allocation3 + $0x1c] sm:$0xf] %vm3878, %v3845
        %3887 = vst.msk [vmem:[#allocation3 + $0x20] sm:$0xf] %vm3878, %v3847
        %3888 = vst.msk [vmem:[#allocation3 + $0x24] sm:$0xf] %vm3878, %v3849
        %3889 = vst.msk [vmem:[#allocation3 + $0x28] sm:$0xf] %vm3878, %v3851
        %3890 = vst.msk [vmem:[#allocation3 + $0x2c] sm:$0xf] %vm3878, %v3853
        %3891 = vst.msk [vmem:[#allocation3 + $0x30] sm:$0xf] %vm3878, %v3855
        %3892 = vst.msk [vmem:[#allocation3 + $0x34] sm:$0xf] %vm3878, %v3857
        %3893 = vst.msk [vmem:[#allocation3 + $0x38] sm:$0xf] %vm3878, %v3859
        %3894 = vst.msk [vmem:[#allocation3 + $0x3c] sm:$0xf] %vm3878, %v3861
        %v3895 = vld [vmem:[%s805 + $0x4] sm:$0x8]
        %v3896 = vld [vmem:[%s805 + $0x8] sm:$0xf]
        %v3897 = vld [vmem:[%s805 + $0xc] sm:$0xf]
        %v3898 = vld [vmem:[%s805 + $0x10] sm:$0xf]
        %v3899 = vld [vmem:[%s805 + $0x14] sm:$0x7]
        %v3900 = vld [vmem:[%s805 + $0x1c] sm:$0x8]
        %v3901 = vld [vmem:[%s805 + $0x20] sm:$0xf]
        %v3902 = vld [vmem:[%s805 + $0x24] sm:$0xf]
        %v3903 = vld [vmem:[%s805 + $0x28] sm:$0xf]
        %v3904 = vld [vmem:[%s805 + $0x2c] sm:$0x7]
        %v3905 = vld [vmem:[%s805 + $0x34] sm:$0x8]
        %v3906 = vld [vmem:[%s805 + $0x38] sm:$0xf]
        %v3907 = vld [vmem:[%s805 + $0x3c] sm:$0xf]
        %v3908 = vld [vmem:[%s805 + $0x40] sm:$0xf]
        %v3909 = vld [vmem:[%s805 + $0x44] sm:$0x7]
        %v3910 = vld [vmem:[%s805 + $0x4c] sm:$0x8]
        %v3911 = vld [vmem:[%s805 + $0x50] sm:$0xf]
        %v3912 = vld [vmem:[%s805 + $0x54] sm:$0xf]
        %v3913 = vld [vmem:[%s805 + $0x58] sm:$0xf]
        %v3914 = vld [vmem:[%s805 + $0x5c] sm:$0x7]
        %v3935 = vrot.slane %v3895, 7
        %v3936 = vrot.slane %v3935, 4
        %v3937 = vrot.slane %v3896, 7
        %v3938 = vsel %vm1387, %v3936, %v3937
        %v3939 = vrot.slane %v3937, 4
        %v3940 = vrot.slane %v3897, 7
        %v3941 = vsel %vm1387, %v3939, %v3940
        %v3942 = vrot.slane %v3940, 4
        %v3943 = vrot.slane %v3898, 7
        %v3944 = vsel %vm1387, %v3942, %v3943
        %v3945 = vrot.slane %v3943, 4
        %v3946 = vrot.slane %v3899, 7
        %v3947 = vsel %vm1387, %v3945, %v3946
        %v3948 = vrot.slane %v3900, 7
        %v3949 = vrot.slane %v3948, 4
        %v3950 = vrot.slane %v3901, 7
        %v3951 = vsel %vm1387, %v3949, %v3950
        %v3952 = vrot.slane %v3950, 4
        %v3953 = vrot.slane %v3902, 7
        %v3954 = vsel %vm1387, %v3952, %v3953
        %v3955 = vrot.slane %v3953, 4
        %v3956 = vrot.slane %v3903, 7
        %v3957 = vsel %vm1387, %v3955, %v3956
        %v3958 = vrot.slane %v3956, 4
        %v3959 = vrot.slane %v3904, 7
        %v3960 = vsel %vm1387, %v3958, %v3959
        %v3961 = vrot.slane %v3905, 7
        %v3962 = vrot.slane %v3961, 4
        %v3963 = vrot.slane %v3906, 7
        %v3964 = vsel %vm1387, %v3962, %v3963
        %v3965 = vrot.slane %v3963, 4
        %v3966 = vrot.slane %v3907, 7
        %v3967 = vsel %vm1387, %v3965, %v3966
        %v3968 = vrot.slane %v3966, 4
        %v3969 = vrot.slane %v3908, 7
        %v3970 = vsel %vm1387, %v3968, %v3969
        %v3971 = vrot.slane %v3969, 4
        %v3972 = vrot.slane %v3909, 7
        %v3973 = vsel %vm1387, %v3971, %v3972
        %v3974 = vrot.slane %v3910, 7
        %v3975 = vrot.slane %v3974, 4
        %v3976 = vrot.slane %v3911, 7
        %v3977 = vsel %vm1387, %v3975, %v3976
        %v3978 = vrot.slane %v3976, 4
        %v3979 = vrot.slane %v3912, 7
        %v3980 = vsel %vm1387, %v3978, %v3979
        %v3981 = vrot.slane %v3979, 4
        %v3982 = vrot.slane %v3913, 7
        %v3983 = vsel %vm1387, %v3981, %v3982
        %v3984 = vrot.slane %v3982, 4
        %v3985 = vrot.slane %v3914, 7
        %v3986 = vsel %vm1387, %v3984, %v3985
        %3987 = vrot.lane.b32.xlu0 %v3938, 68
        %v3988 = vpop.permute.xlu0 %3987
        %3989 = vrot.lane.b32.xlu0 %v3941, 68
        %v3990 = vpop.permute.xlu0 %3989
        %3991 = vrot.lane.b32.xlu0 %v3944, 68
        %v3992 = vpop.permute.xlu0 %3991
        %3993 = vrot.lane.b32.xlu0 %v3947, 68
        %v3994 = vpop.permute.xlu0 %3993
        %3995 = vrot.lane.b32.xlu0 %v3951, 68
        %v3996 = vpop.permute.xlu0 %3995
        %3997 = vrot.lane.b32.xlu0 %v3954, 68
        %v3998 = vpop.permute.xlu0 %3997
        %3999 = vrot.lane.b32.xlu0 %v3957, 68
        %v4000 = vpop.permute.xlu0 %3999
        %4001 = vrot.lane.b32.xlu0 %v3960, 68
        %v4002 = vpop.permute.xlu0 %4001
        %4003 = vrot.lane.b32.xlu0 %v3964, 68
        %v4004 = vpop.permute.xlu0 %4003
        %4005 = vrot.lane.b32.xlu0 %v3967, 68
        %v4006 = vpop.permute.xlu0 %4005
        %4007 = vrot.lane.b32.xlu0 %v3970, 68
        %v4008 = vpop.permute.xlu0 %4007
        %4009 = vrot.lane.b32.xlu0 %v3973, 68
        %v4010 = vpop.permute.xlu0 %4009
        %4011 = vrot.lane.b32.xlu0 %v3977, 68
        %v4012 = vpop.permute.xlu0 %4011
        %4013 = vrot.lane.b32.xlu0 %v3980, 68
        %v4014 = vpop.permute.xlu0 %4013
        %4015 = vrot.lane.b32.xlu0 %v3983, 68
        %v4016 = vpop.permute.xlu0 %4015
        %4017 = vrot.lane.b32.xlu0 %v3986, 68
        %v4018 = vpop.permute.xlu0 %4017
        %vm4035 = vcmask 585248
        %4036 = vst.msk [vmem:[#allocation3] sm:$0xf] %vm4035, %v3988
        %4037 = vst.msk [vmem:[#allocation3 + $0x4] sm:$0xf] %vm4035, %v3990
        %4038 = vst.msk [vmem:[#allocation3 + $0x8] sm:$0xf] %vm4035, %v3992
        %4039 = vst.msk [vmem:[#allocation3 + $0xc] sm:$0xf] %vm4035, %v3994
        %4040 = vst.msk [vmem:[#allocation3 + $0x10] sm:$0xf] %vm4035, %v3996
        %4041 = vst.msk [vmem:[#allocation3 + $0x14] sm:$0xf] %vm4035, %v3998
        %4042 = vst.msk [vmem:[#allocation3 + $0x18] sm:$0xf] %vm4035, %v4000
        %4043 = vst.msk [vmem:[#allocation3 + $0x1c] sm:$0xf] %vm4035, %v4002
        %4044 = vst.msk [vmem:[#allocation3 + $0x20] sm:$0xf] %vm4035, %v4004
        %4045 = vst.msk [vmem:[#allocation3 + $0x24] sm:$0xf] %vm4035, %v4006
        %4046 = vst.msk [vmem:[#allocation3 + $0x28] sm:$0xf] %vm4035, %v4008
        %4047 = vst.msk [vmem:[#allocation3 + $0x2c] sm:$0xf] %vm4035, %v4010
        %4048 = vst.msk [vmem:[#allocation3 + $0x30] sm:$0xf] %vm4035, %v4012
        %4049 = vst.msk [vmem:[#allocation3 + $0x34] sm:$0xf] %vm4035, %v4014
        %4050 = vst.msk [vmem:[#allocation3 + $0x38] sm:$0xf] %vm4035, %v4016
        %4051 = vst.msk [vmem:[#allocation3 + $0x3c] sm:$0xf] %vm4035, %v4018
        %v4052 = vld [vmem:[%s812] sm:$0xf]
        %v4053 = vld [vmem:[%s812 + $0x4] sm:$0xf]
        %v4054 = vld [vmem:[%s812 + $0x8] sm:$0xf]
        %v4055 = vld [vmem:[%s812 + $0xc] sm:$0xf]
        %v4056 = vld [vmem:[%s812 + $0x18] sm:$0xf]
        %v4057 = vld [vmem:[%s812 + $0x1c] sm:$0xf]
        %v4058 = vld [vmem:[%s812 + $0x20] sm:$0xf]
        %v4059 = vld [vmem:[%s812 + $0x24] sm:$0xf]
        %v4060 = vld [vmem:[%s812 + $0x30] sm:$0xf]
        %v4061 = vld [vmem:[%s812 + $0x34] sm:$0xf]
        %v4062 = vld [vmem:[%s812 + $0x38] sm:$0xf]
        %v4063 = vld [vmem:[%s812 + $0x3c] sm:$0xf]
        %v4064 = vld [vmem:[%s812 + $0x48] sm:$0xf]
        %v4065 = vld [vmem:[%s812 + $0x4c] sm:$0xf]
        %v4066 = vld [vmem:[%s812 + $0x50] sm:$0xf]
        %v4067 = vld [vmem:[%s812 + $0x54] sm:$0xf]
        %4084 = vrot.lane.b32.xlu0 %v4052, 72
        %v4085 = vpop.permute.xlu0 %4084
        %4086 = vrot.lane.b32.xlu0 %v4053, 72
        %v4087 = vpop.permute.xlu0 %4086
        %4088 = vrot.lane.b32.xlu0 %v4054, 72
        %v4089 = vpop.permute.xlu0 %4088
        %4090 = vrot.lane.b32.xlu0 %v4055, 72
        %v4091 = vpop.permute.xlu0 %4090
        %4092 = vrot.lane.b32.xlu0 %v4056, 72
        %v4093 = vpop.permute.xlu0 %4092
        %4094 = vrot.lane.b32.xlu0 %v4057, 72
        %v4095 = vpop.permute.xlu0 %4094
        %4096 = vrot.lane.b32.xlu0 %v4058, 72
        %v4097 = vpop.permute.xlu0 %4096
        %4098 = vrot.lane.b32.xlu0 %v4059, 72
        %v4099 = vpop.permute.xlu0 %4098
        %4100 = vrot.lane.b32.xlu0 %v4060, 72
        %v4101 = vpop.permute.xlu0 %4100
        %4102 = vrot.lane.b32.xlu0 %v4061, 72
        %v4103 = vpop.permute.xlu0 %4102
        %4104 = vrot.lane.b32.xlu0 %v4062, 72
        %v4105 = vpop.permute.xlu0 %4104
        %4106 = vrot.lane.b32.xlu0 %v4063, 72
        %v4107 = vpop.permute.xlu0 %4106
        %4108 = vrot.lane.b32.xlu0 %v4064, 72
        %v4109 = vpop.permute.xlu0 %4108
        %4110 = vrot.lane.b32.xlu0 %v4065, 72
        %v4111 = vpop.permute.xlu0 %4110
        %4112 = vrot.lane.b32.xlu0 %v4066, 72
        %v4113 = vpop.permute.xlu0 %4112
        %4114 = vrot.lane.b32.xlu0 %v4067, 72
        %v4115 = vpop.permute.xlu0 %4114
        %vm4132 = vcmask 618048
        %4133 = vst.msk [vmem:[#allocation3] sm:$0xf] %vm4132, %v4085
        %4134 = vst.msk [vmem:[#allocation3 + $0x4] sm:$0xf] %vm4132, %v4087
        %4135 = vst.msk [vmem:[#allocation3 + $0x8] sm:$0xf] %vm4132, %v4089
        %4136 = vst.msk [vmem:[#allocation3 + $0xc] sm:$0xf] %vm4132, %v4091
        %4137 = vst.msk [vmem:[#allocation3 + $0x10] sm:$0xf] %vm4132, %v4093
        %4138 = vst.msk [vmem:[#allocation3 + $0x14] sm:$0xf] %vm4132, %v4095
        %4139 = vst.msk [vmem:[#allocation3 + $0x18] sm:$0xf] %vm4132, %v4097
        %4140 = vst.msk [vmem:[#allocation3 + $0x1c] sm:$0xf] %vm4132, %v4099
        %4141 = vst.msk [vmem:[#allocation3 + $0x20] sm:$0xf] %vm4132, %v4101
        %4142 = vst.msk [vmem:[#allocation3 + $0x24] sm:$0xf] %vm4132, %v4103
        %4143 = vst.msk [vmem:[#allocation3 + $0x28] sm:$0xf] %vm4132, %v4105
        %4144 = vst.msk [vmem:[#allocation3 + $0x2c] sm:$0xf] %vm4132, %v4107
        %4145 = vst.msk [vmem:[#allocation3 + $0x30] sm:$0xf] %vm4132, %v4109
        %4146 = vst.msk [vmem:[#allocation3 + $0x34] sm:$0xf] %vm4132, %v4111
        %4147 = vst.msk [vmem:[#allocation3 + $0x38] sm:$0xf] %vm4132, %v4113
        %4148 = vst.msk [vmem:[#allocation3 + $0x3c] sm:$0xf] %vm4132, %v4115
        %v4149 = vld [vmem:[%s812] sm:$0xf]
        %v4150 = vld [vmem:[%s812 + $0x4] sm:$0xf]
        %v4151 = vld [vmem:[%s812 + $0x8] sm:$0xf]
        %v4152 = vld [vmem:[%s812 + $0xc] sm:$0xf]
        %v4153 = vld [vmem:[%s812 + $0x10] sm:$0x1]
        %v4154 = vld [vmem:[%s812 + $0x18] sm:$0xf]
        %v4155 = vld [vmem:[%s812 + $0x1c] sm:$0xf]
        %v4156 = vld [vmem:[%s812 + $0x20] sm:$0xf]
        %v4157 = vld [vmem:[%s812 + $0x24] sm:$0xf]
        %v4158 = vld [vmem:[%s812 + $0x28] sm:$0x1]
        %v4159 = vld [vmem:[%s812 + $0x30] sm:$0xf]
        %v4160 = vld [vmem:[%s812 + $0x34] sm:$0xf]
        %v4161 = vld [vmem:[%s812 + $0x38] sm:$0xf]
        %v4162 = vld [vmem:[%s812 + $0x3c] sm:$0xf]
        %v4163 = vld [vmem:[%s812 + $0x40] sm:$0x1]
        %v4164 = vld [vmem:[%s812 + $0x48] sm:$0xf]
        %v4165 = vld [vmem:[%s812 + $0x4c] sm:$0xf]
        %v4166 = vld [vmem:[%s812 + $0x50] sm:$0xf]
        %v4167 = vld [vmem:[%s812 + $0x54] sm:$0xf]
        %v4168 = vld [vmem:[%s812 + $0x58] sm:$0x1]
        %v4170 = vshrl.u32 %v4149, 16
        %v4172 = vrot.slane %v4170, 4
        %v4173 = vshll.u32 %v4149, 16
        %v4175 = vrot.slane %v4173, 5
        %v4176 = vor.u32 %v4172, %v4175
        %v4177 = vrot.slane %v4176, 4
        %v4179 = vshll.u32 %v4150, 16
        %v4181 = vrot.slane %v4179, 5
        %v4182 = vsel %vm943, %v4177, %v4181
        %v4183 = vshrl.u32 %v4150, 16
        %v4185 = vrot.slane %v4183, 4
        %v4186 = vor.u32 %v4185, %v4181
        %v4187 = vrot.slane %v4186, 4
        %v4189 = vshll.u32 %v4151, 16
        %v4191 = vrot.slane %v4189, 5
        %v4192 = vsel %vm943, %v4187, %v4191
        %v4193 = vshrl.u32 %v4151, 16
        %v4195 = vrot.slane %v4193, 4
        %v4196 = vor.u32 %v4195, %v4191
        %v4197 = vrot.slane %v4196, 4
        %v4199 = vshll.u32 %v4152, 16
        %v4201 = vrot.slane %v4199, 5
        %v4202 = vsel %vm943, %v4197, %v4201
        %v4203 = vshrl.u32 %v4152, 16
        %v4205 = vrot.slane %v4203, 4
        %v4206 = vor.u32 %v4205, %v4201
        %v4207 = vrot.slane %v4206, 4
        %v4209 = vshll.u32 %v4153, 16
        %v4211 = vrot.slane %v4209, 5
        %v4212 = vsel %vm943, %v4207, %v4211
        %v4214 = vshrl.u32 %v4154, 16
        %v4216 = vrot.slane %v4214, 4
        %v4217 = vshll.u32 %v4154, 16
        %v4219 = vrot.slane %v4217, 5
        %v4220 = vor.u32 %v4216, %v4219
        %v4221 = vrot.slane %v4220, 4
        %v4223 = vshll.u32 %v4155, 16
        %v4225 = vrot.slane %v4223, 5
        %v4226 = vsel %vm943, %v4221, %v4225
        %v4227 = vshrl.u32 %v4155, 16
        %v4229 = vrot.slane %v4227, 4
        %v4230 = vor.u32 %v4229, %v4225
        %v4231 = vrot.slane %v4230, 4
        %v4233 = vshll.u32 %v4156, 16
        %v4235 = vrot.slane %v4233, 5
        %v4236 = vsel %vm943, %v4231, %v4235
        %v4237 = vshrl.u32 %v4156, 16
        %v4239 = vrot.slane %v4237, 4
        %v4240 = vor.u32 %v4239, %v4235
        %v4241 = vrot.slane %v4240, 4
        %v4243 = vshll.u32 %v4157, 16
        %v4245 = vrot.slane %v4243, 5
        %v4246 = vsel %vm943, %v4241, %v4245
        %v4247 = vshrl.u32 %v4157, 16
        %v4249 = vrot.slane %v4247, 4
        %v4250 = vor.u32 %v4249, %v4245
        %v4251 = vrot.slane %v4250, 4
        %v4253 = vshll.u32 %v4158, 16
        %v4255 = vrot.slane %v4253, 5
        %v4256 = vsel %vm943, %v4251, %v4255
        %v4258 = vshrl.u32 %v4159, 16
        %v4260 = vrot.slane %v4258, 4
        %v4261 = vshll.u32 %v4159, 16
        %v4263 = vrot.slane %v4261, 5
        %v4264 = vor.u32 %v4260, %v4263
        %v4265 = vrot.slane %v4264, 4
        %v4267 = vshll.u32 %v4160, 16
        %v4269 = vrot.slane %v4267, 5
        %v4270 = vsel %vm943, %v4265, %v4269
        %v4271 = vshrl.u32 %v4160, 16
        %v4273 = vrot.slane %v4271, 4
        %v4274 = vor.u32 %v4273, %v4269
        %v4275 = vrot.slane %v4274, 4
        %v4277 = vshll.u32 %v4161, 16
        %v4279 = vrot.slane %v4277, 5
        %v4280 = vsel %vm943, %v4275, %v4279
        %v4281 = vshrl.u32 %v4161, 16
        %v4283 = vrot.slane %v4281, 4
        %v4284 = vor.u32 %v4283, %v4279
        %v4285 = vrot.slane %v4284, 4
        %v4287 = vshll.u32 %v4162, 16
        %v4289 = vrot.slane %v4287, 5
        %v4290 = vsel %vm943, %v4285, %v4289
        %v4291 = vshrl.u32 %v4162, 16
        %v4293 = vrot.slane %v4291, 4
        %v4294 = vor.u32 %v4293, %v4289
        %v4295 = vrot.slane %v4294, 4
        %v4297 = vshll.u32 %v4163, 16
        %v4299 = vrot.slane %v4297, 5
        %v4300 = vsel %vm943, %v4295, %v4299
        %v4302 = vshrl.u32 %v4164, 16
        %v4304 = vrot.slane %v4302, 4
        %v4305 = vshll.u32 %v4164, 16
        %v4307 = vrot.slane %v4305, 5
        %v4308 = vor.u32 %v4304, %v4307
        %v4309 = vrot.slane %v4308, 4
        %v4311 = vshll.u32 %v4165, 16
        %v4313 = vrot.slane %v4311, 5
        %v4314 = vsel %vm943, %v4309, %v4313
        %v4315 = vshrl.u32 %v4165, 16
        %v4317 = vrot.slane %v4315, 4
        %v4318 = vor.u32 %v4317, %v4313
        %v4319 = vrot.slane %v4318, 4
        %v4321 = vshll.u32 %v4166, 16
        %v4323 = vrot.slane %v4321, 5
        %v4324 = vsel %vm943, %v4319, %v4323
        %v4325 = vshrl.u32 %v4166, 16
        %v4327 = vrot.slane %v4325, 4
        %v4328 = vor.u32 %v4327, %v4323
        %v4329 = vrot.slane %v4328, 4
        %v4331 = vshll.u32 %v4167, 16
        %v4333 = vrot.slane %v4331, 5
        %v4334 = vsel %vm943, %v4329, %v4333
        %v4335 = vshrl.u32 %v4167, 16
        %v4337 = vrot.slane %v4335, 4
        %v4338 = vor.u32 %v4337, %v4333
        %v4339 = vrot.slane %v4338, 4
        %v4341 = vshll.u32 %v4168, 16
        %v4343 = vrot.slane %v4341, 5
        %v4344 = vsel %vm943, %v4339, %v4343
        %4345 = vrot.lane.b32.xlu0 %v4182, 76
        %v4346 = vpop.permute.xlu0 %4345
        %4347 = vrot.lane.b32.xlu0 %v4192, 76
        %v4348 = vpop.permute.xlu0 %4347
        %4349 = vrot.lane.b32.xlu0 %v4202, 76
        %v4350 = vpop.permute.xlu0 %4349
        %4351 = vrot.lane.b32.xlu0 %v4212, 76
        %v4352 = vpop.permute.xlu0 %4351
        %4353 = vrot.lane.b32.xlu0 %v4226, 76
        %v4354 = vpop.permute.xlu0 %4353
        %4355 = vrot.lane.b32.xlu0 %v4236, 76
        %v4356 = vpop.permute.xlu0 %4355
        %4357 = vrot.lane.b32.xlu0 %v4246, 76
        %v4358 = vpop.permute.xlu0 %4357
        %4359 = vrot.lane.b32.xlu0 %v4256, 76
        %v4360 = vpop.permute.xlu0 %4359
        %4361 = vrot.lane.b32.xlu0 %v4270, 76
        %v4362 = vpop.permute.xlu0 %4361
        %4363 = vrot.lane.b32.xlu0 %v4280, 76
        %v4364 = vpop.permute.xlu0 %4363
        %4365 = vrot.lane.b32.xlu0 %v4290, 76
        %v4366 = vpop.permute.xlu0 %4365
        %4367 = vrot.lane.b32.xlu0 %v4300, 76
        %v4368 = vpop.permute.xlu0 %4367
        %4369 = vrot.lane.b32.xlu0 %v4314, 76
        %v4370 = vpop.permute.xlu0 %4369
        %4371 = vrot.lane.b32.xlu0 %v4324, 76
        %v4372 = vpop.permute.xlu0 %4371
        %4373 = vrot.lane.b32.xlu0 %v4334, 76
        %v4374 = vpop.permute.xlu0 %4373
        %4375 = vrot.lane.b32.xlu0 %v4344, 76
        %v4376 = vpop.permute.xlu0 %4375
        %vm4393 = vcmask 650848
        %4394 = vst.msk [vmem:[#allocation3] sm:$0xf] %vm4393, %v4346
        %4395 = vst.msk [vmem:[#allocation3 + $0x4] sm:$0xf] %vm4393, %v4348
        %4396 = vst.msk [vmem:[#allocation3 + $0x8] sm:$0xf] %vm4393, %v4350
        %4397 = vst.msk [vmem:[#allocation3 + $0xc] sm:$0xf] %vm4393, %v4352
        %4398 = vst.msk [vmem:[#allocation3 + $0x10] sm:$0xf] %vm4393, %v4354
        %4399 = vst.msk [vmem:[#allocation3 + $0x14] sm:$0xf] %vm4393, %v4356
        %4400 = vst.msk [vmem:[#allocation3 + $0x18] sm:$0xf] %vm4393, %v4358
        %4401 = vst.msk [vmem:[#allocation3 + $0x1c] sm:$0xf] %vm4393, %v4360
        %4402 = vst.msk [vmem:[#allocation3 + $0x20] sm:$0xf] %vm4393, %v4362
        %4403 = vst.msk [vmem:[#allocation3 + $0x24] sm:$0xf] %vm4393, %v4364
        %4404 = vst.msk [vmem:[#allocation3 + $0x28] sm:$0xf] %vm4393, %v4366
        %4405 = vst.msk [vmem:[#allocation3 + $0x2c] sm:$0xf] %vm4393, %v4368
        %4406 = vst.msk [vmem:[#allocation3 + $0x30] sm:$0xf] %vm4393, %v4370
        %4407 = vst.msk [vmem:[#allocation3 + $0x34] sm:$0xf] %vm4393, %v4372
        %4408 = vst.msk [vmem:[#allocation3 + $0x38] sm:$0xf] %vm4393, %v4374
        %4409 = vst.msk [vmem:[#allocation3 + $0x3c] sm:$0xf] %vm4393, %v4376
        %v4410 = vld [vmem:[%s812] sm:$0xe]
        %v4411 = vld [vmem:[%s812 + $0x4] sm:$0xf]
        %v4412 = vld [vmem:[%s812 + $0x8] sm:$0xf]
        %v4413 = vld [vmem:[%s812 + $0xc] sm:$0xf]
        %v4414 = vld [vmem:[%s812 + $0x10] sm:$0x1]
        %v4415 = vld [vmem:[%s812 + $0x18] sm:$0xe]
        %v4416 = vld [vmem:[%s812 + $0x1c] sm:$0xf]
        %v4417 = vld [vmem:[%s812 + $0x20] sm:$0xf]
        %v4418 = vld [vmem:[%s812 + $0x24] sm:$0xf]
        %v4419 = vld [vmem:[%s812 + $0x28] sm:$0x1]
        %v4420 = vld [vmem:[%s812 + $0x30] sm:$0xe]
        %v4421 = vld [vmem:[%s812 + $0x34] sm:$0xf]
        %v4422 = vld [vmem:[%s812 + $0x38] sm:$0xf]
        %v4423 = vld [vmem:[%s812 + $0x3c] sm:$0xf]
        %v4424 = vld [vmem:[%s812 + $0x40] sm:$0x1]
        %v4425 = vld [vmem:[%s812 + $0x48] sm:$0xe]
        %v4426 = vld [vmem:[%s812 + $0x4c] sm:$0xf]
        %v4427 = vld [vmem:[%s812 + $0x50] sm:$0xf]
        %v4428 = vld [vmem:[%s812 + $0x54] sm:$0xf]
        %v4429 = vld [vmem:[%s812 + $0x58] sm:$0x1]
        %v4450 = vrot.slane %v4410, 5
        %v4451 = vrot.slane %v4450, 4
        %v4452 = vrot.slane %v4411, 5
        %v4453 = vsel %vm1227, %v4451, %v4452
        %v4454 = vrot.slane %v4452, 4
        %v4455 = vrot.slane %v4412, 5
        %v4456 = vsel %vm1227, %v4454, %v4455
        %v4457 = vrot.slane %v4455, 4
        %v4458 = vrot.slane %v4413, 5
        %v4459 = vsel %vm1227, %v4457, %v4458
        %v4460 = vrot.slane %v4458, 4
        %v4461 = vrot.slane %v4414, 5
        %v4462 = vsel %vm1227, %v4460, %v4461
        %v4463 = vrot.slane %v4415, 5
        %v4464 = vrot.slane %v4463, 4
        %v4465 = vrot.slane %v4416, 5
        %v4466 = vsel %vm1227, %v4464, %v4465
        %v4467 = vrot.slane %v4465, 4
        %v4468 = vrot.slane %v4417, 5
        %v4469 = vsel %vm1227, %v4467, %v4468
        %v4470 = vrot.slane %v4468, 4
        %v4471 = vrot.slane %v4418, 5
        %v4472 = vsel %vm1227, %v4470, %v4471
        %v4473 = vrot.slane %v4471, 4
        %v4474 = vrot.slane %v4419, 5
        %v4475 = vsel %vm1227, %v4473, %v4474
        %v4476 = vrot.slane %v4420, 5
        %v4477 = vrot.slane %v4476, 4
        %v4478 = vrot.slane %v4421, 5
        %v4479 = vsel %vm1227, %v4477, %v4478
        %v4480 = vrot.slane %v4478, 4
        %v4481 = vrot.slane %v4422, 5
        %v4482 = vsel %vm1227, %v4480, %v4481
        %v4483 = vrot.slane %v4481, 4
        %v4484 = vrot.slane %v4423, 5
        %v4485 = vsel %vm1227, %v4483, %v4484
        %v4486 = vrot.slane %v4484, 4
        %v4487 = vrot.slane %v4424, 5
        %v4488 = vsel %vm1227, %v4486, %v4487
        %v4489 = vrot.slane %v4425, 5
        %v4490 = vrot.slane %v4489, 4
        %v4491 = vrot.slane %v4426, 5
        %v4492 = vsel %vm1227, %v4490, %v4491
        %v4493 = vrot.slane %v4491, 4
        %v4494 = vrot.slane %v4427, 5
        %v4495 = vsel %vm1227, %v4493, %v4494
        %v4496 = vrot.slane %v4494, 4
        %v4497 = vrot.slane %v4428, 5
        %v4498 = vsel %vm1227, %v4496, %v4497
        %v4499 = vrot.slane %v4497, 4
        %v4500 = vrot.slane %v4429, 5
        %v4501 = vsel %vm1227, %v4499, %v4500
        %4502 = vrot.lane.b32.xlu0 %v4453, 80
        %v4503 = vpop.permute.xlu0 %4502
        %4504 = vrot.lane.b32.xlu0 %v4456, 80
        %v4505 = vpop.permute.xlu0 %4504
        %4506 = vrot.lane.b32.xlu0 %v4459, 80
        %v4507 = vpop.permute.xlu0 %4506
        %4508 = vrot.lane.b32.xlu0 %v4462, 80
        %v4509 = vpop.permute.xlu0 %4508
        %4510 = vrot.lane.b32.xlu0 %v4466, 80
        %v4511 = vpop.permute.xlu0 %4510
        %4512 = vrot.lane.b32.xlu0 %v4469, 80
        %v4513 = vpop.permute.xlu0 %4512
        %4514 = vrot.lane.b32.xlu0 %v4472, 80
        %v4515 = vpop.permute.xlu0 %4514
        %4516 = vrot.lane.b32.xlu0 %v4475, 80
        %v4517 = vpop.permute.xlu0 %4516
        %4518 = vrot.lane.b32.xlu0 %v4479, 80
        %v4519 = vpop.permute.xlu0 %4518
        %4520 = vrot.lane.b32.xlu0 %v4482, 80
        %v4521 = vpop.permute.xlu0 %4520
        %4522 = vrot.lane.b32.xlu0 %v4485, 80
        %v4523 = vpop.permute.xlu0 %4522
        %4524 = vrot.lane.b32.xlu0 %v4488, 80
        %v4525 = vpop.permute.xlu0 %4524
        %4526 = vrot.lane.b32.xlu0 %v4492, 80
        %v4527 = vpop.permute.xlu0 %4526
        %4528 = vrot.lane.b32.xlu0 %v4495, 80
        %v4529 = vpop.permute.xlu0 %4528
        %4530 = vrot.lane.b32.xlu0 %v4498, 80
        %v4531 = vpop.permute.xlu0 %4530
        %4532 = vrot.lane.b32.xlu0 %v4501, 80
        %v4533 = vpop.permute.xlu0 %4532
        %vm4550 = vcmask 683648
        %4551 = vst.msk [vmem:[#allocation3] sm:$0xf] %vm4550, %v4503
        %4552 = vst.msk [vmem:[#allocation3 + $0x4] sm:$0xf] %vm4550, %v4505
        %4553 = vst.msk [vmem:[#allocation3 + $0x8] sm:$0xf] %vm4550, %v4507
        %4554 = vst.msk [vmem:[#allocation3 + $0xc] sm:$0xf] %vm4550, %v4509
        %4555 = vst.msk [vmem:[#allocation3 + $0x10] sm:$0xf] %vm4550, %v4511
        %4556 = vst.msk [vmem:[#allocation3 + $0x14] sm:$0xf] %vm4550, %v4513
        %4557 = vst.msk [vmem:[#allocation3 + $0x18] sm:$0xf] %vm4550, %v4515
        %4558 = vst.msk [vmem:[#allocation3 + $0x1c] sm:$0xf] %vm4550, %v4517
        %4559 = vst.msk [vmem:[#allocation3 + $0x20] sm:$0xf] %vm4550, %v4519
        %4560 = vst.msk [vmem:[#allocation3 + $0x24] sm:$0xf] %vm4550, %v4521
        %4561 = vst.msk [vmem:[#allocation3 + $0x28] sm:$0xf] %vm4550, %v4523
        %4562 = vst.msk [vmem:[#allocation3 + $0x2c] sm:$0xf] %vm4550, %v4525
        %4563 = vst.msk [vmem:[#allocation3 + $0x30] sm:$0xf] %vm4550, %v4527
        %4564 = vst.msk [vmem:[#allocation3 + $0x34] sm:$0xf] %vm4550, %v4529
        %4565 = vst.msk [vmem:[#allocation3 + $0x38] sm:$0xf] %vm4550, %v4531
        %4566 = vst.msk [vmem:[#allocation3 + $0x3c] sm:$0xf] %vm4550, %v4533
        %v4567 = vld [vmem:[%s812] sm:$0x8]
        %v4568 = vld [vmem:[%s812 + $0x4] sm:$0xf]
        %v4569 = vld [vmem:[%s812 + $0x8] sm:$0xf]
        %v4570 = vld [vmem:[%s812 + $0xc] sm:$0xf]
        %v4571 = vld [vmem:[%s812 + $0x10] sm:$0x7]
        %v4572 = vld [vmem:[%s812 + $0x18] sm:$0x8]
        %v4573 = vld [vmem:[%s812 + $0x1c] sm:$0xf]
        %v4574 = vld [vmem:[%s812 + $0x20] sm:$0xf]
        %v4575 = vld [vmem:[%s812 + $0x24] sm:$0xf]
        %v4576 = vld [vmem:[%s812 + $0x28] sm:$0x7]
        %v4577 = vld [vmem:[%s812 + $0x30] sm:$0x8]
        %v4578 = vld [vmem:[%s812 + $0x34] sm:$0xf]
        %v4579 = vld [vmem:[%s812 + $0x38] sm:$0xf]
        %v4580 = vld [vmem:[%s812 + $0x3c] sm:$0xf]
        %v4581 = vld [vmem:[%s812 + $0x40] sm:$0x7]
        %v4582 = vld [vmem:[%s812 + $0x48] sm:$0x8]
        %v4583 = vld [vmem:[%s812 + $0x4c] sm:$0xf]
        %v4584 = vld [vmem:[%s812 + $0x50] sm:$0xf]
        %v4585 = vld [vmem:[%s812 + $0x54] sm:$0xf]
        %v4586 = vld [vmem:[%s812 + $0x58] sm:$0x7]
        %v4607 = vrot.slane %v4567, 7
        %v4608 = vrot.slane %v4607, 4
        %v4609 = vrot.slane %v4568, 7
        %v4610 = vsel %vm1387, %v4608, %v4609
        %v4611 = vrot.slane %v4609, 4
        %v4612 = vrot.slane %v4569, 7
        %v4613 = vsel %vm1387, %v4611, %v4612
        %v4614 = vrot.slane %v4612, 4
        %v4615 = vrot.slane %v4570, 7
        %v4616 = vsel %vm1387, %v4614, %v4615
        %v4617 = vrot.slane %v4615, 4
        %v4618 = vrot.slane %v4571, 7
        %v4619 = vsel %vm1387, %v4617, %v4618
        %v4620 = vrot.slane %v4572, 7
        %v4621 = vrot.slane %v4620, 4
        %v4622 = vrot.slane %v4573, 7
        %v4623 = vsel %vm1387, %v4621, %v4622
        %v4624 = vrot.slane %v4622, 4
        %v4625 = vrot.slane %v4574, 7
        %v4626 = vsel %vm1387, %v4624, %v4625
        %v4627 = vrot.slane %v4625, 4
        %v4628 = vrot.slane %v4575, 7
        %v4629 = vsel %vm1387, %v4627, %v4628
        %v4630 = vrot.slane %v4628, 4
        %v4631 = vrot.slane %v4576, 7
        %v4632 = vsel %vm1387, %v4630, %v4631
        %v4633 = vrot.slane %v4577, 7
        %v4634 = vrot.slane %v4633, 4
        %v4635 = vrot.slane %v4578, 7
        %v4636 = vsel %vm1387, %v4634, %v4635
        %v4637 = vrot.slane %v4635, 4
        %v4638 = vrot.slane %v4579, 7
        %v4639 = vsel %vm1387, %v4637, %v4638
        %v4640 = vrot.slane %v4638, 4
        %v4641 = vrot.slane %v4580, 7
        %v4642 = vsel %vm1387, %v4640, %v4641
        %v4643 = vrot.slane %v4641, 4
        %v4644 = vrot.slane %v4581, 7
        %v4645 = vsel %vm1387, %v4643, %v4644
        %v4646 = vrot.slane %v4582, 7
        %v4647 = vrot.slane %v4646, 4
        %v4648 = vrot.slane %v4583, 7
        %v4649 = vsel %vm1387, %v4647, %v4648
        %v4650 = vrot.slane %v4648, 4
        %v4651 = vrot.slane %v4584, 7
        %v4652 = vsel %vm1387, %v4650, %v4651
        %v4653 = vrot.slane %v4651, 4
        %v4654 = vrot.slane %v4585, 7
        %v4655 = vsel %vm1387, %v4653, %v4654
        %v4656 = vrot.slane %v4654, 4
        %v4657 = vrot.slane %v4586, 7
        %v4658 = vsel %vm1387, %v4656, %v4657
        %4659 = vrot.lane.b32.xlu0 %v4610, 84
        %v4660 = vpop.permute.xlu0 %4659
        %4661 = vrot.lane.b32.xlu0 %v4613, 84
        %v4662 = vpop.permute.xlu0 %4661
        %4663 = vrot.lane.b32.xlu0 %v4616, 84
        %v4664 = vpop.permute.xlu0 %4663
        %4665 = vrot.lane.b32.xlu0 %v4619, 84
        %v4666 = vpop.permute.xlu0 %4665
        %4667 = vrot.lane.b32.xlu0 %v4623, 84
        %v4668 = vpop.permute.xlu0 %4667
        %4669 = vrot.lane.b32.xlu0 %v4626, 84
        %v4670 = vpop.permute.xlu0 %4669
        %4671 = vrot.lane.b32.xlu0 %v4629, 84
        %v4672 = vpop.permute.xlu0 %4671
        %4673 = vrot.lane.b32.xlu0 %v4632, 84
        %v4674 = vpop.permute.xlu0 %4673
        %4675 = vrot.lane.b32.xlu0 %v4636, 84
        %v4676 = vpop.permute.xlu0 %4675
        %4677 = vrot.lane.b32.xlu0 %v4639, 84
        %v4678 = vpop.permute.xlu0 %4677
        %4679 = vrot.lane.b32.xlu0 %v4642, 84
        %v4680 = vpop.permute.xlu0 %4679
        %4681 = vrot.lane.b32.xlu0 %v4645, 84
        %v4682 = vpop.permute.xlu0 %4681
        %4683 = vrot.lane.b32.xlu0 %v4649, 84
        %v4684 = vpop.permute.xlu0 %4683
        %4685 = vrot.lane.b32.xlu0 %v4652, 84
        %v4686 = vpop.permute.xlu0 %4685
        %4687 = vrot.lane.b32.xlu0 %v4655, 84
        %v4688 = vpop.permute.xlu0 %4687
        %4689 = vrot.lane.b32.xlu0 %v4658, 84
        %v4690 = vpop.permute.xlu0 %4689
        %vm4707 = vcmask 716448
        %4708 = vst.msk [vmem:[#allocation3] sm:$0xf] %vm4707, %v4660
        %4709 = vst.msk [vmem:[#allocation3 + $0x4] sm:$0xf] %vm4707, %v4662
        %4710 = vst.msk [vmem:[#allocation3 + $0x8] sm:$0xf] %vm4707, %v4664
        %4711 = vst.msk [vmem:[#allocation3 + $0xc] sm:$0xf] %vm4707, %v4666
        %4712 = vst.msk [vmem:[#allocation3 + $0x10] sm:$0xf] %vm4707, %v4668
        %4713 = vst.msk [vmem:[#allocation3 + $0x14] sm:$0xf] %vm4707, %v4670
        %4714 = vst.msk [vmem:[#allocation3 + $0x18] sm:$0xf] %vm4707, %v4672
        %4715 = vst.msk [vmem:[#allocation3 + $0x1c] sm:$0xf] %vm4707, %v4674
        %4716 = vst.msk [vmem:[#allocation3 + $0x20] sm:$0xf] %vm4707, %v4676
        %4717 = vst.msk [vmem:[#allocation3 + $0x24] sm:$0xf] %vm4707, %v4678
        %4718 = vst.msk [vmem:[#allocation3 + $0x28] sm:$0xf] %vm4707, %v4680
        %4719 = vst.msk [vmem:[#allocation3 + $0x2c] sm:$0xf] %vm4707, %v4682
        %4720 = vst.msk [vmem:[#allocation3 + $0x30] sm:$0xf] %vm4707, %v4684
        %4721 = vst.msk [vmem:[#allocation3 + $0x34] sm:$0xf] %vm4707, %v4686
        %4722 = vst.msk [vmem:[#allocation3 + $0x38] sm:$0xf] %vm4707, %v4688
        %4723 = vst.msk [vmem:[#allocation3 + $0x3c] sm:$0xf] %vm4707, %v4690
        %v4724 = vld [vmem:[%s812] sm:$0x8]
        %v4725 = vld [vmem:[%s812 + $0x4] sm:$0xf]
        %v4726 = vld [vmem:[%s812 + $0x8] sm:$0xf]
        %v4727 = vld [vmem:[%s812 + $0xc] sm:$0xf]
        %v4728 = vld [vmem:[%s812 + $0x10] sm:$0xf]
        %v4729 = vld [vmem:[%s812 + $0x18] sm:$0x8]
        %v4730 = vld [vmem:[%s812 + $0x1c] sm:$0xf]
        %v4731 = vld [vmem:[%s812 + $0x20] sm:$0xf]
        %v4732 = vld [vmem:[%s812 + $0x24] sm:$0xf]
        %v4733 = vld [vmem:[%s812 + $0x28] sm:$0xf]
        %v4734 = vld [vmem:[%s812 + $0x30] sm:$0x8]
        %v4735 = vld [vmem:[%s812 + $0x34] sm:$0xf]
        %v4736 = vld [vmem:[%s812 + $0x38] sm:$0xf]
        %v4737 = vld [vmem:[%s812 + $0x3c] sm:$0xf]
        %v4738 = vld [vmem:[%s812 + $0x40] sm:$0xf]
        %v4739 = vld [vmem:[%s812 + $0x48] sm:$0x8]
        %v4740 = vld [vmem:[%s812 + $0x4c] sm:$0xf]
        %v4741 = vld [vmem:[%s812 + $0x50] sm:$0xf]
        %v4742 = vld [vmem:[%s812 + $0x54] sm:$0xf]
        %v4743 = vld [vmem:[%s812 + $0x58] sm:$0xf]
        %v4745 = vshrl.u32 %v4724, 16
        %v4747 = vrot.slane %v4745, 7
        %v4748 = vrot.slane %v4747, 4
        %v4750 = vshrl.u32 %v4725, 16
        %v4752 = vrot.slane %v4750, 7
        %v4753 = vshll.u32 %v4725, 16
        %v4755 = vor.u32 %v4752, %v4753
        %v4756 = vsel %vm1527, %v4748, %v4755
        %v4757 = vrot.slane %v4752, 4
        %v4759 = vshrl.u32 %v4726, 16
        %v4761 = vrot.slane %v4759, 7
        %v4762 = vshll.u32 %v4726, 16
        %v4764 = vor.u32 %v4761, %v4762
        %v4765 = vsel %vm1527, %v4757, %v4764
        %v4766 = vrot.slane %v4761, 4
        %v4768 = vshrl.u32 %v4727, 16
        %v4770 = vrot.slane %v4768, 7
        %v4771 = vshll.u32 %v4727, 16
        %v4773 = vor.u32 %v4770, %v4771
        %v4774 = vsel %vm1527, %v4766, %v4773
        %v4775 = vrot.slane %v4770, 4
        %v4777 = vshrl.u32 %v4728, 16
        %v4779 = vrot.slane %v4777, 7
        %v4780 = vshll.u32 %v4728, 16
        %v4782 = vor.u32 %v4779, %v4780
        %v4783 = vsel %vm1527, %v4775, %v4782
        %v4785 = vshrl.u32 %v4729, 16
        %v4787 = vrot.slane %v4785, 7
        %v4788 = vrot.slane %v4787, 4
        %v4790 = vshrl.u32 %v4730, 16
        %v4792 = vrot.slane %v4790, 7
        %v4793 = vshll.u32 %v4730, 16
        %v4795 = vor.u32 %v4792, %v4793
        %v4796 = vsel %vm1527, %v4788, %v4795
        %v4797 = vrot.slane %v4792, 4
        %v4799 = vshrl.u32 %v4731, 16
        %v4801 = vrot.slane %v4799, 7
        %v4802 = vshll.u32 %v4731, 16
        %v4804 = vor.u32 %v4801, %v4802
        %v4805 = vsel %vm1527, %v4797, %v4804
        %v4806 = vrot.slane %v4801, 4
        %v4808 = vshrl.u32 %v4732, 16
        %v4810 = vrot.slane %v4808, 7
        %v4811 = vshll.u32 %v4732, 16
        %v4813 = vor.u32 %v4810, %v4811
        %v4814 = vsel %vm1527, %v4806, %v4813
        %v4815 = vrot.slane %v4810, 4
        %v4817 = vshrl.u32 %v4733, 16
        %v4819 = vrot.slane %v4817, 7
        %v4820 = vshll.u32 %v4733, 16
        %v4822 = vor.u32 %v4819, %v4820
        %v4823 = vsel %vm1527, %v4815, %v4822
        %v4825 = vshrl.u32 %v4734, 16
        %v4827 = vrot.slane %v4825, 7
        %v4828 = vrot.slane %v4827, 4
        %v4830 = vshrl.u32 %v4735, 16
        %v4832 = vrot.slane %v4830, 7
        %v4833 = vshll.u32 %v4735, 16
        %v4835 = vor.u32 %v4832, %v4833
        %v4836 = vsel %vm1527, %v4828, %v4835
        %v4837 = vrot.slane %v4832, 4
        %v4839 = vshrl.u32 %v4736, 16
        %v4841 = vrot.slane %v4839, 7
        %v4842 = vshll.u32 %v4736, 16
        %v4844 = vor.u32 %v4841, %v4842
        %v4845 = vsel %vm1527, %v4837, %v4844
        %v4846 = vrot.slane %v4841, 4
        %v4848 = vshrl.u32 %v4737, 16
        %v4850 = vrot.slane %v4848, 7
        %v4851 = vshll.u32 %v4737, 16
        %v4853 = vor.u32 %v4850, %v4851
        %v4854 = vsel %vm1527, %v4846, %v4853
        %v4855 = vrot.slane %v4850, 4
        %v4857 = vshrl.u32 %v4738, 16
        %v4859 = vrot.slane %v4857, 7
        %v4860 = vshll.u32 %v4738, 16
        %v4862 = vor.u32 %v4859, %v4860
        %v4863 = vsel %vm1527, %v4855, %v4862
        %v4865 = vshrl.u32 %v4739, 16
        %v4867 = vrot.slane %v4865, 7
        %v4868 = vrot.slane %v4867, 4
        %v4870 = vshrl.u32 %v4740, 16
        %v4872 = vrot.slane %v4870, 7
        %v4873 = vshll.u32 %v4740, 16
        %v4875 = vor.u32 %v4872, %v4873
        %v4876 = vsel %vm1527, %v4868, %v4875
        %v4877 = vrot.slane %v4872, 4
        %v4879 = vshrl.u32 %v4741, 16
        %v4881 = vrot.slane %v4879, 7
        %v4882 = vshll.u32 %v4741, 16
        %v4884 = vor.u32 %v4881, %v4882
        %v4885 = vsel %vm1527, %v4877, %v4884
        %v4886 = vrot.slane %v4881, 4
        %v4888 = vshrl.u32 %v4742, 16
        %v4890 = vrot.slane %v4888, 7
        %v4891 = vshll.u32 %v4742, 16
        %v4893 = vor.u32 %v4890, %v4891
        %v4894 = vsel %vm1527, %v4886, %v4893
        %v4895 = vrot.slane %v4890, 4
        %v4897 = vshrl.u32 %v4743, 16
        %v4899 = vrot.slane %v4897, 7
        %v4900 = vshll.u32 %v4743, 16
        %v4902 = vor.u32 %v4899, %v4900
        %v4903 = vsel %vm1527, %v4895, %v4902
        %4904 = vrot.lane.b32.xlu0 %v4756, 88
        %v4905 = vpop.permute.xlu0 %4904
        %4906 = vrot.lane.b32.xlu0 %v4765, 88
        %v4907 = vpop.permute.xlu0 %4906
        %4908 = vrot.lane.b32.xlu0 %v4774, 88
        %v4909 = vpop.permute.xlu0 %4908
        %4910 = vrot.lane.b32.xlu0 %v4783, 88
        %v4911 = vpop.permute.xlu0 %4910
        %4912 = vrot.lane.b32.xlu0 %v4796, 88
        %v4913 = vpop.permute.xlu0 %4912
        %4914 = vrot.lane.b32.xlu0 %v4805, 88
        %v4915 = vpop.permute.xlu0 %4914
        %4916 = vrot.lane.b32.xlu0 %v4814, 88
        %v4917 = vpop.permute.xlu0 %4916
        %4918 = vrot.lane.b32.xlu0 %v4823, 88
        %v4919 = vpop.permute.xlu0 %4918
        %4920 = vrot.lane.b32.xlu0 %v4836, 88
        %v4921 = vpop.permute.xlu0 %4920
        %4922 = vrot.lane.b32.xlu0 %v4845, 88
        %v4923 = vpop.permute.xlu0 %4922
        %4924 = vrot.lane.b32.xlu0 %v4854, 88
        %v4925 = vpop.permute.xlu0 %4924
        %4926 = vrot.lane.b32.xlu0 %v4863, 88
        %v4927 = vpop.permute.xlu0 %4926
        %4928 = vrot.lane.b32.xlu0 %v4876, 88
        %v4929 = vpop.permute.xlu0 %4928
        %4930 = vrot.lane.b32.xlu0 %v4885, 88
        %v4931 = vpop.permute.xlu0 %4930
        %4932 = vrot.lane.b32.xlu0 %v4894, 88
        %v4933 = vpop.permute.xlu0 %4932
        %4934 = vrot.lane.b32.xlu0 %v4903, 88
        %v4935 = vpop.permute.xlu0 %4934
        %vm4952 = vcmask 749248
        %4953 = vst.msk [vmem:[#allocation3] sm:$0xf] %vm4952, %v4905
        %4954 = vst.msk [vmem:[#allocation3 + $0x4] sm:$0xf] %vm4952, %v4907
        %4955 = vst.msk [vmem:[#allocation3 + $0x8] sm:$0xf] %vm4952, %v4909
        %4956 = vst.msk [vmem:[#allocation3 + $0xc] sm:$0xf] %vm4952, %v4911
        %4957 = vst.msk [vmem:[#allocation3 + $0x10] sm:$0xf] %vm4952, %v4913
        %4958 = vst.msk [vmem:[#allocation3 + $0x14] sm:$0xf] %vm4952, %v4915
        %4959 = vst.msk [vmem:[#allocation3 + $0x18] sm:$0xf] %vm4952, %v4917
        %4960 = vst.msk [vmem:[#allocation3 + $0x1c] sm:$0xf] %vm4952, %v4919
        %4961 = vst.msk [vmem:[#allocation3 + $0x20] sm:$0xf] %vm4952, %v4921
        %4962 = vst.msk [vmem:[#allocation3 + $0x24] sm:$0xf] %vm4952, %v4923
        %4963 = vst.msk [vmem:[#allocation3 + $0x28] sm:$0xf] %vm4952, %v4925
        %4964 = vst.msk [vmem:[#allocation3 + $0x2c] sm:$0xf] %vm4952, %v4927
        %4965 = vst.msk [vmem:[#allocation3 + $0x30] sm:$0xf] %vm4952, %v4929
        %4966 = vst.msk [vmem:[#allocation3 + $0x34] sm:$0xf] %vm4952, %v4931
        %4967 = vst.msk [vmem:[#allocation3 + $0x38] sm:$0xf] %vm4952, %v4933
        %4968 = vst.msk [vmem:[#allocation3 + $0x3c] sm:$0xf] %vm4952, %v4935
        %v4969 = vld [vmem:[%s812 + $0x4] sm:$0xf]
        %v4970 = vld [vmem:[%s812 + $0x8] sm:$0xf]
        %v4971 = vld [vmem:[%s812 + $0xc] sm:$0xf]
        %v4972 = vld [vmem:[%s812 + $0x10] sm:$0xf]
        %v4973 = vld [vmem:[%s812 + $0x1c] sm:$0xf]
        %v4974 = vld [vmem:[%s812 + $0x20] sm:$0xf]
        %v4975 = vld [vmem:[%s812 + $0x24] sm:$0xf]
        %v4976 = vld [vmem:[%s812 + $0x28] sm:$0xf]
        %v4977 = vld [vmem:[%s812 + $0x34] sm:$0xf]
        %v4978 = vld [vmem:[%s812 + $0x38] sm:$0xf]
        %v4979 = vld [vmem:[%s812 + $0x3c] sm:$0xf]
        %v4980 = vld [vmem:[%s812 + $0x40] sm:$0xf]
        %v4981 = vld [vmem:[%s812 + $0x4c] sm:$0xf]
        %v4982 = vld [vmem:[%s812 + $0x50] sm:$0xf]
        %v4983 = vld [vmem:[%s812 + $0x54] sm:$0xf]
        %v4984 = vld [vmem:[%s812 + $0x58] sm:$0xf]
        %5001 = vrot.lane.b32.xlu0 %v4969, 92
        %v5002 = vpop.permute.xlu0 %5001
        %5003 = vrot.lane.b32.xlu0 %v4970, 92
        %v5004 = vpop.permute.xlu0 %5003
        %5005 = vrot.lane.b32.xlu0 %v4971, 92
        %v5006 = vpop.permute.xlu0 %5005
        %5007 = vrot.lane.b32.xlu0 %v4972, 92
        %v5008 = vpop.permute.xlu0 %5007
        %5009 = vrot.lane.b32.xlu0 %v4973, 92
        %v5010 = vpop.permute.xlu0 %5009
        %5011 = vrot.lane.b32.xlu0 %v4974, 92
        %v5012 = vpop.permute.xlu0 %5011
        %5013 = vrot.lane.b32.xlu0 %v4975, 92
        %v5014 = vpop.permute.xlu0 %5013
        %5015 = vrot.lane.b32.xlu0 %v4976, 92
        %v5016 = vpop.permute.xlu0 %5015
        %5017 = vrot.lane.b32.xlu0 %v4977, 92
        %v5018 = vpop.permute.xlu0 %5017
        %5019 = vrot.lane.b32.xlu0 %v4978, 92
        %v5020 = vpop.permute.xlu0 %5019
        %5021 = vrot.lane.b32.xlu0 %v4979, 92
        %v5022 = vpop.permute.xlu0 %5021
        %5023 = vrot.lane.b32.xlu0 %v4980, 92
        %v5024 = vpop.permute.xlu0 %5023
        %5025 = vrot.lane.b32.xlu0 %v4981, 92
        %v5026 = vpop.permute.xlu0 %5025
        %5027 = vrot.lane.b32.xlu0 %v4982, 92
        %v5028 = vpop.permute.xlu0 %5027
        %5029 = vrot.lane.b32.xlu0 %v4983, 92
        %v5030 = vpop.permute.xlu0 %5029
        %5031 = vrot.lane.b32.xlu0 %v4984, 92
        %v5032 = vpop.permute.xlu0 %5031
        %vm5049 = vcmask 782048
        %5050 = vst.msk [vmem:[#allocation3] sm:$0xf] %vm5049, %v5002
        %5051 = vst.msk [vmem:[#allocation3 + $0x4] sm:$0xf] %vm5049, %v5004
        %5052 = vst.msk [vmem:[#allocation3 + $0x8] sm:$0xf] %vm5049, %v5006
        %5053 = vst.msk [vmem:[#allocation3 + $0xc] sm:$0xf] %vm5049, %v5008
        %5054 = vst.msk [vmem:[#allocation3 + $0x10] sm:$0xf] %vm5049, %v5010
        %5055 = vst.msk [vmem:[#allocation3 + $0x14] sm:$0xf] %vm5049, %v5012
        %5056 = vst.msk [vmem:[#allocation3 + $0x18] sm:$0xf] %vm5049, %v5014
        %5057 = vst.msk [vmem:[#allocation3 + $0x1c] sm:$0xf] %vm5049, %v5016
        %5058 = vst.msk [vmem:[#allocation3 + $0x20] sm:$0xf] %vm5049, %v5018
        %5059 = vst.msk [vmem:[#allocation3 + $0x24] sm:$0xf] %vm5049, %v5020
        %5060 = vst.msk [vmem:[#allocation3 + $0x28] sm:$0xf] %vm5049, %v5022
        %5061 = vst.msk [vmem:[#allocation3 + $0x2c] sm:$0xf] %vm5049, %v5024
        %5062 = vst.msk [vmem:[#allocation3 + $0x30] sm:$0xf] %vm5049, %v5026
        %5063 = vst.msk [vmem:[#allocation3 + $0x34] sm:$0xf] %vm5049, %v5028
        %5064 = vst.msk [vmem:[#allocation3 + $0x38] sm:$0xf] %vm5049, %v5030
        %5065 = vst.msk [vmem:[#allocation3 + $0x3c] sm:$0xf] %vm5049, %v5032
        %v5066 = vld [vmem:[%s812 + $0x4] sm:$0xc]
        %v5067 = vld [vmem:[%s812 + $0x8] sm:$0xf]
        %v5068 = vld [vmem:[%s812 + $0xc] sm:$0xf]
        %v5069 = vld [vmem:[%s812 + $0x10] sm:$0xf]
        %v5070 = vld [vmem:[%s812 + $0x14] sm:$0x3]
        %v5071 = vld [vmem:[%s812 + $0x1c] sm:$0xc]
        %v5072 = vld [vmem:[%s812 + $0x20] sm:$0xf]
        %v5073 = vld [vmem:[%s812 + $0x24] sm:$0xf]
        %v5074 = vld [vmem:[%s812 + $0x28] sm:$0xf]
        %v5075 = vld [vmem:[%s812 + $0x2c] sm:$0x3]
        %v5076 = vld [vmem:[%s812 + $0x34] sm:$0xc]
        %v5077 = vld [vmem:[%s812 + $0x38] sm:$0xf]
        %v5078 = vld [vmem:[%s812 + $0x3c] sm:$0xf]
        %v5079 = vld [vmem:[%s812 + $0x40] sm:$0xf]
        %v5080 = vld [vmem:[%s812 + $0x44] sm:$0x3]
        %v5081 = vld [vmem:[%s812 + $0x4c] sm:$0xc]
        %v5082 = vld [vmem:[%s812 + $0x50] sm:$0xf]
        %v5083 = vld [vmem:[%s812 + $0x54] sm:$0xf]
        %v5084 = vld [vmem:[%s812 + $0x58] sm:$0xf]
        %v5085 = vld [vmem:[%s812 + $0x5c] sm:$0x3]
        %v5106 = vrot.slane %v5066, 6
        %v5107 = vrot.slane %v5106, 4
        %v5108 = vrot.slane %v5067, 6
        %v5109 = vsel %vm1892, %v5107, %v5108
        %v5110 = vrot.slane %v5108, 4
        %v5111 = vrot.slane %v5068, 6
        %v5112 = vsel %vm1892, %v5110, %v5111
        %v5113 = vrot.slane %v5111, 4
        %v5114 = vrot.slane %v5069, 6
        %v5115 = vsel %vm1892, %v5113, %v5114
        %v5116 = vrot.slane %v5114, 4
        %v5117 = vrot.slane %v5070, 6
        %v5118 = vsel %vm1892, %v5116, %v5117
        %v5119 = vrot.slane %v5071, 6
        %v5120 = vrot.slane %v5119, 4
        %v5121 = vrot.slane %v5072, 6
        %v5122 = vsel %vm1892, %v5120, %v5121
        %v5123 = vrot.slane %v5121, 4
        %v5124 = vrot.slane %v5073, 6
        %v5125 = vsel %vm1892, %v5123, %v5124
        %v5126 = vrot.slane %v5124, 4
        %v5127 = vrot.slane %v5074, 6
        %v5128 = vsel %vm1892, %v5126, %v5127
        %v5129 = vrot.slane %v5127, 4
        %v5130 = vrot.slane %v5075, 6
        %v5131 = vsel %vm1892, %v5129, %v5130
        %v5132 = vrot.slane %v5076, 6
        %v5133 = vrot.slane %v5132, 4
        %v5134 = vrot.slane %v5077, 6
        %v5135 = vsel %vm1892, %v5133, %v5134
        %v5136 = vrot.slane %v5134, 4
        %v5137 = vrot.slane %v5078, 6
        %v5138 = vsel %vm1892, %v5136, %v5137
        %v5139 = vrot.slane %v5137, 4
        %v5140 = vrot.slane %v5079, 6
        %v5141 = vsel %vm1892, %v5139, %v5140
        %v5142 = vrot.slane %v5140, 4
        %v5143 = vrot.slane %v5080, 6
        %v5144 = vsel %vm1892, %v5142, %v5143
        %v5145 = vrot.slane %v5081, 6
        %v5146 = vrot.slane %v5145, 4
        %v5147 = vrot.slane %v5082, 6
        %v5148 = vsel %vm1892, %v5146, %v5147
        %v5149 = vrot.slane %v5147, 4
        %v5150 = vrot.slane %v5083, 6
        %v5151 = vsel %vm1892, %v5149, %v5150
        %v5152 = vrot.slane %v5150, 4
        %v5153 = vrot.slane %v5084, 6
        %v5154 = vsel %vm1892, %v5152, %v5153
        %v5155 = vrot.slane %v5153, 4
        %v5156 = vrot.slane %v5085, 6
        %v5157 = vsel %vm1892, %v5155, %v5156
        %5158 = vrot.lane.b32.xlu0 %v5109, 96
        %v5159 = vpop.permute.xlu0 %5158
        %5160 = vrot.lane.b32.xlu0 %v5112, 96
        %v5161 = vpop.permute.xlu0 %5160
        %5162 = vrot.lane.b32.xlu0 %v5115, 96
        %v5163 = vpop.permute.xlu0 %5162
        %5164 = vrot.lane.b32.xlu0 %v5118, 96
        %v5165 = vpop.permute.xlu0 %5164
        %5166 = vrot.lane.b32.xlu0 %v5122, 96
        %v5167 = vpop.permute.xlu0 %5166
        %5168 = vrot.lane.b32.xlu0 %v5125, 96
        %v5169 = vpop.permute.xlu0 %5168
        %5170 = vrot.lane.b32.xlu0 %v5128, 96
        %v5171 = vpop.permute.xlu0 %5170
        %5172 = vrot.lane.b32.xlu0 %v5131, 96
        %v5173 = vpop.permute.xlu0 %5172
        %5174 = vrot.lane.b32.xlu0 %v5135, 96
        %v5175 = vpop.permute.xlu0 %5174
        %5176 = vrot.lane.b32.xlu0 %v5138, 96
        %v5177 = vpop.permute.xlu0 %5176
        %5178 = vrot.lane.b32.xlu0 %v5141, 96
        %v5179 = vpop.permute.xlu0 %5178
        %5180 = vrot.lane.b32.xlu0 %v5144, 96
        %v5181 = vpop.permute.xlu0 %5180
        %5182 = vrot.lane.b32.xlu0 %v5148, 96
        %v5183 = vpop.permute.xlu0 %5182
        %5184 = vrot.lane.b32.xlu0 %v5151, 96
        %v5185 = vpop.permute.xlu0 %5184
        %5186 = vrot.lane.b32.xlu0 %v5154, 96
        %v5187 = vpop.permute.xlu0 %5186
        %5188 = vrot.lane.b32.xlu0 %v5157, 96
        %v5189 = vpop.permute.xlu0 %5188
        %vm5206 = vcmask 814848
        %5207 = vst.msk [vmem:[#allocation3] sm:$0xf] %vm5206, %v5159
        %5208 = vst.msk [vmem:[#allocation3 + $0x4] sm:$0xf] %vm5206, %v5161
        %5209 = vst.msk [vmem:[#allocation3 + $0x8] sm:$0xf] %vm5206, %v5163
        %5210 = vst.msk [vmem:[#allocation3 + $0xc] sm:$0xf] %vm5206, %v5165
        %5211 = vst.msk [vmem:[#allocation3 + $0x10] sm:$0xf] %vm5206, %v5167
        %5212 = vst.msk [vmem:[#allocation3 + $0x14] sm:$0xf] %vm5206, %v5169
        %5213 = vst.msk [vmem:[#allocation3 + $0x18] sm:$0xf] %vm5206, %v5171
        %5214 = vst.msk [vmem:[#allocation3 + $0x1c] sm:$0xf] %vm5206, %v5173
        %5215 = vst.msk [vmem:[#allocation3 + $0x20] sm:$0xf] %vm5206, %v5175
        %5216 = vst.msk [vmem:[#allocation3 + $0x24] sm:$0xf] %vm5206, %v5177
        %5217 = vst.msk [vmem:[#allocation3 + $0x28] sm:$0xf] %vm5206, %v5179
        %5218 = vst.msk [vmem:[#allocation3 + $0x2c] sm:$0xf] %vm5206, %v5181
        %5219 = vst.msk [vmem:[#allocation3 + $0x30] sm:$0xf] %vm5206, %v5183
        %5220 = vst.msk [vmem:[#allocation3 + $0x34] sm:$0xf] %vm5206, %v5185
        %5221 = vst.msk [vmem:[#allocation3 + $0x38] sm:$0xf] %vm5206, %v5187
        %5222 = vst.msk [vmem:[#allocation3 + $0x3c] sm:$0xf] %vm5206, %v5189
        %v5223 = vld [vmem:[%s812 + $0x4] sm:$0xc]
        %v5224 = vld [vmem:[%s812 + $0x8] sm:$0xf]
        %v5225 = vld [vmem:[%s812 + $0xc] sm:$0xf]
        %v5226 = vld [vmem:[%s812 + $0x10] sm:$0xf]
        %v5227 = vld [vmem:[%s812 + $0x14] sm:$0x7]
        %v5228 = vld [vmem:[%s812 + $0x1c] sm:$0xc]
        %v5229 = vld [vmem:[%s812 + $0x20] sm:$0xf]
        %v5230 = vld [vmem:[%s812 + $0x24] sm:$0xf]
        %v5231 = vld [vmem:[%s812 + $0x28] sm:$0xf]
        %v5232 = vld [vmem:[%s812 + $0x2c] sm:$0x7]
        %v5233 = vld [vmem:[%s812 + $0x34] sm:$0xc]
        %v5234 = vld [vmem:[%s812 + $0x38] sm:$0xf]
        %v5235 = vld [vmem:[%s812 + $0x3c] sm:$0xf]
        %v5236 = vld [vmem:[%s812 + $0x40] sm:$0xf]
        %v5237 = vld [vmem:[%s812 + $0x44] sm:$0x7]
        %v5238 = vld [vmem:[%s812 + $0x4c] sm:$0xc]
        %v5239 = vld [vmem:[%s812 + $0x50] sm:$0xf]
        %v5240 = vld [vmem:[%s812 + $0x54] sm:$0xf]
        %v5241 = vld [vmem:[%s812 + $0x58] sm:$0xf]
        %v5242 = vld [vmem:[%s812 + $0x5c] sm:$0x7]
        %v5244 = vshrl.u32 %v5223, 16
        %v5246 = vrot.slane %v5244, 6
        %v5247 = vshll.u32 %v5223, 16
        %v5249 = vrot.slane %v5247, 7
        %v5250 = vor.u32 %v5246, %v5249
        %v5251 = vrot.slane %v5250, 4
        %v5253 = vshrl.u32 %v5224, 16
        %v5255 = vrot.slane %v5253, 6
        %v5256 = vshll.u32 %v5224, 16
        %v5258 = vrot.slane %v5256, 7
        %v5259 = vor.u32 %v5255, %v5258
        %v5260 = vsel %vm2032, %v5251, %v5259
        %v5261 = vrot.slane %v5259, 4
        %v5263 = vshrl.u32 %v5225, 16
        %v5265 = vrot.slane %v5263, 6
        %v5266 = vshll.u32 %v5225, 16
        %v5268 = vrot.slane %v5266, 7
        %v5269 = vor.u32 %v5265, %v5268
        %v5270 = vsel %vm2032, %v5261, %v5269
        %v5271 = vrot.slane %v5269, 4
        %v5273 = vshrl.u32 %v5226, 16
        %v5275 = vrot.slane %v5273, 6
        %v5276 = vshll.u32 %v5226, 16
        %v5278 = vrot.slane %v5276, 7
        %v5279 = vor.u32 %v5275, %v5278
        %v5280 = vsel %vm2032, %v5271, %v5279
        %v5281 = vrot.slane %v5279, 4
        %v5283 = vshrl.u32 %v5227, 16
        %v5285 = vrot.slane %v5283, 6
        %v5286 = vshll.u32 %v5227, 16
        %v5288 = vrot.slane %v5286, 7
        %v5289 = vor.u32 %v5285, %v5288
        %v5290 = vsel %vm2032, %v5281, %v5289
        %v5292 = vshrl.u32 %v5228, 16
        %v5294 = vrot.slane %v5292, 6
        %v5295 = vshll.u32 %v5228, 16
        %v5297 = vrot.slane %v5295, 7
        %v5298 = vor.u32 %v5294, %v5297
        %v5299 = vrot.slane %v5298, 4
        %v5301 = vshrl.u32 %v5229, 16
        %v5303 = vrot.slane %v5301, 6
        %v5304 = vshll.u32 %v5229, 16
        %v5306 = vrot.slane %v5304, 7
        %v5307 = vor.u32 %v5303, %v5306
        %v5308 = vsel %vm2032, %v5299, %v5307
        %v5309 = vrot.slane %v5307, 4
        %v5311 = vshrl.u32 %v5230, 16
        %v5313 = vrot.slane %v5311, 6
        %v5314 = vshll.u32 %v5230, 16
        %v5316 = vrot.slane %v5314, 7
        %v5317 = vor.u32 %v5313, %v5316
        %v5318 = vsel %vm2032, %v5309, %v5317
        %v5319 = vrot.slane %v5317, 4
        %v5321 = vshrl.u32 %v5231, 16
        %v5323 = vrot.slane %v5321, 6
        %v5324 = vshll.u32 %v5231, 16
        %v5326 = vrot.slane %v5324, 7
        %v5327 = vor.u32 %v5323, %v5326
        %v5328 = vsel %vm2032, %v5319, %v5327
        %v5329 = vrot.slane %v5327, 4
        %v5331 = vshrl.u32 %v5232, 16
        %v5333 = vrot.slane %v5331, 6
        %v5334 = vshll.u32 %v5232, 16
        %v5336 = vrot.slane %v5334, 7
        %v5337 = vor.u32 %v5333, %v5336
        %v5338 = vsel %vm2032, %v5329, %v5337
        %v5340 = vshrl.u32 %v5233, 16
        %v5342 = vrot.slane %v5340, 6
        %v5343 = vshll.u32 %v5233, 16
        %v5345 = vrot.slane %v5343, 7
        %v5346 = vor.u32 %v5342, %v5345
        %v5347 = vrot.slane %v5346, 4
        %v5349 = vshrl.u32 %v5234, 16
        %v5351 = vrot.slane %v5349, 6
        %v5352 = vshll.u32 %v5234, 16
        %v5354 = vrot.slane %v5352, 7
        %v5355 = vor.u32 %v5351, %v5354
        %v5356 = vsel %vm2032, %v5347, %v5355
        %v5357 = vrot.slane %v5355, 4
        %v5359 = vshrl.u32 %v5235, 16
        %v5361 = vrot.slane %v5359, 6
        %v5362 = vshll.u32 %v5235, 16
        %v5364 = vrot.slane %v5362, 7
        %v5365 = vor.u32 %v5361, %v5364
        %v5366 = vsel %vm2032, %v5357, %v5365
        %v5367 = vrot.slane %v5365, 4
        %v5369 = vshrl.u32 %v5236, 16
        %v5371 = vrot.slane %v5369, 6
        %v5372 = vshll.u32 %v5236, 16
        %v5374 = vrot.slane %v5372, 7
        %v5375 = vor.u32 %v5371, %v5374
        %v5376 = vsel %vm2032, %v5367, %v5375
        %v5377 = vrot.slane %v5375, 4
        %v5379 = vshrl.u32 %v5237, 16
        %v5381 = vrot.slane %v5379, 6
        %v5382 = vshll.u32 %v5237, 16
        %v5384 = vrot.slane %v5382, 7
        %v5385 = vor.u32 %v5381, %v5384
        %v5386 = vsel %vm2032, %v5377, %v5385
        %v5388 = vshrl.u32 %v5238, 16
        %v5390 = vrot.slane %v5388, 6
        %v5391 = vshll.u32 %v5238, 16
        %v5393 = vrot.slane %v5391, 7
        %v5394 = vor.u32 %v5390, %v5393
        %v5395 = vrot.slane %v5394, 4
        %v5397 = vshrl.u32 %v5239, 16
        %v5399 = vrot.slane %v5397, 6
        %v5400 = vshll.u32 %v5239, 16
        %v5402 = vrot.slane %v5400, 7
        %v5403 = vor.u32 %v5399, %v5402
        %v5404 = vsel %vm2032, %v5395, %v5403
        %v5405 = vrot.slane %v5403, 4
        %v5407 = vshrl.u32 %v5240, 16
        %v5409 = vrot.slane %v5407, 6
        %v5410 = vshll.u32 %v5240, 16
        %v5412 = vrot.slane %v5410, 7
        %v5413 = vor.u32 %v5409, %v5412
        %v5414 = vsel %vm2032, %v5405, %v5413
        %v5415 = vrot.slane %v5413, 4
        %v5417 = vshrl.u32 %v5241, 16
        %v5419 = vrot.slane %v5417, 6
        %v5420 = vshll.u32 %v5241, 16
        %v5422 = vrot.slane %v5420, 7
        %v5423 = vor.u32 %v5419, %v5422
        %v5424 = vsel %vm2032, %v5415, %v5423
        %v5425 = vrot.slane %v5423, 4
        %v5427 = vshrl.u32 %v5242, 16
        %v5429 = vrot.slane %v5427, 6
        %v5430 = vshll.u32 %v5242, 16
        %v5432 = vrot.slane %v5430, 7
        %v5433 = vor.u32 %v5429, %v5432
        %v5434 = vsel %vm2032, %v5425, %v5433
        %5435 = vrot.lane.b32.xlu0 %v5260, 100
        %v5436 = vpop.permute.xlu0 %5435
        %5437 = vrot.lane.b32.xlu0 %v5270, 100
        %v5438 = vpop.permute.xlu0 %5437
        %5439 = vrot.lane.b32.xlu0 %v5280, 100
        %v5440 = vpop.permute.xlu0 %5439
        %5441 = vrot.lane.b32.xlu0 %v5290, 100
        %v5442 = vpop.permute.xlu0 %5441
        %5443 = vrot.lane.b32.xlu0 %v5308, 100
        %v5444 = vpop.permute.xlu0 %5443
        %5445 = vrot.lane.b32.xlu0 %v5318, 100
        %v5446 = vpop.permute.xlu0 %5445
        %5447 = vrot.lane.b32.xlu0 %v5328, 100
        %v5448 = vpop.permute.xlu0 %5447
        %5449 = vrot.lane.b32.xlu0 %v5338, 100
        %v5450 = vpop.permute.xlu0 %5449
        %5451 = vrot.lane.b32.xlu0 %v5356, 100
        %v5452 = vpop.permute.xlu0 %5451
        %5453 = vrot.lane.b32.xlu0 %v5366, 100
        %v5454 = vpop.permute.xlu0 %5453
        %5455 = vrot.lane.b32.xlu0 %v5376, 100
        %v5456 = vpop.permute.xlu0 %5455
        %5457 = vrot.lane.b32.xlu0 %v5386, 100
        %v5458 = vpop.permute.xlu0 %5457
        %5459 = vrot.lane.b32.xlu0 %v5404, 100
        %v5460 = vpop.permute.xlu0 %5459
        %5461 = vrot.lane.b32.xlu0 %v5414, 100
        %v5462 = vpop.permute.xlu0 %5461
        %5463 = vrot.lane.b32.xlu0 %v5424, 100
        %v5464 = vpop.permute.xlu0 %5463
        %5465 = vrot.lane.b32.xlu0 %v5434, 100
        %v5466 = vpop.permute.xlu0 %5465
        %vm5483 = vcmask 847648
        %5484 = vst.msk [vmem:[#allocation3] sm:$0xf] %vm5483, %v5436
        %5485 = vst.msk [vmem:[#allocation3 + $0x4] sm:$0xf] %vm5483, %v5438
        %5486 = vst.msk [vmem:[#allocation3 + $0x8] sm:$0xf] %vm5483, %v5440
        %5487 = vst.msk [vmem:[#allocation3 + $0xc] sm:$0xf] %vm5483, %v5442
        %5488 = vst.msk [vmem:[#allocation3 + $0x10] sm:$0xf] %vm5483, %v5444
        %5489 = vst.msk [vmem:[#allocation3 + $0x14] sm:$0xf] %vm5483, %v5446
        %5490 = vst.msk [vmem:[#allocation3 + $0x18] sm:$0xf] %vm5483, %v5448
        %5491 = vst.msk [vmem:[#allocation3 + $0x1c] sm:$0xf] %vm5483, %v5450
        %5492 = vst.msk [vmem:[#allocation3 + $0x20] sm:$0xf] %vm5483, %v5452
        %5493 = vst.msk [vmem:[#allocation3 + $0x24] sm:$0xf] %vm5483, %v5454
        %5494 = vst.msk [vmem:[#allocation3 + $0x28] sm:$0xf] %vm5483, %v5456
        %5495 = vst.msk [vmem:[#allocation3 + $0x2c] sm:$0xf] %vm5483, %v5458
        %5496 = vst.msk [vmem:[#allocation3 + $0x30] sm:$0xf] %vm5483, %v5460
        %5497 = vst.msk [vmem:[#allocation3 + $0x34] sm:$0xf] %vm5483, %v5462
        %5498 = vst.msk [vmem:[#allocation3 + $0x38] sm:$0xf] %vm5483, %v5464
        %5499 = vst.msk [vmem:[#allocation3 + $0x3c] sm:$0xf] %vm5483, %v5466
        %v5500 = vld [vmem:[%s812 + $0x4] sm:$0x8]
        %v5501 = vld [vmem:[%s812 + $0x8] sm:$0xf]
        %v5502 = vld [vmem:[%s812 + $0xc] sm:$0xf]
        %v5503 = vld [vmem:[%s812 + $0x10] sm:$0xf]
        %v5504 = vld [vmem:[%s812 + $0x14] sm:$0x7]
        %v5505 = vld [vmem:[%s812 + $0x1c] sm:$0x8]
        %v5506 = vld [vmem:[%s812 + $0x20] sm:$0xf]
        %v5507 = vld [vmem:[%s812 + $0x24] sm:$0xf]
        %v5508 = vld [vmem:[%s812 + $0x28] sm:$0xf]
        %v5509 = vld [vmem:[%s812 + $0x2c] sm:$0x7]
        %v5510 = vld [vmem:[%s812 + $0x34] sm:$0x8]
        %v5511 = vld [vmem:[%s812 + $0x38] sm:$0xf]
        %v5512 = vld [vmem:[%s812 + $0x3c] sm:$0xf]
        %v5513 = vld [vmem:[%s812 + $0x40] sm:$0xf]
        %v5514 = vld [vmem:[%s812 + $0x44] sm:$0x7]
        %v5515 = vld [vmem:[%s812 + $0x4c] sm:$0x8]
        %v5516 = vld [vmem:[%s812 + $0x50] sm:$0xf]
        %v5517 = vld [vmem:[%s812 + $0x54] sm:$0xf]
        %v5518 = vld [vmem:[%s812 + $0x58] sm:$0xf]
        %v5519 = vld [vmem:[%s812 + $0x5c] sm:$0x7]
        %v5540 = vrot.slane %v5500, 7
        %v5541 = vrot.slane %v5540, 4
        %v5542 = vrot.slane %v5501, 7
        %v5543 = vsel %vm1387, %v5541, %v5542
        %v5544 = vrot.slane %v5542, 4
        %v5545 = vrot.slane %v5502, 7
        %v5546 = vsel %vm1387, %v5544, %v5545
        %v5547 = vrot.slane %v5545, 4
        %v5548 = vrot.slane %v5503, 7
        %v5549 = vsel %vm1387, %v5547, %v5548
        %v5550 = vrot.slane %v5548, 4
        %v5551 = vrot.slane %v5504, 7
        %v5552 = vsel %vm1387, %v5550, %v5551
        %v5553 = vrot.slane %v5505, 7
        %v5554 = vrot.slane %v5553, 4
        %v5555 = vrot.slane %v5506, 7
        %v5556 = vsel %vm1387, %v5554, %v5555
        %v5557 = vrot.slane %v5555, 4
        %v5558 = vrot.slane %v5507, 7
        %v5559 = vsel %vm1387, %v5557, %v5558
        %v5560 = vrot.slane %v5558, 4
        %v5561 = vrot.slane %v5508, 7
        %v5562 = vsel %vm1387, %v5560, %v5561
        %v5563 = vrot.slane %v5561, 4
        %v5564 = vrot.slane %v5509, 7
        %v5565 = vsel %vm1387, %v5563, %v5564
        %v5566 = vrot.slane %v5510, 7
        %v5567 = vrot.slane %v5566, 4
        %v5568 = vrot.slane %v5511, 7
        %v5569 = vsel %vm1387, %v5567, %v5568
        %v5570 = vrot.slane %v5568, 4
        %v5571 = vrot.slane %v5512, 7
        %v5572 = vsel %vm1387, %v5570, %v5571
        %v5573 = vrot.slane %v5571, 4
        %v5574 = vrot.slane %v5513, 7
        %v5575 = vsel %vm1387, %v5573, %v5574
        %v5576 = vrot.slane %v5574, 4
        %v5577 = vrot.slane %v5514, 7
        %v5578 = vsel %vm1387, %v5576, %v5577
        %v5579 = vrot.slane %v5515, 7
        %v5580 = vrot.slane %v5579, 4
        %v5581 = vrot.slane %v5516, 7
        %v5582 = vsel %vm1387, %v5580, %v5581
        %v5583 = vrot.slane %v5581, 4
        %v5584 = vrot.slane %v5517, 7
        %v5585 = vsel %vm1387, %v5583, %v5584
        %v5586 = vrot.slane %v5584, 4
        %v5587 = vrot.slane %v5518, 7
        %v5588 = vsel %vm1387, %v5586, %v5587
        %v5589 = vrot.slane %v5587, 4
        %v5590 = vrot.slane %v5519, 7
        %v5591 = vsel %vm1387, %v5589, %v5590
        %5592 = vrot.lane.b32.xlu0 %v5543, 104
        %v5593 = vpop.permute.xlu0 %5592
        %5594 = vrot.lane.b32.xlu0 %v5546, 104
        %v5595 = vpop.permute.xlu0 %5594
        %5596 = vrot.lane.b32.xlu0 %v5549, 104
        %v5597 = vpop.permute.xlu0 %5596
        %5598 = vrot.lane.b32.xlu0 %v5552, 104
        %v5599 = vpop.permute.xlu0 %5598
        %5600 = vrot.lane.b32.xlu0 %v5556, 104
        %v5601 = vpop.permute.xlu0 %5600
        %5602 = vrot.lane.b32.xlu0 %v5559, 104
        %v5603 = vpop.permute.xlu0 %5602
        %5604 = vrot.lane.b32.xlu0 %v5562, 104
        %v5605 = vpop.permute.xlu0 %5604
        %5606 = vrot.lane.b32.xlu0 %v5565, 104
        %v5607 = vpop.permute.xlu0 %5606
        %5608 = vrot.lane.b32.xlu0 %v5569, 104
        %v5609 = vpop.permute.xlu0 %5608
        %5610 = vrot.lane.b32.xlu0 %v5572, 104
        %v5611 = vpop.permute.xlu0 %5610
        %5612 = vrot.lane.b32.xlu0 %v5575, 104
        %v5613 = vpop.permute.xlu0 %5612
        %5614 = vrot.lane.b32.xlu0 %v5578, 104
        %v5615 = vpop.permute.xlu0 %5614
        %5616 = vrot.lane.b32.xlu0 %v5582, 104
        %v5617 = vpop.permute.xlu0 %5616
        %5618 = vrot.lane.b32.xlu0 %v5585, 104
        %v5619 = vpop.permute.xlu0 %5618
        %5620 = vrot.lane.b32.xlu0 %v5588, 104
        %v5621 = vpop.permute.xlu0 %5620
        %5622 = vrot.lane.b32.xlu0 %v5591, 104
        %v5623 = vpop.permute.xlu0 %5622
        %vm5640 = vcmask 880448
        %5641 = vst.msk [vmem:[#allocation3] sm:$0xf] %vm5640, %v5593
        %5642 = vst.msk [vmem:[#allocation3 + $0x4] sm:$0xf] %vm5640, %v5595
        %5643 = vst.msk [vmem:[#allocation3 + $0x8] sm:$0xf] %vm5640, %v5597
        %5644 = vst.msk [vmem:[#allocation3 + $0xc] sm:$0xf] %vm5640, %v5599
        %5645 = vst.msk [vmem:[#allocation3 + $0x10] sm:$0xf] %vm5640, %v5601
        %5646 = vst.msk [vmem:[#allocation3 + $0x14] sm:$0xf] %vm5640, %v5603
        %5647 = vst.msk [vmem:[#allocation3 + $0x18] sm:$0xf] %vm5640, %v5605
        %5648 = vst.msk [vmem:[#allocation3 + $0x1c] sm:$0xf] %vm5640, %v5607
        %5649 = vst.msk [vmem:[#allocation3 + $0x20] sm:$0xf] %vm5640, %v5609
        %5650 = vst.msk [vmem:[#allocation3 + $0x24] sm:$0xf] %vm5640, %v5611
        %5651 = vst.msk [vmem:[#allocation3 + $0x28] sm:$0xf] %vm5640, %v5613
        %5652 = vst.msk [vmem:[#allocation3 + $0x2c] sm:$0xf] %vm5640, %v5615
        %5653 = vst.msk [vmem:[#allocation3 + $0x30] sm:$0xf] %vm5640, %v5617
        %5654 = vst.msk [vmem:[#allocation3 + $0x34] sm:$0xf] %vm5640, %v5619
        %5655 = vst.msk [vmem:[#allocation3 + $0x38] sm:$0xf] %vm5640, %v5621
        %5656 = vst.msk [vmem:[#allocation3 + $0x3c] sm:$0xf] %vm5640, %v5623
        %v5657 = vld [vmem:[#allocation3] sm:$0xf]
        %v5658 = vld [vmem:[#allocation3 + $0x4] sm:$0xf]
        %v5659 = vld [vmem:[#allocation3 + $0x8] sm:$0xf]
        %v5660 = vld [vmem:[#allocation3 + $0xc] sm:$0xf]
        %v5661 = vld [vmem:[#allocation3 + $0x10] sm:$0xf]
        %v5662 = vld [vmem:[#allocation3 + $0x14] sm:$0xf]
        %v5663 = vld [vmem:[#allocation3 + $0x18] sm:$0xf]
        %v5664 = vld [vmem:[#allocation3 + $0x1c] sm:$0xf]
        %v5665 = vld [vmem:[#allocation3 + $0x20] sm:$0xf]
        %v5666 = vld [vmem:[#allocation3 + $0x24] sm:$0xf]
        %v5667 = vld [vmem:[#allocation3 + $0x28] sm:$0xf]
        %v5668 = vld [vmem:[#allocation3 + $0x2c] sm:$0xf]
        %v5669 = vld [vmem:[#allocation3 + $0x30] sm:$0xf]
        %v5670 = vld [vmem:[#allocation3 + $0x34] sm:$0xf]
        %v5671 = vld [vmem:[#allocation3 + $0x38] sm:$0xf]
        %v5672 = vld [vmem:[#allocation3 + $0x3c] sm:$0xf]
        %v5673 = vld [vmem:[%s4] sm:$0xf]
        %v5674 = vld [vmem:[%s4 + $0x4] sm:$0xf]
        %v5675 = vld [vmem:[%s4 + $0x8] sm:$0xf]
        %v5676 = vld [vmem:[%s4 + $0xc] sm:$0xf]
        %v5677 = vld [vmem:[%s4 + $0x10] sm:$0xf]
        %v5678 = vld [vmem:[%s4 + $0x14] sm:$0xf]
        %v5679 = vld [vmem:[%s4 + $0x18] sm:$0xf]
        %v5680 = vld [vmem:[%s4 + $0x1c] sm:$0xf]
        %v5681 = vld [vmem:[%s4 + $0x20] sm:$0xf]
        %v5682 = vld [vmem:[%s4 + $0x24] sm:$0xf]
        %v5683 = vld [vmem:[%s4 + $0x28] sm:$0xf]
        %v5684 = vld [vmem:[%s4 + $0x2c] sm:$0xf]
        %v5685 = vld [vmem:[%s4 + $0x30] sm:$0xf]
        %v5686 = vld [vmem:[%s4 + $0x34] sm:$0x3]
        %v5687 = vld [vmem:[%s5] sm:$0x1]
        %v5689 = vlaneseq
        %v5690 = vshrl.u32 %v5689, 7
        %v5691 = vsub.s32 0, %v5690
        %v5692 = vrot.slane %v5687, %v5691
        %v5710 = vunpack.c.l.b16 %v5657
        %v5711 = vunpack.c.l.b16 %v5658
        %v5712 = vunpack.c.l.b16 %v5659
        %v5713 = vunpack.c.l.b16 %v5660
        %v5714 = vunpack.c.l.b16 %v5661
        %v5715 = vunpack.c.l.b16 %v5662
        %v5716 = vunpack.c.l.b16 %v5663
        %v5717 = vunpack.c.l.b16 %v5664
        %v5718 = vunpack.c.l.b16 %v5665
        %v5719 = vunpack.c.l.b16 %v5666
        %v5720 = vunpack.c.l.b16 %v5667
        %v5721 = vunpack.c.l.b16 %v5668
        %v5722 = vunpack.c.l.b16 %v5669
        %v5723 = vunpack.c.l.b16 %v5670
        %v5724 = vunpack.c.l.b16 %v5671
        %v5725 = vunpack.c.l.b16 %v5672
        %v5726 = vpack.c.b16 %v5711, %v5710
        %v5727 = vpack.c.b16 %v5713, %v5712
        %v5728 = vpack.c.b16 %v5715, %v5714
        %v5729 = vpack.c.b16 %v5717, %v5716
        %v5730 = vpack.c.b16 %v5719, %v5718
        %v5731 = vpack.c.b16 %v5721, %v5720
        %v5732 = vpack.c.b16 %v5723, %v5722
        %v5733 = vpack.c.b16 %v5725, %v5724
        %v5748 = vunpack.c.l.b16 %v5673
        %v5749 = vunpack.c.l.b16 %v5674
        %v5750 = vunpack.c.l.b16 %v5675
        %v5751 = vunpack.c.l.b16 %v5676
        %v5752 = vunpack.c.l.b16 %v5677
        %v5753 = vunpack.c.l.b16 %v5678
        %v5754 = vunpack.c.l.b16 %v5679
        %v5755 = vunpack.c.l.b16 %v5680
        %v5756 = vunpack.c.l.b16 %v5681
        %v5757 = vunpack.c.l.b16 %v5682
        %v5758 = vunpack.c.l.b16 %v5683
        %v5759 = vunpack.c.l.b16 %v5684
        %v5760 = vunpack.c.l.b16 %v5685
        %v5761 = vunpack.c.l.b16 %v5686
        %v5762 = vpack.c.b16 %v5749, %v5748
        %v5763 = vpack.c.b16 %v5751, %v5750
        %v5764 = vpack.c.b16 %v5753, %v5752
        %v5765 = vpack.c.b16 %v5755, %v5754
        %v5766 = vpack.c.b16 %v5757, %v5756
        %v5767 = vpack.c.b16 %v5759, %v5758
        %v5768 = vpack.c.b16 %v5761, %v5760
        %vm5775 = vcmask 883712
        %v5777 = vsel %vm5775, %v5726, 0
        %v5780 = vsel %vm5775, %v5727, 0
        %v5783 = vsel %vm5775, %v5728, 0
        %v5786 = vsel %vm5775, %v5729, 0
        %v5789 = vsel %vm5775, %v5730, 0
        %v5792 = vsel %vm5775, %v5731, 0
        %v5795 = vsel %vm5775, %v5732, 0
        %v5798 = vsel %vm5775, %v5733, 0
        %vm5800 = vcmask 1045504
        %v5802 = vsel %vm5800, %v5768, 0
        %5804 = vmatprep.subr.bf16.mxu0 0
        %5805 = vmatpush1.bf16.msra.mxu0 0
        %5806 = vmatprep.subr.bf16.mxu0 0
        %5807 = vmatpush1.bf16.msra.mxu0 %v5802
        %5808 = vmatprep.subr.bf16.mxu0 0
        %5809 = vmatpush1.bf16.msra.mxu0 %v5767
        %5810 = vmatprep.subr.bf16.mxu0 0
        %5811 = vmatpush1.bf16.msra.mxu0 %v5766
        %5812 = vmatprep.subr.bf16.mxu0 0
        %5813 = vmatpush1.bf16.msra.mxu0 %v5765
        %5814 = vmatprep.subr.bf16.mxu0 0
        %5815 = vmatpush1.bf16.msra.mxu0 %v5764
        %5816 = vmatprep.subr.bf16.mxu0 0
        %5817 = vmatpush1.bf16.msra.mxu0 %v5763
        %5818 = vmatprep.subr.bf16.mxu0 0
        %5819 = vmatpush1.bf16.msra.mxu0 %v5762
        %5820 = vmatprep.subr.bf16.mxu0 0
        %5821 = vmatpush2.bf16.msra.mxu0 0
        %5822 = vmatprep.subr.bf16.mxu0 0
        %5823 = vmatpush2.bf16.msra.mxu0 0
        %5824 = vmatprep.subr.bf16.mxu0 0
        %5825 = vmatpush2.bf16.msra.mxu0 0
        %5826 = vmatprep.subr.bf16.mxu0 0
        %5827 = vmatpush2.bf16.msra.mxu0 0
        %5828 = vmatprep.subr.bf16.mxu0 0
        %5829 = vmatpush2.bf16.msra.mxu0 0
        %5830 = vmatprep.subr.bf16.mxu0 0
        %5831 = vmatpush2.bf16.msra.mxu0 0
        %5832 = vmatprep.subr.bf16.mxu0 0
        %5833 = vmatpush2.bf16.msra.mxu0 0
        %5834 = vmatprep.subr.bf16.mxu0 0
        %5835 = vmatpush2.bf16.msra.mxu0 0
        %5836 = vmatprep.mubr.bf16.mxu0 0
        %5837 = vmatmul.mubr.bf16.gmra.mxu0 %v5777
        %v5838 = vpop.f32.mrf.mxu0
        %v5839 = vadd.f32 %v5692, %v5838
        %v5840 = vpop.f32.mrf.mxu0
        %v5841 = vpop.f32.mrf.mxu0
        %v5842 = vadd.f32 %v5692, %v5841
        %v5843 = vpop.f32.mrf.mxu0
        %5844 = vmatprep.mubr.bf16.mxu0 0
        %5845 = vmatmul.mubr.bf16.gmra.mxu0 %v5780
        %v5846 = vpop.f32.mrf.mxu0
        %v5847 = vadd.f32 %v5692, %v5846
        %v5848 = vpop.f32.mrf.mxu0
        %v5849 = vpop.f32.mrf.mxu0
        %v5850 = vadd.f32 %v5692, %v5849
        %v5851 = vpop.f32.mrf.mxu0
        %5852 = vmatprep.mubr.bf16.mxu0 0
        %5853 = vmatmul.mubr.bf16.gmra.mxu0 %v5783
        %v5854 = vpop.f32.mrf.mxu0
        %v5855 = vadd.f32 %v5692, %v5854
        %v5856 = vpop.f32.mrf.mxu0
        %v5857 = vpop.f32.mrf.mxu0
        %v5858 = vadd.f32 %v5692, %v5857
        %v5859 = vpop.f32.mrf.mxu0
        %5860 = vmatprep.mubr.bf16.mxu0 0
        %5861 = vmatmul.mubr.bf16.gmra.mxu0 %v5786
        %v5862 = vpop.f32.mrf.mxu0
        %v5863 = vadd.f32 %v5692, %v5862
        %v5864 = vpop.f32.mrf.mxu0
        %v5865 = vpop.f32.mrf.mxu0
        %v5866 = vadd.f32 %v5692, %v5865
        %v5867 = vpop.f32.mrf.mxu0
        %5868 = vmatprep.mubr.bf16.mxu0 0
        %5869 = vmatmul.mubr.bf16.gmra.mxu0 %v5789
        %v5870 = vpop.f32.mrf.mxu0
        %v5871 = vadd.f32 %v5692, %v5870
        %v5872 = vpop.f32.mrf.mxu0
        %v5873 = vpop.f32.mrf.mxu0
        %v5874 = vadd.f32 %v5692, %v5873
        %v5875 = vpop.f32.mrf.mxu0
        %5876 = vmatprep.mubr.bf16.mxu0 0
        %5877 = vmatmul.mubr.bf16.gmra.mxu0 %v5792
        %v5878 = vpop.f32.mrf.mxu0
        %v5879 = vadd.f32 %v5692, %v5878
        %v5880 = vpop.f32.mrf.mxu0
        %v5881 = vpop.f32.mrf.mxu0
        %v5882 = vadd.f32 %v5692, %v5881
        %v5883 = vpop.f32.mrf.mxu0
        %5884 = vmatprep.mubr.bf16.mxu0 0
        %5885 = vmatmul.mubr.bf16.gmra.mxu0 %v5795
        %v5886 = vpop.f32.mrf.mxu0
        %v5887 = vadd.f32 %v5692, %v5886
        %v5888 = vpop.f32.mrf.mxu0
        %v5889 = vpop.f32.mrf.mxu0
        %v5890 = vadd.f32 %v5692, %v5889
        %v5891 = vpop.f32.mrf.mxu0
        %5892 = vmatprep.mubr.bf16.mxu0 0
        %5893 = vmatmul.mubr.bf16.gmra.mxu0 %v5798
        %v5894 = vpop.f32.mrf.mxu0
        %v5895 = vadd.f32 %v5692, %v5894
        %v5896 = vpop.f32.mrf.mxu0
        %v5897 = vpop.f32.mrf.mxu0
        %v5898 = vadd.f32 %v5692, %v5897
        %v5899 = vpop.f32.mrf.mxu0
        %5900 = vdwg.mxu0
        %v5901 = vmax.f32 %v5839, 0.0
        %v5902 = vmax.f32 %v5842, 0.0
        %v5903 = vmax.f32 %v5847, 0.0
        %v5904 = vmax.f32 %v5850, 0.0
        %v5905 = vmax.f32 %v5855, 0.0
        %v5906 = vmax.f32 %v5858, 0.0
        %v5907 = vmax.f32 %v5863, 0.0
        %v5908 = vmax.f32 %v5866, 0.0
        %v5909 = vmax.f32 %v5871, 0.0
        %v5910 = vmax.f32 %v5874, 0.0
        %v5911 = vmax.f32 %v5879, 0.0
        %v5912 = vmax.f32 %v5882, 0.0
        %v5913 = vmax.f32 %v5887, 0.0
        %v5914 = vmax.f32 %v5890, 0.0
        %v5915 = vmax.f32 %v5895, 0.0
        %v5916 = vmax.f32 %v5898, 0.0
        %v5917 = vld [vmem:[%s0] sm:$0xff]
        %v5918 = vld [vmem:[%s0 + $0x8] sm:$0xff]
        %v5919 = vld [vmem:[%s0 + $0x10] sm:$0xff]
        %v5920 = vld [vmem:[%s0 + $0x18] sm:$0xff]
        %5922 = vset.pattern.permute.xlu0 0
        %5923 = vperm.xlu0 %5922, %v5917
        %v5924 = vpop.permute.xlu0 %5923
        %5927 = vset.pattern.permute.xlu0 0
        %5928 = vperm.xlu0 %5927, %v5918
        %v5929 = vpop.permute.xlu0 %5928
        %5932 = vset.pattern.permute.xlu0 0
        %5933 = vperm.xlu0 %5932, %v5919
        %v5934 = vpop.permute.xlu0 %5933
        %5937 = vset.pattern.permute.xlu0 0
        %5938 = vperm.xlu0 %5937, %v5920
        %v5939 = vpop.permute.xlu0 %5938
        %v5941 = vmul.f32 %v5901, %v5924
        %v5942 = vmul.f32 %v5902, %v5929
        %v5943 = vmul.f32 %v5903, %v5934
        %v5944 = vmul.f32 %v5904, %v5939
        %v5945 = vmul.f32 %v5905, %v5924
        %v5946 = vmul.f32 %v5906, %v5929
        %v5947 = vmul.f32 %v5907, %v5934
        %v5948 = vmul.f32 %v5908, %v5939
        %v5949 = vmul.f32 %v5909, %v5924
        %v5950 = vmul.f32 %v5910, %v5929
        %v5951 = vmul.f32 %v5911, %v5934
        %v5952 = vmul.f32 %v5912, %v5939
        %v5953 = vmul.f32 %v5913, %v5924
        %v5954 = vmul.f32 %v5914, %v5929
        %v5955 = vmul.f32 %v5915, %v5934
        %v5956 = vmul.f32 %v5916, %v5939
        %v5957 = vld [vmem:[#allocation2] sm:$0xf]
        %vm5958 = vcmask 130048
        %v5959 = vsel %vm5958, %v5941, 0.0
        %v5960 = vsel %vm5958, %v5942, 0.0
        %v5961 = vadd.f32 %v5959, %v5960
        %v5962 = vsel %vm5958, %v5943, 0.0
        %v5963 = vadd.f32 %v5961, %v5962
        %v5964 = vsel %vm5958, %v5944, 0.0
        %v5965 = vadd.f32 %v5963, %v5964
        %v5966 = vrot.slane %v5965, 4
        %v5967 = vadd.f32 %v5965, %v5966
        %v5968 = vrot.slane %v5967, 2
        %v5969 = vadd.f32 %v5967, %v5968
        %v5970 = vrot.slane %v5969, 1
        %v5971 = vadd.f32 %v5969, %v5970
        %v5972 = vsel %vm5958, %v5945, 0.0
        %v5973 = vsel %vm5958, %v5946, 0.0
        %v5974 = vadd.f32 %v5972, %v5973
        %v5975 = vsel %vm5958, %v5947, 0.0
        %v5976 = vadd.f32 %v5974, %v5975
        %v5977 = vsel %vm5958, %v5948, 0.0
        %v5978 = vadd.f32 %v5976, %v5977
        %v5979 = vrot.slane %v5978, 4
        %v5980 = vadd.f32 %v5978, %v5979
        %v5981 = vrot.slane %v5980, 2
        %v5982 = vadd.f32 %v5980, %v5981
        %v5983 = vrot.slane %v5982, 1
        %v5984 = vadd.f32 %v5982, %v5983
        %v5985 = vsel %vm5958, %v5949, 0.0
        %v5986 = vsel %vm5958, %v5950, 0.0
        %v5987 = vadd.f32 %v5985, %v5986
        %v5988 = vsel %vm5958, %v5951, 0.0
        %v5989 = vadd.f32 %v5987, %v5988
        %v5990 = vsel %vm5958, %v5952, 0.0
        %v5991 = vadd.f32 %v5989, %v5990
        %v5992 = vrot.slane %v5991, 4
        %v5993 = vadd.f32 %v5991, %v5992
        %v5994 = vrot.slane %v5993, 2
        %v5995 = vadd.f32 %v5993, %v5994
        %v5996 = vrot.slane %v5995, 1
        %v5997 = vadd.f32 %v5995, %v5996
        %v5998 = vsel %vm5958, %v5953, 0.0
        %v5999 = vsel %vm5958, %v5954, 0.0
        %v6000 = vadd.f32 %v5998, %v5999
        %v6001 = vsel %vm5958, %v5955, 0.0
        %v6002 = vadd.f32 %v6000, %v6001
        %v6003 = vsel %vm5958, %v5956, 0.0
        %v6004 = vadd.f32 %v6002, %v6003
        %v6005 = vrot.slane %v6004, 4
        %v6006 = vadd.f32 %v6004, %v6005
        %v6007 = vrot.slane %v6006, 2
        %v6008 = vadd.f32 %v6006, %v6007
        %v6009 = vrot.slane %v6008, 1
        %v6010 = vadd.f32 %v6008, %v6009
        %vm6015 = vcmask 1041409
        %v6016 = vsel %vm6015, %v5984, %v5971
        %vm6017 = vcmask 1042434
        %v6018 = vsel %vm6017, %v5997, %v6016
        %vm6019 = vcmask 1043459
        %v6020 = vsel %vm6019, %v6010, %v6018
        %v6022 = vadd.f32 %v5957, %v6020
        %vm6023 = vcmask 125952
        %6024 = vst.msk [vmem:[#allocation2] sm:$0xf] %vm6023, %v6022
        %p6025 = scmp.eq.s32.totalorder %s26, 3
        // Predicated region
        $region188: #{critic_forward.1} parent=170 // pred_check
          %p6026 = pneg %p6025
        $region189: #{critic_forward.1} parent=170 // pred_check_branch
          %6028 = sbr.rel (%p6026) target = $region191
        $region190: #{critic_forward.1} parent=170 // pred_region
          %v6029 = vld [vmem:[#allocation2] sm:$0xf]
          %v6030 = vmul.f32 %v6029, 0.015625
          %v6031 = vld [vmem:[%s6] sm:$0xff]
          %v6032 = vld [vmem:[%s6 + $0x8] sm:$0xff]
          %v6033 = vld [vmem:[%s6 + $0x10] sm:$0xff]
          %v6034 = vld [vmem:[%s6 + $0x18] sm:$0xff]
          %v6035 = vld [vmem:[%s7] sm:$0x3]
          %v6037 = vlaneseq
          %v6038 = vshrl.u32 %v6037, 7
          %v6039 = vsub.s32 0, %v6038
          %v6040 = vrot.slane %v6035, %v6039
          %v6041 = vlaneseq
          %v6042 = vshrl.u32 %v6041, 7
          %v6043 = vsub.s32 1, %v6042
          %v6044 = vrot.slane %v6035, %v6043
          %v6048 = vsel %vm5958, %v6030, 0
          %6050 = vmatprep.subr.mxu0 0.0
          %6051 = vmatpush1.msra.mxu0 0.0
          %6052 = vmatprep.subr.mxu0 0.0
          %6053 = vmatpush1.msra.mxu0 0.0
          %6054 = vmatprep.subr.mxu0 0.0
          %6055 = vmatpush1.msra.mxu0 0.0
          %6056 = vmatprep.subr.mxu0 0.0
          %6057 = vmatpush1.msra.mxu0 0.0
          %6058 = vmatprep.subr.mxu0 0.0
          %6059 = vmatpush1.msra.mxu0 0.0
          %6060 = vmatprep.subr.mxu0 0.0
          %6061 = vmatpush1.msra.mxu0 0.0
          %6062 = vmatprep.subr.mxu0 0.0
          %6063 = vmatpush1.msra.mxu0 0.0
          %6064 = vmatprep.subr.mxu0 0.0
          %6065 = vmatpush1.msra.mxu0 0.0
          %6066 = vmatprep.subr.mxu0 0.0
          %6067 = vmatpush1.msra.mxu0 0.0
          %6068 = vmatprep.subr.mxu0 0.0
          %6069 = vmatpush1.msra.mxu0 0.0
          %6070 = vmatprep.subr.mxu0 0.0
          %6071 = vmatpush1.msra.mxu0 0.0
          %6072 = vmatprep.subr.mxu0 0.0
          %6073 = vmatpush1.msra.mxu0 0.0
          %6074 = vmatprep.subr.mxu0 0.0
          %6075 = vmatpush1.msra.mxu0 0.0
          %6076 = vmatprep.subr.mxu0 0.0
          %6077 = vmatpush1.msra.mxu0 0.0
          %6078 = vmatprep.subr.mxu0 %v6034
          %6079 = vmatpush1.msra.mxu0 %v6033
          %6080 = vmatprep.subr.mxu0 %v6032
          %6081 = vmatpush1.msra.mxu0 %v6031
          %6082 = vmatprep.subr.mxu0 0.0
          %6083 = vmatpush2.msra.mxu0 0.0
          %6084 = vmatprep.subr.mxu0 0.0
          %6085 = vmatpush2.msra.mxu0 0.0
          %6086 = vmatprep.subr.mxu0 0.0
          %6087 = vmatpush2.msra.mxu0 0.0
          %6088 = vmatprep.subr.mxu0 0.0
          %6089 = vmatpush2.msra.mxu0 0.0
          %6090 = vmatprep.subr.mxu0 0.0
          %6091 = vmatpush2.msra.mxu0 0.0
          %6092 = vmatprep.subr.mxu0 0.0
          %6093 = vmatpush2.msra.mxu0 0.0
          %6094 = vmatprep.subr.mxu0 0.0
          %6095 = vmatpush2.msra.mxu0 0.0
          %6096 = vmatprep.subr.mxu0 0.0
          %6097 = vmatpush2.msra.mxu0 0.0
          %6098 = vmatprep.subr.mxu0 0.0
          %6099 = vmatpush2.msra.mxu0 0.0
          %6100 = vmatprep.subr.mxu0 0.0
          %6101 = vmatpush2.msra.mxu0 0.0
          %6102 = vmatprep.subr.mxu0 0.0
          %6103 = vmatpush2.msra.mxu0 0.0
          %6104 = vmatprep.subr.mxu0 0.0
          %6105 = vmatpush2.msra.mxu0 0.0
          %6106 = vmatprep.subr.mxu0 0.0
          %6107 = vmatpush2.msra.mxu0 0.0
          %6108 = vmatprep.subr.mxu0 0.0
          %6109 = vmatpush2.msra.mxu0 0.0
          %6110 = vmatprep.subr.mxu0 0.0
          %6111 = vmatpush2.msra.mxu0 0.0
          %6112 = vmatprep.subr.mxu0 0.0
          %6113 = vmatpush2.msra.mxu0 0.0
          %6114 = vmatprep.mubr.f32.mxu0 0.0
          %6115 = vmatmul.mubr.f32.gmra.mxu0 %v6048
          %v6116 = vpop.f32.mrf.mxu0
          %v6117 = vadd.f32 %v6040, %v6116
          %v6118 = vpop.f32.mrf.mxu0
          %v6119 = vadd.f32 %v6044, %v6118
          %6120 = vdwg.mxu0
          %v6121 = vmax.f32 %v6117, 0.0
          %v6122 = vmax.f32 %v6119, 0.0
          %v6123 = vld [vmem:[%s872] sm:$0xff]
          %v6125 = vcombine.high %v6123, %v6123
          %v6127 = vmul.f32 %v6121, %v6123
          %v6128 = vmul.f32 %v6122, %v6125
          %vm6129 = vcmask 1043456
          %v6130 = vsel %vm6129, %v6127, 0.0
          %v6131 = vsel %vm6129, %v6128, 0.0
          %v6132 = vadd.f32 %v6130, %v6131
          %6133 = vadd.xlane.f32.xlu0 %v6132
          %v6134 = vpop.xlane.xlu0 %6133
          %v6135 = vld [vmem:[%s876] sm:$0xf]
          %v6136 = vadd.f32 %v6134, %v6135
          %vm6137 = vcmask 3072
          %6138 = vst.msk [vmem:[%s880] sm:$0xf] %vm6137, %v6136
        $region191: #{critic_forward.1} parent=170 // pred_fallthru
          _
        %p6139 = scmp.lt.s32.totalorder %s25, 0
        %s6140 = scalar_select %p6139, %s25, 0
        %s6141 = smul.addr %s6140, 4
        %s6142 = scalar_lea.vmem %s10, %s6141
        // Predicated region
        $region192: #{critic_forward.1} parent=170 // pred_check
          %p6143 = pneg %p296
        $region193: #{critic_forward.1} parent=170 // pred_check_branch
          %6145 = sbr.rel (%p6143) target = $region195
        $region194: #{critic_forward.1} parent=170 // pred_region
          _
        $region195: #{critic_forward.1} parent=170 // pred_fallthru
          _
        // Predicated region
        $region196: #{critic_forward.1} parent=170 // pred_check
          %p6146 = pneg %p296
        $region197: #{critic_forward.1} parent=170 // pred_check_branch
          %6148 = sbr.rel (%p6146) target = $region199
        $region198: #{critic_forward.1} parent=170 // pred_region
          %p6149 = scmp.lt.s32.totalorder %s25, 0
          %s6150 = scalar_select %p6149, %s25, 0
          %s6151 = smul.addr %s6150, 4
          %s6152 = scalar_lea.vmem %s10, %s6151
        $region199: #{critic_forward.1} parent=170 // pred_fallthru
          _
      $region171: #{critic_forward.1} parent=5 // pred_fallthru
        _
      %p6153 = scmp.le.s32.totalorder 2, %s16
      // Predicated region
      $region200: #{critic_forward.1} parent=5 // pred_check
        %p6154 = pneg %p6153
      $region201: #{critic_forward.1} parent=5 // pred_check_branch
        %6156 = sbr.rel (%p6154) target = $region203
      $region202: #{critic_forward.1} parent=5 // pred_region
        %s6157 = ssub.s32 %s16, 2
      $region203: #{critic_forward.1} parent=5 // pred_fallthru
        _
    $region6: #{critic_forward.1} parent=1 // loop_footer
      %s20 = sadd.s32 1, %s16
    $region7: #{critic_forward.1} parent=1 // loop_footer_branch
      %15 = sbr.rel target = $region3
    $region8: #{critic_forward.1} parent=1 // loop_exit
      _

</llo_original>
